<compile_context>
chip_gen: v5e
topology: v5e:2x2
jax: 0.10.0
libtpu: 0.0.40
codegen_flags: <defaults>
</compile_context>

<pallas_src>
import functools

import jax
import jax.numpy as jnp
from jax import lax
from jax.experimental import pallas as pl
from jax.experimental.pallas import tpu as pltpu


def _round_up(a, b):
    return ((a + b - 1) // b) * b


# ----------------------------------------------------------------------------
# Fused kernel
# ----------------------------------------------------------------------------
def _bottleneck_kernel(xc_ref, xh_ref,                 # (C+1, TM) center, (C+1, 2*HP) halos
                       w1_ref,                         # (C, C+1)   conv1 w/ b1 folded in
                       w2_ref, b2_ref,                 # (C, 27C) or (27C, C), (C, 1)
                       w3_ref, b3_ref,                 # (C_out, C), (C_out, 1)
                       o_ref,                          # (C_out, TM)
                       s1_ref, s2_ref,                 # VMEM scratch
                       *, n_ch, tm, hp, offsets, cdt, deep_k):
    C = n_ch
    w1 = w1_ref[...]

    def stage1(x_aug):
        # x_aug: (C+1, L) = [input channels ; interior-mask row].  b1 rides the mask
        # column of w1, so pad voxels (x=0, mask=0) come out exactly 0 -> reproduces
        # conv2's zero padding of the stage-1 activation.
        y = jnp.dot(w1, x_aug, preferred_element_type=jnp.float32)
        return jnp.maximum(y, 0.0)

    # ---- stage 1 over the haloed window -> s1 scratch (C, tm + 2*hp) --------
    xh = xh_ref[...]                                   # [left halo | right halo]
    s1_ref[:, 0:hp] = stage1(xh[:, 0:hp]).astype(cdt)
    s1_ref[:, hp + tm:hp + tm + hp] = stage1(xh[:, hp:2 * hp]).astype(cdt)
    s1_ref[:, hp:hp + tm] = stage1(xc_ref[...]).astype(cdt)

    # ---- stage 2: 3x3x3 conv on the VMEM-resident stage-1 slab --------------
    if deep_k:
        # im2col in VMEM: 27 shifted copies -> one (C, 27C)@(27C, tm) MXU matmul.
        # Deep contraction (K=27C) fills the MXU far better than K=C at small C.
        for t, off in enumerate(offsets):
            s2_ref[t * C:(t + 1) * C, :] = s1_ref[:, hp + off:hp + off + tm]
        y2 = jnp.dot(w2_ref[...], s2_ref[...], preferred_element_type=jnp.float32)
    else:
        # Tap loop for large C (K=C already fills the MXU).  Accumulate into VMEM
        # scratch to bound vreg pressure; initialize with the first tap.
        # TODO(synk): on v7x this could use MRB in-place accumulation
        # (pltpu.matmul_push_rhs / matmul_acc_lhs / matmul_pop) instead of VALU adds.
        for t, off in enumerate(offsets):
            w_t = w2_ref[t * C:(t + 1) * C, :]         # (C, C) tap weights (BN folded)
            rhs = s1_ref[:, hp + off:hp + off + tm]
            part = jnp.dot(w_t, rhs, preferred_element_type=jnp.float32)
            if t == 0:
                s2_ref[...] = part
            else:
                s2_ref[...] += part
        y2 = s2_ref[...]
    y2 = jnp.maximum(y2 + b2_ref[...], 0.0)            # BN2 bias + ReLU

    # ---- stage 3: 1x1x1 conv + BN + identity residual + ReLU ----------------
    y3 = jnp.dot(w3_ref[...], y2.astype(cdt), preferred_element_type=jnp.float32)
    y3 = y3 + b3_ref[...] + xc_ref[:C, :].astype(jnp.float32)
    o_ref[...] = jnp.maximum(y3, 0.0).astype(o_ref.dtype)


# ----------------------------------------------------------------------------
# Wrapper: BN folding, layout, pallas_call
# ----------------------------------------------------------------------------
def fold_bn(gamma, beta, mean, var, eps=1e-5):
    scale = gamma / jnp.sqrt(var + eps)
    bias = beta - mean * scale
    return scale, bias


def bottleneck_forward(x_ncdhw, params, *, tm=4096, io_dtype=jnp.float32,
                       out_dtype=None, stage2_deep_k=None):
    """Fused Pallas forward of Bottleneck (eval-mode BN, relu, stride=1, downsample=None)."""
    if out_dtype is None:
        out_dtype = io_dtype
    N, C, D, H, W = x_ncdhw.shape
    Dp, Hp, Wp = D + 2, H + 2, W + 2
    Mp = N * Dp * Hp * Wp
    halo = Hp * Wp + Wp + 1                       # max |flat tap offset| of the 3x3x3 stencil
    HP = _round_up(halo, 128)                     # lane-aligned halo pad

    # Tile size: as large as requested, but at least HP and clamped so small
    # problems still produce >= 2 grid steps (v7x megacore balance).
    tm_eff = max(HP, min(_round_up(tm, 128), _round_up(pl.cdiv(Mp, 2), 128)))
    nblk = pl.cdiv(Mp, tm_eff)
    Mp_pad = nblk * tm_eff

    # ---- fold BN running stats into conv weights / per-channel bias ----------
    s1, b1 = fold_bn(*params['bn1'])
    s2, b2 = fold_bn(*params['bn2'])
    s3, b3 = fold_bn(*params['bn3'])

    w1 = params['conv1_w'][:, :, 0, 0, 0]                         # (C, C)
    # b1 folded into an extra column that multiplies the interior-mask row.
    w1f = jnp.concatenate([w1 * s1[:, None], b1[:, None]], axis=1).astype(io_dtype)  # (C, C+1)

    w2s = params['conv2_w'] * s2[:, None, None, None, None]       # (C, C, 3, 3, 3)
    b2f = b2.reshape(C, 1).astype(jnp.float32)

    w3 = params['conv3_w'][:, :, 0, 0, 0]                         # (C_out, C)
    C_out = w3.shape[0]
    assert C_out == C, "downsample=None requires out_chs == in_chs"
    w3f = (w3 * s3[:, None]).astype(io_dtype)
    b3f = b3.reshape(C_out, 1).astype(jnp.float32)

    # Stage-2 mode: deep-K im2col matmul for small C, tap loop otherwise.
    itemsize = jnp.dtype(io_dtype).itemsize
    if stage2_deep_k is None:
        stage2_deep_k = (27 * C <= 1024) and (27 * C * tm_eff * itemsize <= 4 * 1024 * 1024)
    if stage2_deep_k:
        w2f = jnp.transpose(w2s, (0, 2, 3, 4, 1)).reshape(C, 27 * C).astype(io_dtype)
    else:
        w2f = jnp.transpose(w2s, (2, 3, 4, 0, 1)).reshape(27 * C, C).astype(io_dtype)

    # ---- layout: (C+1, M) spatially zero-padded + interior mask row ----------
    x_t = jnp.transpose(x_ncdhw, (1, 0, 2, 3, 4))                 # (C, N, D, H, W)
    x_p = jnp.pad(x_t, ((0, 0), (0, 0), (1, 1), (1, 1), (1, 1)))
    ones = jnp.ones((1, N, D, H, W), x_ncdhw.dtype)
    m_p = jnp.pad(ones, ((0, 0), (0, 0), (1, 1), (1, 1), (1, 1)))
    xa = jnp.concatenate([x_p, m_p], axis=0).reshape(C + 1, Mp).astype(io_dtype)
    xa = jnp.pad(xa, ((0, 0), (0, Mp_pad - Mp)))                  # lane-tile tail pad

    # Per-tile halo array: left/right HP lanes of each tile (small: 2*HP*nblk lanes).
    xpad = jnp.pad(xa, ((0, 0), (HP, HP)))
    lefts = xpad[:, :nblk * tm_eff].reshape(C + 1, nblk, tm_eff)[:, :, :HP]
    rights = xpad[:, 2 * HP:].reshape(C + 1, nblk, tm_eff)[:, :, tm_eff - HP:]
    xh = jnp.transpose(jnp.concatenate([lefts, rights], axis=-1), (1, 0, 2))  # (nblk, C+1, 2HP)

    # flat offsets of the 27 stencil taps in the padded layout
    offsets = tuple((kd - 1) * Hp * Wp + (kh - 1) * Wp + (kw - 1)
                    for kd in range(3) for kh in range(3) for kw in range(3))

    kernel = functools.partial(_bottleneck_kernel, n_ch=C, tm=tm_eff, hp=HP,
                               offsets=offsets, cdt=io_dtype, deep_k=stage2_deep_k)

    scratch = [pltpu.VMEM((C, tm_eff + 2 * HP), io_dtype)]        # stage-1 slab
    if stage2_deep_k:
        scratch.append(pltpu.VMEM((27 * C, tm_eff), io_dtype))    # im2col slab
    else:
        scratch.append(pltpu.VMEM((C, tm_eff), jnp.float32))      # stage-2 accumulator

    out_flat = pl.pallas_call(
        kernel,
        out_shape=jax.ShapeDtypeStruct((C_out, Mp_pad), out_dtype),
        grid_spec=pltpu.PrefetchScalarGridSpec(
            num_scalar_prefetch=0,
            grid=(nblk,),
            in_specs=[
                pl.BlockSpec((C + 1, tm_eff), lambda i: (0, i)),          # center tile
                pl.BlockSpec((None, C + 1, 2 * HP), lambda i: (i, 0, 0)),  # halos
                pl.BlockSpec((C, C + 1), lambda i: (0, 0)),
                pl.BlockSpec(w2f.shape, lambda i: (0, 0)),
                pl.BlockSpec((C, 1), lambda i: (0, 0)),
                pl.BlockSpec((C_out, C), lambda i: (0, 0)),
                pl.BlockSpec((C_out, 1), lambda i: (0, 0)),
            ],
            out_specs=pl.BlockSpec((C_out, tm_eff), lambda i: (0, i)),
            scratch_shapes=scratch,
        ),
        compiler_params=pltpu.CompilerParams(
            dimension_semantics=("parallel",),
            # 48 MiB fits v7x's 64 MiB physical VMEM; v5e/v6e (128 MiB) have headroom.
            vmem_limit_bytes=48 * 1024 * 1024,
        ),
    )(xa, xh, w1f, w2f, b2f, w3f, b3f)

    # drop flat tail + spatial padding, back to NCDHW
    out = out_flat[:, :Mp].reshape(C_out, N, Dp, Hp, Wp)[:, :, 1:1 + D, 1:1 + H, 1:1 + W]
    return jnp.transpose(out, (1, 0, 2, 3, 4))


# ----------------------------------------------------------------------------
# Pure-JAX (XLA) reference matching PyTorch eval-mode forward, for verification
# ----------------------------------------------------------------------------
def bottleneck_reference(x, params, eps=1e-5):
    def conv(x, w, padding=0):
        return lax.conv_general_dilated(
            x, w, (1, 1, 1), [(padding, padding)] * 3,
            dimension_numbers=('NCDHW', 'OIDHW', 'NCDHW'))

    def bn(x, stats):
        g, b, m, v = stats
        sh = (1, -1, 1, 1, 1)
        return g.reshape(sh) * (x - m.reshape(sh)) / jnp.sqrt(v.reshape(sh) + eps) + b.reshape(sh)

    relu = lambda t: jnp.maximum(t, 0.0)
    identity = x
    out = relu(bn(conv(x, params['conv1_w']), params['bn1']))
    out = relu(bn(conv(out, params['conv2_w'], padding=1), params['bn2']))
    out = bn(conv(out, params['conv3_w']), params['bn3'])
    return relu(out + identity)


# ----------------------------------------------------------------------------
if __name__ == "__main__":
    key = jax.random.PRNGKey(0)
    in_chs, out_chs = 4, 4          # downsample=None => out_chs == in_chs
    N, D, H, W = 2, 8, 8, 8

    ks = jax.random.split(key, 8)
    x = jax.random.normal(ks[0], (N, in_chs, D, H, W), jnp.float32)

    def bn_params(k, c):
        k1, k2, k3, k4 = jax.random.split(k, 4)
        gamma = 1.0 + 0.1 * jax.random.normal(k1, (c,), jnp.float32)
        beta = 0.1 * jax.random.normal(k2, (c,), jnp.float32)
        mean = 0.1 * jax.random.normal(k3, (c,), jnp.float32)
        var = 1.0 + 0.1 * jax.random.uniform(k4, (c,), jnp.float32)
        return (gamma, beta, mean, var)

    params = {
        'conv1_w': 0.2 * jax.random.normal(ks[1], (in_chs, in_chs, 1, 1, 1), jnp.float32),
        'conv2_w': 0.1 * jax.random.normal(ks[2], (in_chs, in_chs, 3, 3, 3), jnp.float32),
        'conv3_w': 0.2 * jax.random.normal(ks[3], (out_chs, in_chs, 1, 1, 1), jnp.float32),
        'bn1': bn_params(ks[4], in_chs),
        'bn2': bn_params(ks[5], in_chs),
        'bn3': bn_params(ks[6], out_chs),
    }

    ref = bottleneck_reference(x, params)

    # f32 path, deep-K stage-2 (default): tight check against the XLA reference.
    fwd_f32 = jax.jit(functools.partial(bottleneck_forward, io_dtype=jnp.float32))
    out_f32 = jax.block_until_ready(fwd_f32(x, params))
    assert out_f32.shape == ref.shape == (N, out_chs, D, H, W)
    assert jnp.allclose(out_f32, ref, atol=1e-4, rtol=1e-4), "f32 deep-K mismatch vs reference"

    # f32 path, tap-loop stage-2 (large-C fallback path) — exercised for coverage.
    fwd_tap = jax.jit(functools.partial(bottleneck_forward, io_dtype=jnp.float32,
                                        stage2_deep_k=False))
    out_tap = jax.block_until_ready(fwd_tap(x, params))
    assert jnp.allclose(out_tap, ref, atol=1e-4, rtol=1e-4), "f32 tap-loop mismatch vs reference"

    # bf16 storage / compute / output path (halves HBM traffic end-to-end).
    fwd_bf16 = jax.jit(functools.partial(bottleneck_forward, io_dtype=jnp.bfloat16))
    out_bf16 = jax.block_until_ready(fwd_bf16(x, params))
    assert jnp.allclose(out_bf16.astype(jnp.float32), ref, atol=3e-2, rtol=3e-2), \
        "bf16 mismatch vs reference"

    print("KERNEL_OK")
</pallas_src>

<mosaic_0001>
module attributes {stable_mosaic.version = 11 : i64} {
  func.func @_bottleneck_kernel(%arg0: i32, %arg1: memref<5x1024xf32, #tpu.memory_space<vmem>>, %arg2: memref<1x5x256xf32, #tpu.memory_space<vmem>>, %arg3: memref<4x5xf32, #tpu.memory_space<vmem>>, %arg4: memref<4x108xf32, #tpu.memory_space<vmem>>, %arg5: memref<4x1xf32, #tpu.memory_space<vmem>>, %arg6: memref<4x4xf32, #tpu.memory_space<vmem>>, %arg7: memref<4x1xf32, #tpu.memory_space<vmem>>, %arg8: memref<4x1024xf32, #tpu.memory_space<vmem>>, %arg9: memref<4x1280xf32, #tpu.memory_space<vmem>>, %arg10: memref<108x1024xf32, #tpu.memory_space<vmem>>) attributes {dimension_semantics = [#tpu.dimension_semantics<parallel>], iteration_bounds = array<i64: 2>, scalar_prefetch = 0 : i64, scratch_operands = 2 : i64, tpu.core_type = #tpu.core_type<tc>, window_params = [{transform_indices = @transform_0, window_bounds = array<i64: 5, 1024>}, {transform_indices = @transform_1, window_bounds = array<i64: 1, 5, 256>}, {pipeline_mode = #tpu.pipeline_mode<synchronous>, transform_indices = @transform_2, window_bounds = array<i64: 4, 5>}, {pipeline_mode = #tpu.pipeline_mode<synchronous>, transform_indices = @transform_3, window_bounds = array<i64: 4, 108>}, {pipeline_mode = #tpu.pipeline_mode<synchronous>, transform_indices = @transform_4, window_bounds = array<i64: 4, 1>}, {pipeline_mode = #tpu.pipeline_mode<synchronous>, transform_indices = @transform_5, window_bounds = array<i64: 4, 4>}, {pipeline_mode = #tpu.pipeline_mode<synchronous>, transform_indices = @transform_6, window_bounds = array<i64: 4, 1>}, {transform_indices = @transform_7, window_bounds = array<i64: 4, 1024>}]} {
    %c0 = arith.constant 0 : index
    %c0_0 = arith.constant 0 : index
    %0 = vector.load %arg3[%c0, %c0_0] : memref<4x5xf32, #tpu.memory_space<vmem>>, vector<4x5xf32>
    %c0_1 = arith.constant 0 : index
    %c0_2 = arith.constant 0 : index
    %c0_3 = arith.constant 0 : index
    %1 = vector.load %arg2[%c0_1, %c0_2, %c0_3] : memref<1x5x256xf32, #tpu.memory_space<vmem>>, vector<1x5x256xf32>
    %2 = vector.shape_cast %1 : vector<1x5x256xf32> to vector<5x256xf32>
    %3 = vector.extract_strided_slice %2 {offsets = [0, 0], sizes = [5, 128], strides = [1, 1]} : vector<5x256xf32> to vector<5x128xf32>
    %cst = arith.constant dense<0.000000e+00> : vector<4x128xf32>
    %4 = tpu.matmul %0, %3, %cst {dimension_numbers = #tpu.dot_dimension_numbers<[1], [0], [0], [1], [0, 0, 1, 1], [], []>} : vector<4x5xf32>, vector<5x128xf32>, vector<4x128xf32> -> vector<4x128xf32>
    %cst_4 = arith.constant 0.000000e+00 : f32
    %5 = vector.broadcast %cst_4 : f32 to vector<4x128xf32>
    %6 = arith.maximumf %4, %5 : vector<4x128xf32>
    %c0_5 = arith.constant 0 : index
    %c0_6 = arith.constant 0 : index
    %7 = vector.load %arg9[%c0_5, %c0_6] : memref<4x1280xf32, #tpu.memory_space<vmem>>, vector<4x128xf32>
    tpu.vector_store %arg9[%c0_5, %c0_6], %6 {strides = array<i32>} : memref<4x1280xf32, #tpu.memory_space<vmem>>, vector<4x128xf32>,
    %8 = vector.extract_strided_slice %2 {offsets = [0, 128], sizes = [5, 128], strides = [1, 1]} : vector<5x256xf32> to vector<5x128xf32>
    %cst_7 = arith.constant dense<0.000000e+00> : vector<4x128xf32>
    %9 = tpu.matmul %0, %8, %cst_7 {dimension_numbers = #tpu.dot_dimension_numbers<[1], [0], [0], [1], [0, 0, 1, 1], [], []>} : vector<4x5xf32>, vector<5x128xf32>, vector<4x128xf32> -> vector<4x128xf32>
    %cst_8 = arith.constant 0.000000e+00 : f32
    %10 = vector.broadcast %cst_8 : f32 to vector<4x128xf32>
    %11 = arith.maximumf %9, %10 : vector<4x128xf32>
    %c0_9 = arith.constant 0 : index
    %c1152 = arith.constant 1152 : index
    %12 = vector.load %arg9[%c0_9, %c1152] : memref<4x1280xf32, #tpu.memory_space<vmem>>, vector<4x128xf32>
    tpu.vector_store %arg9[%c0_9, %c1152], %11 {strides = array<i32>} : memref<4x1280xf32, #tpu.memory_space<vmem>>, vector<4x128xf32>,
    %c0_10 = arith.constant 0 : index
    %c0_11 = arith.constant 0 : index
    %13 = vector.load %arg1[%c0_10, %c0_11] : memref<5x1024xf32, #tpu.memory_space<vmem>>, vector<5x1024xf32>
    %cst_12 = arith.constant dense<0.000000e+00> : vector<4x1024xf32>
    %14 = tpu.matmul %0, %13, %cst_12 {dimension_numbers = #tpu.dot_dimension_numbers<[1], [0], [0], [1], [0, 0, 1, 1], [], []>} : vector<4x5xf32>, vector<5x1024xf32>, vector<4x1024xf32> -> vector<4x1024xf32>
    %cst_13 = arith.constant 0.000000e+00 : f32
    %15 = vector.broadcast %cst_13 : f32 to vector<4x1024xf32>
    %16 = arith.maximumf %14, %15 : vector<4x1024xf32>
    %c0_14 = arith.constant 0 : index
    %c128 = arith.constant 128 : index
    %17 = vector.load %arg9[%c0_14, %c128] : memref<4x1280xf32, #tpu.memory_space<vmem>>, vector<4x1024xf32>
    tpu.vector_store %arg9[%c0_14, %c128], %16 {strides = array<i32>} : memref<4x1280xf32, #tpu.memory_space<vmem>>, vector<4x1024xf32>,
    %c0_15 = arith.constant 0 : index
    %c17 = arith.constant 17 : index
    %18 = vector.load %arg9[%c0_15, %c17] : memref<4x1280xf32, #tpu.memory_space<vmem>>, vector<4x1024xf32>
    %c0_16 = arith.constant 0 : index
    %c0_17 = arith.constant 0 : index
    %19 = vector.load %arg10[%c0_16, %c0_17] : memref<108x1024xf32, #tpu.memory_space<vmem>>, vector<4x1024xf32>
    tpu.vector_store %arg10[%c0_16, %c0_17], %18 {strides = array<i32>} : memref<108x1024xf32, #tpu.memory_space<vmem>>, vector<4x1024xf32>,
    %c0_18 = arith.constant 0 : index
    %c18 = arith.constant 18 : index
    %20 = vector.load %arg9[%c0_18, %c18] : memref<4x1280xf32, #tpu.memory_space<vmem>>, vector<4x1024xf32>
    %c4 = arith.constant 4 : index
    %c0_19 = arith.constant 0 : index
    %21 = vector.load %arg10[%c4, %c0_19] : memref<108x1024xf32, #tpu.memory_space<vmem>>, vector<4x1024xf32>
    tpu.vector_store %arg10[%c4, %c0_19], %20 {strides = array<i32>} : memref<108x1024xf32, #tpu.memory_space<vmem>>, vector<4x1024xf32>,
    %c0_20 = arith.constant 0 : index
    %c19 = arith.constant 19 : index
    %22 = vector.load %arg9[%c0_20, %c19] : memref<4x1280xf32, #tpu.memory_space<vmem>>, vector<4x1024xf32>
    %c8 = arith.constant 8 : index
    %c0_21 = arith.constant 0 : index
    %23 = vector.load %arg10[%c8, %c0_21] : memref<108x1024xf32, #tpu.memory_space<vmem>>, vector<4x1024xf32>
    tpu.vector_store %arg10[%c8, %c0_21], %22 {strides = array<i32>} : memref<108x1024xf32, #tpu.memory_space<vmem>>, vector<4x1024xf32>,
    %c0_22 = arith.constant 0 : index
    %c27 = arith.constant 27 : index
    %24 = vector.load %arg9[%c0_22, %c27] : memref<4x1280xf32, #tpu.memory_space<vmem>>, vector<4x1024xf32>
    %c12 = arith.constant 12 : index
    %c0_23 = arith.constant 0 : index
    %25 = vector.load %arg10[%c12, %c0_23] : memref<108x1024xf32, #tpu.memory_space<vmem>>, vector<4x1024xf32>
    tpu.vector_store %arg10[%c12, %c0_23], %24 {strides = array<i32>} : memref<108x1024xf32, #tpu.memory_space<vmem>>, vector<4x1024xf32>,
    %c0_24 = arith.constant 0 : index
    %c28 = arith.constant 28 : index
    %26 = vector.load %arg9[%c0_24, %c28] : memref<4x1280xf32, #tpu.memory_space<vmem>>, vector<4x1024xf32>
    %c16 = arith.constant 16 : index
    %c0_25 = arith.constant 0 : index
    %27 = vector.load %arg10[%c16, %c0_25] : memref<108x1024xf32, #tpu.memory_space<vmem>>, vector<4x1024xf32>
    tpu.vector_store %arg10[%c16, %c0_25], %26 {strides = array<i32>} : memref<108x1024xf32, #tpu.memory_space<vmem>>, vector<4x1024xf32>,
    %c0_26 = arith.constant 0 : index
    %c29 = arith.constant 29 : index
    %28 = vector.load %arg9[%c0_26, %c29] : memref<4x1280xf32, #tpu.memory_space<vmem>>, vector<4x1024xf32>
    %c20 = arith.constant 20 : index
    %c0_27 = arith.constant 0 : index
    %29 = vector.load %arg10[%c20, %c0_27] : memref<108x1024xf32, #tpu.memory_space<vmem>>, vector<4x1024xf32>
    tpu.vector_store %arg10[%c20, %c0_27], %28 {strides = array<i32>} : memref<108x1024xf32, #tpu.memory_space<vmem>>, vector<4x1024xf32>,
    %c0_28 = arith.constant 0 : index
    %c37 = arith.constant 37 : index
    %30 = vector.load %arg9[%c0_28, %c37] : memref<4x1280xf32, #tpu.memory_space<vmem>>, vector<4x1024xf32>
    %c24 = arith.constant 24 : index
    %c0_29 = arith.constant 0 : index
    %31 = vector.load %arg10[%c24, %c0_29] : memref<108x1024xf32, #tpu.memory_space<vmem>>, vector<4x1024xf32>
    tpu.vector_store %arg10[%c24, %c0_29], %30 {strides = array<i32>} : memref<108x1024xf32, #tpu.memory_space<vmem>>, vector<4x1024xf32>,
    %c0_30 = arith.constant 0 : index
    %c38 = arith.constant 38 : index
    %32 = vector.load %arg9[%c0_30, %c38] : memref<4x1280xf32, #tpu.memory_space<vmem>>, vector<4x1024xf32>
    %c28_31 = arith.constant 28 : index
    %c0_32 = arith.constant 0 : index
    %33 = vector.load %arg10[%c28_31, %c0_32] : memref<108x1024xf32, #tpu.memory_space<vmem>>, vector<4x1024xf32>
    tpu.vector_store %arg10[%c28_31, %c0_32], %32 {strides = array<i32>} : memref<108x1024xf32, #tpu.memory_space<vmem>>, vector<4x1024xf32>,
    %c0_33 = arith.constant 0 : index
    %c39 = arith.constant 39 : index
    %34 = vector.load %arg9[%c0_33, %c39] : memref<4x1280xf32, #tpu.memory_space<vmem>>, vector<4x1024xf32>
    %c32 = arith.constant 32 : index
    %c0_34 = arith.constant 0 : index
    %35 = vector.load %arg10[%c32, %c0_34] : memref<108x1024xf32, #tpu.memory_space<vmem>>, vector<4x1024xf32>
    tpu.vector_store %arg10[%c32, %c0_34], %34 {strides = array<i32>} : memref<108x1024xf32, #tpu.memory_space<vmem>>, vector<4x1024xf32>,
    %c0_35 = arith.constant 0 : index
    %c117 = arith.constant 117 : index
    %36 = vector.load %arg9[%c0_35, %c117] : memref<4x1280xf32, #tpu.memory_space<vmem>>, vector<4x1024xf32>
    %c36 = arith.constant 36 : index
    %c0_36 = arith.constant 0 : index
    %37 = vector.load %arg10[%c36, %c0_36] : memref<108x1024xf32, #tpu.memory_space<vmem>>, vector<4x1024xf32>
    tpu.vector_store %arg10[%c36, %c0_36], %36 {strides = array<i32>} : memref<108x1024xf32, #tpu.memory_space<vmem>>, vector<4x1024xf32>,
    %c0_37 = arith.constant 0 : index
    %c118 = arith.constant 118 : index
    %38 = vector.load %arg9[%c0_37, %c118] : memref<4x1280xf32, #tpu.memory_space<vmem>>, vector<4x1024xf32>
    %c40 = arith.constant 40 : index
    %c0_38 = arith.constant 0 : index
    %39 = vector.load %arg10[%c40, %c0_38] : memref<108x1024xf32, #tpu.memory_space<vmem>>, vector<4x1024xf32>
    tpu.vector_store %arg10[%c40, %c0_38], %38 {strides = array<i32>} : memref<108x1024xf32, #tpu.memory_space<vmem>>, vector<4x1024xf32>,
    %c0_39 = arith.constant 0 : index
    %c119 = arith.constant 119 : index
    %40 = vector.load %arg9[%c0_39, %c119] : memref<4x1280xf32, #tpu.memory_space<vmem>>, vector<4x1024xf32>
    %c44 = arith.constant 44 : index
    %c0_40 = arith.constant 0 : index
    %41 = vector.load %arg10[%c44, %c0_40] : memref<108x1024xf32, #tpu.memory_space<vmem>>, vector<4x1024xf32>
    tpu.vector_store %arg10[%c44, %c0_40], %40 {strides = array<i32>} : memref<108x1024xf32, #tpu.memory_space<vmem>>, vector<4x1024xf32>,
    %c0_41 = arith.constant 0 : index
    %c127 = arith.constant 127 : index
    %42 = vector.load %arg9[%c0_41, %c127] : memref<4x1280xf32, #tpu.memory_space<vmem>>, vector<4x1024xf32>
    %c48 = arith.constant 48 : index
    %c0_42 = arith.constant 0 : index
    %43 = vector.load %arg10[%c48, %c0_42] : memref<108x1024xf32, #tpu.memory_space<vmem>>, vector<4x1024xf32>
    tpu.vector_store %arg10[%c48, %c0_42], %42 {strides = array<i32>} : memref<108x1024xf32, #tpu.memory_space<vmem>>, vector<4x1024xf32>,
    %c0_43 = arith.constant 0 : index
    %c128_44 = arith.constant 128 : index
    %44 = vector.load %arg9[%c0_43, %c128_44] : memref<4x1280xf32, #tpu.memory_space<vmem>>, vector<4x1024xf32>
    %c52 = arith.constant 52 : index
    %c0_45 = arith.constant 0 : index
    %45 = vector.load %arg10[%c52, %c0_45] : memref<108x1024xf32, #tpu.memory_space<vmem>>, vector<4x1024xf32>
    tpu.vector_store %arg10[%c52, %c0_45], %44 {strides = array<i32>} : memref<108x1024xf32, #tpu.memory_space<vmem>>, vector<4x1024xf32>,
    %c0_46 = arith.constant 0 : index
    %c129 = arith.constant 129 : index
    %46 = vector.load %arg9[%c0_46, %c129] : memref<4x1280xf32, #tpu.memory_space<vmem>>, vector<4x1024xf32>
    %c56 = arith.constant 56 : index
    %c0_47 = arith.constant 0 : index
    %47 = vector.load %arg10[%c56, %c0_47] : memref<108x1024xf32, #tpu.memory_space<vmem>>, vector<4x1024xf32>
    tpu.vector_store %arg10[%c56, %c0_47], %46 {strides = array<i32>} : memref<108x1024xf32, #tpu.memory_space<vmem>>, vector<4x1024xf32>,
    %c0_48 = arith.constant 0 : index
    %c137 = arith.constant 137 : index
    %48 = vector.load %arg9[%c0_48, %c137] : memref<4x1280xf32, #tpu.memory_space<vmem>>, vector<4x1024xf32>
    %c60 = arith.constant 60 : index
    %c0_49 = arith.constant 0 : index
    %49 = vector.load %arg10[%c60, %c0_49] : memref<108x1024xf32, #tpu.memory_space<vmem>>, vector<4x1024xf32>
    tpu.vector_store %arg10[%c60, %c0_49], %48 {strides = array<i32>} : memref<108x1024xf32, #tpu.memory_space<vmem>>, vector<4x1024xf32>,
    %c0_50 = arith.constant 0 : index
    %c138 = arith.constant 138 : index
    %50 = vector.load %arg9[%c0_50, %c138] : memref<4x1280xf32, #tpu.memory_space<vmem>>, vector<4x1024xf32>
    %c64 = arith.constant 64 : index
    %c0_51 = arith.constant 0 : index
    %51 = vector.load %arg10[%c64, %c0_51] : memref<108x1024xf32, #tpu.memory_space<vmem>>, vector<4x1024xf32>
    tpu.vector_store %arg10[%c64, %c0_51], %50 {strides = array<i32>} : memref<108x1024xf32, #tpu.memory_space<vmem>>, vector<4x1024xf32>,
    %c0_52 = arith.constant 0 : index
    %c139 = arith.constant 139 : index
    %52 = vector.load %arg9[%c0_52, %c139] : memref<4x1280xf32, #tpu.memory_space<vmem>>, vector<4x1024xf32>
    %c68 = arith.constant 68 : index
    %c0_53 = arith.constant 0 : index
    %53 = vector.load %arg10[%c68, %c0_53] : memref<108x1024xf32, #tpu.memory_space<vmem>>, vector<4x1024xf32>
    tpu.vector_store %arg10[%c68, %c0_53], %52 {strides = array<i32>} : memref<108x1024xf32, #tpu.memory_space<vmem>>, vector<4x1024xf32>,
    %c0_54 = arith.constant 0 : index
    %c217 = arith.constant 217 : index
    %54 = vector.load %arg9[%c0_54, %c217] : memref<4x1280xf32, #tpu.memory_space<vmem>>, vector<4x1024xf32>
    %c72 = arith.constant 72 : index
    %c0_55 = arith.constant 0 : index
    %55 = vector.load %arg10[%c72, %c0_55] : memref<108x1024xf32, #tpu.memory_space<vmem>>, vector<4x1024xf32>
    tpu.vector_store %arg10[%c72, %c0_55], %54 {strides = array<i32>} : memref<108x1024xf32, #tpu.memory_space<vmem>>, vector<4x1024xf32>,
    %c0_56 = arith.constant 0 : index
    %c218 = arith.constant 218 : index
    %56 = vector.load %arg9[%c0_56, %c218] : memref<4x1280xf32, #tpu.memory_space<vmem>>, vector<4x1024xf32>
    %c76 = arith.constant 76 : index
    %c0_57 = arith.constant 0 : index
    %57 = vector.load %arg10[%c76, %c0_57] : memref<108x1024xf32, #tpu.memory_space<vmem>>, vector<4x1024xf32>
    tpu.vector_store %arg10[%c76, %c0_57], %56 {strides = array<i32>} : memref<108x1024xf32, #tpu.memory_space<vmem>>, vector<4x1024xf32>,
    %c0_58 = arith.constant 0 : index
    %c219 = arith.constant 219 : index
    %58 = vector.load %arg9[%c0_58, %c219] : memref<4x1280xf32, #tpu.memory_space<vmem>>, vector<4x1024xf32>
    %c80 = arith.constant 80 : index
    %c0_59 = arith.constant 0 : index
    %59 = vector.load %arg10[%c80, %c0_59] : memref<108x1024xf32, #tpu.memory_space<vmem>>, vector<4x1024xf32>
    tpu.vector_store %arg10[%c80, %c0_59], %58 {strides = array<i32>} : memref<108x1024xf32, #tpu.memory_space<vmem>>, vector<4x1024xf32>,
    %c0_60 = arith.constant 0 : index
    %c227 = arith.constant 227 : index
    %60 = vector.load %arg9[%c0_60, %c227] : memref<4x1280xf32, #tpu.memory_space<vmem>>, vector<4x1024xf32>
    %c84 = arith.constant 84 : index
    %c0_61 = arith.constant 0 : index
    %61 = vector.load %arg10[%c84, %c0_61] : memref<108x1024xf32, #tpu.memory_space<vmem>>, vector<4x1024xf32>
    tpu.vector_store %arg10[%c84, %c0_61], %60 {strides = array<i32>} : memref<108x1024xf32, #tpu.memory_space<vmem>>, vector<4x1024xf32>,
    %c0_62 = arith.constant 0 : index
    %c228 = arith.constant 228 : index
    %62 = vector.load %arg9[%c0_62, %c228] : memref<4x1280xf32, #tpu.memory_space<vmem>>, vector<4x1024xf32>
    %c88 = arith.constant 88 : index
    %c0_63 = arith.constant 0 : index
    %63 = vector.load %arg10[%c88, %c0_63] : memref<108x1024xf32, #tpu.memory_space<vmem>>, vector<4x1024xf32>
    tpu.vector_store %arg10[%c88, %c0_63], %62 {strides = array<i32>} : memref<108x1024xf32, #tpu.memory_space<vmem>>, vector<4x1024xf32>,
    %c0_64 = arith.constant 0 : index
    %c229 = arith.constant 229 : index
    %64 = vector.load %arg9[%c0_64, %c229] : memref<4x1280xf32, #tpu.memory_space<vmem>>, vector<4x1024xf32>
    %c92 = arith.constant 92 : index
    %c0_65 = arith.constant 0 : index
    %65 = vector.load %arg10[%c92, %c0_65] : memref<108x1024xf32, #tpu.memory_space<vmem>>, vector<4x1024xf32>
    tpu.vector_store %arg10[%c92, %c0_65], %64 {strides = array<i32>} : memref<108x1024xf32, #tpu.memory_space<vmem>>, vector<4x1024xf32>,
    %c0_66 = arith.constant 0 : index
    %c237 = arith.constant 237 : index
    %66 = vector.load %arg9[%c0_66, %c237] : memref<4x1280xf32, #tpu.memory_space<vmem>>, vector<4x1024xf32>
    %c96 = arith.constant 96 : index
    %c0_67 = arith.constant 0 : index
    %67 = vector.load %arg10[%c96, %c0_67] : memref<108x1024xf32, #tpu.memory_space<vmem>>, vector<4x1024xf32>
    tpu.vector_store %arg10[%c96, %c0_67], %66 {strides = array<i32>} : memref<108x1024xf32, #tpu.memory_space<vmem>>, vector<4x1024xf32>,
    %c0_68 = arith.constant 0 : index
    %c238 = arith.constant 238 : index
    %68 = vector.load %arg9[%c0_68, %c238] : memref<4x1280xf32, #tpu.memory_space<vmem>>, vector<4x1024xf32>
    %c100 = arith.constant 100 : index
    %c0_69 = arith.constant 0 : index
    %69 = vector.load %arg10[%c100, %c0_69] : memref<108x1024xf32, #tpu.memory_space<vmem>>, vector<4x1024xf32>
    tpu.vector_store %arg10[%c100, %c0_69], %68 {strides = array<i32>} : memref<108x1024xf32, #tpu.memory_space<vmem>>, vector<4x1024xf32>,
    %c0_70 = arith.constant 0 : index
    %c239 = arith.constant 239 : index
    %70 = vector.load %arg9[%c0_70, %c239] : memref<4x1280xf32, #tpu.memory_space<vmem>>, vector<4x1024xf32>
    %c104 = arith.constant 104 : index
    %c0_71 = arith.constant 0 : index
    %71 = vector.load %arg10[%c104, %c0_71] : memref<108x1024xf32, #tpu.memory_space<vmem>>, vector<4x1024xf32>
    tpu.vector_store %arg10[%c104, %c0_71], %70 {strides = array<i32>} : memref<108x1024xf32, #tpu.memory_space<vmem>>, vector<4x1024xf32>,
    %c0_72 = arith.constant 0 : index
    %c0_73 = arith.constant 0 : index
    %72 = vector.load %arg4[%c0_72, %c0_73] : memref<4x108xf32, #tpu.memory_space<vmem>>, vector<4x108xf32>
    %c0_74 = arith.constant 0 : index
    %c0_75 = arith.constant 0 : index
    %73 = vector.load %arg10[%c0_74, %c0_75] : memref<108x1024xf32, #tpu.memory_space<vmem>>, vector<108x1024xf32>
    %cst_76 = arith.constant dense<0.000000e+00> : vector<4x1024xf32>
    %74 = tpu.matmul %72, %73, %cst_76 {dimension_numbers = #tpu.dot_dimension_numbers<[1], [0], [0], [1], [0, 0, 1, 1], [], []>} : vector<4x108xf32>, vector<108x1024xf32>, vector<4x1024xf32> -> vector<4x1024xf32>
    %c0_77 = arith.constant 0 : index
    %c0_78 = arith.constant 0 : index
    %75 = vector.load %arg5[%c0_77, %c0_78] : memref<4x1xf32, #tpu.memory_space<vmem>>, vector<4x1xf32>
    %76 = vector.broadcast %75 : vector<4x1xf32> to vector<4x1024xf32>
    %77 = arith.addf %74, %76 : vector<4x1024xf32>
    %cst_79 = arith.constant 0.000000e+00 : f32
    %78 = vector.broadcast %cst_79 : f32 to vector<4x1024xf32>
    %79 = arith.maximumf %77, %78 : vector<4x1024xf32>
    %c0_80 = arith.constant 0 : index
    %c0_81 = arith.constant 0 : index
    %80 = vector.load %arg6[%c0_80, %c0_81] : memref<4x4xf32, #tpu.memory_space<vmem>>, vector<4x4xf32>
    %cst_82 = arith.constant dense<0.000000e+00> : vector<4x1024xf32>
    %81 = tpu.matmul %80, %79, %cst_82 {dimension_numbers = #tpu.dot_dimension_numbers<[1], [0], [0], [1], [0, 0, 1, 1], [], []>} : vector<4x4xf32>, vector<4x1024xf32>, vector<4x1024xf32> -> vector<4x1024xf32>
    %c0_83 = arith.constant 0 : index
    %c0_84 = arith.constant 0 : index
    %82 = vector.load %arg7[%c0_83, %c0_84] : memref<4x1xf32, #tpu.memory_space<vmem>>, vector<4x1xf32>
    %83 = vector.broadcast %82 : vector<4x1xf32> to vector<4x1024xf32>
    %84 = arith.addf %81, %83 : vector<4x1024xf32>
    %c0_85 = arith.constant 0 : index
    %c0_86 = arith.constant 0 : index
    %85 = vector.load %arg1[%c0_85, %c0_86] : memref<5x1024xf32, #tpu.memory_space<vmem>>, vector<4x1024xf32>
    %86 = arith.addf %84, %85 : vector<4x1024xf32>
    %cst_87 = arith.constant 0.000000e+00 : f32
    %87 = vector.broadcast %cst_87 : f32 to vector<4x1024xf32>
    %88 = arith.maximumf %86, %87 : vector<4x1024xf32>
    %c0_88 = arith.constant 0 : index
    %c0_89 = arith.constant 0 : index
    %89 = vector.load %arg8[%c0_88, %c0_89] : memref<4x1024xf32, #tpu.memory_space<vmem>>, vector<4x1024xf32>
    tpu.vector_store %arg8[%c0_88, %c0_89], %88 {strides = array<i32>} : memref<4x1024xf32, #tpu.memory_space<vmem>>, vector<4x1024xf32>,
    return
  }
  func.func @transform_0(%arg0: i32) -> (i32, i32) {
    %c0_i32 = arith.constant 0 : i32
    %c0_i32_0 = arith.constant 0 : i32
    return %c0_i32, %arg0 : i32, i32
  }
  func.func @transform_1(%arg0: i32) -> (i32, i32, i32) {
    %c0_i32 = arith.constant 0 : i32
    %c0_i32_0 = arith.constant 0 : i32
    %c0_i32_1 = arith.constant 0 : i32
    return %arg0, %c0_i32, %c0_i32_0 : i32, i32, i32
  }
  func.func @transform_2(%arg0: i32) -> (i32, i32) {
    %c0_i32 = arith.constant 0 : i32
    %c0_i32_0 = arith.constant 0 : i32
    %c0_i32_1 = arith.constant 0 : i32
    return %c0_i32, %c0_i32_0 : i32, i32
  }
  func.func @transform_3(%arg0: i32) -> (i32, i32) {
    %c0_i32 = arith.constant 0 : i32
    %c0_i32_0 = arith.constant 0 : i32
    %c0_i32_1 = arith.constant 0 : i32
    return %c0_i32, %c0_i32_0 : i32, i32
  }
  func.func @transform_4(%arg0: i32) -> (i32, i32) {
    %c0_i32 = arith.constant 0 : i32
    %c0_i32_0 = arith.constant 0 : i32
    %c0_i32_1 = arith.constant 0 : i32
    return %c0_i32, %c0_i32_0 : i32, i32
  }
  func.func @transform_5(%arg0: i32) -> (i32, i32) {
    %c0_i32 = arith.constant 0 : i32
    %c0_i32_0 = arith.constant 0 : i32
    %c0_i32_1 = arith.constant 0 : i32
    return %c0_i32, %c0_i32_0 : i32, i32
  }
  func.func @transform_6(%arg0: i32) -> (i32, i32) {
    %c0_i32 = arith.constant 0 : i32
    %c0_i32_0 = arith.constant 0 : i32
    %c0_i32_1 = arith.constant 0 : i32
    return %c0_i32, %c0_i32_0 : i32, i32
  }
  func.func @transform_7(%arg0: i32) -> (i32, i32) {
    %c0_i32 = arith.constant 0 : i32
    %c0_i32_0 = arith.constant 0 : i32
    return %c0_i32, %arg0 : i32, i32
  }
}

</mosaic_0001>

<llo_original>
// kernel: bottleneck_forward.1
$region0: #{bottleneck_forward.1}
  #allocation0 [shape = 'u32[]', space=smem, size = 0x4, offset = 0x4, fixed_abs, tag = 'smem constant byte address 0x4 - core index']
  #allocation1 [shape = 'u32[72,128]{1,0:T(1,128)}', space=vmem, size = 0x9000, scoped, tag = 'internal scratch']
  #allocation2 [shape = 'f32[4,1280]{1,0:T(4,128)}', space=vmem, size = 0x5000, scoped, tag = 'scratch operand']
  #allocation3 [shape = 'f32[108,1024]{1,0:T(8,128)}', space=vmem, size = 0x70000, scoped, tag = 'scratch operand']
  %s0 = inlined_call_operand.vmem [shape: f32[5,2048], index: 0, kind: input, shape index: {}]
  %s1 = inlined_call_operand.vmem [shape: f32[2,5,256], index: 1, kind: input, shape index: {}]
  %s2 = inlined_call_operand.vmem [shape: f32[4,5], index: 2, kind: input, shape index: {}]
  %s3 = inlined_call_operand.vmem [shape: f32[4,108], index: 3, kind: input, shape index: {}]
  %s4 = inlined_call_operand.vmem [shape: f32[4,1], index: 4, kind: input, shape index: {}]
  %s5 = inlined_call_operand.vmem [shape: f32[4,4], index: 5, kind: input, shape index: {}]
  %s6 = inlined_call_operand.vmem [shape: f32[4,1], index: 6, kind: input, shape index: {}]
  %s7 = inlined_call_operand.vmem [shape: f32[4,2048], index: 7, kind: output, shape index: {}]
  %s8 = sld [smem:[#allocation0]]
  $region61: #{bottleneck_forward.1} parent=0
    _
  %s10 = ssub.s32 1, %s8
  %s11 = scalar_select 0, %s10, %s8
  loop: start=0, step=1, limit=4
  $region2: #{bottleneck_forward.1} parent=0 // loop_pre_header
    _
  $region3: #{bottleneck_forward.1} parent=0 // loop_header
    %s13 = sphi 0, %s17
    %p14 = scmp.ge.s32.totalorder %s13, 4
    %s23 = sphi 0, %s25
    %s26 = sphi 0, %s23
    %s27 = sphi 0, %s26
    %s43 = sphi 0, %s27
    %s49 = sphi 0, %s51
    %s52 = sphi 0, %s49
    %s53 = sphi 0, %s52
    %s69 = sphi 0, %s53
    %s73 = sphi 0, %s73
    %s75 = sphi 0, %s73
    %s76 = sphi 0, %s75
    %s90 = sphi 0, %s76
    %s94 = sphi 0, %s94
    %s96 = sphi 0, %s94
    %s97 = sphi 0, %s96
    %s111 = sphi 0, %s97
    %s115 = sphi 0, %s115
    %s117 = sphi 0, %s115
    %s118 = sphi 0, %s117
    %s132 = sphi 0, %s118
    %s136 = sphi 0, %s136
    %s138 = sphi 0, %s136
    %s139 = sphi 0, %s138
    %s153 = sphi 0, %s139
    %s157 = sphi 0, %s157
    %s159 = sphi 0, %s157
    %s160 = sphi 0, %s159
    %s174 = sphi 0, %s160
    %s180 = sphi 0, %s182
    %s183 = sphi 0, %s180
    %s184 = sphi 0, %s183
    %s200 = sphi 0, %s184
  $region4: #{bottleneck_forward.1} parent=0 // loop_header_branch
    %16 = sbr.rel (%p14) target = $region8
  $region5: #{bottleneck_forward.1} parent=0 // loop_body
    %s18 = ssub.s32 %s13, 1
    %s19 = ssub.s32 %s13, 2
    %s20 = sadd.s32 %s13, 1
    %s21 = ssub.s32 %s13, %s20
    %p22 = scmp.eq.s32.totalorder %s21, 0
    %s24 = sadd.s32 %s23, 1
    %s25 = scalar_select %p22, %s23, %s24
    %p28 = pneg %p22
    %p29 = scmp.eq.s32.totalorder %s13, 1
    %p30 = por %p28, %p29
    %p31 = scmp.ne.s32.totalorder %s23, %s26
    %p32 = scmp.eq.s32.totalorder %s13, 0
    %p33 = por %p31, %p32
    %p34 = scmp.ne.s32.totalorder %s23, %s26
    %p35 = scmp.eq.s32.totalorder %s18, 1
    %p36 = por %p34, %p35
    %p37 = scmp.ne.s32.totalorder %s26, %s27
    %p38 = scmp.eq.s32.totalorder %s18, 0
    %p39 = por %p37, %p38
    %p40 = scmp.ne.s32.totalorder %s26, %s27
    %p41 = scmp.eq.s32.totalorder %s19, 1
    %p42 = por %p40, %p41
    %p44 = scmp.ne.s32.totalorder %s27, %s43
    %p45 = scmp.eq.s32.totalorder %s19, 0
    %p46 = por %p44, %p45
    %s47 = ssub.s32 %s13, %s20
    %p48 = scmp.eq.s32.totalorder %s47, 0
    %s50 = sadd.s32 %s49, 1
    %s51 = scalar_select %p48, %s49, %s50
    %p54 = pneg %p48
    %p55 = scmp.eq.s32.totalorder %s13, 1
    %p56 = por %p54, %p55
    %p57 = scmp.ne.s32.totalorder %s49, %s52
    %p58 = scmp.eq.s32.totalorder %s13, 0
    %p59 = por %p57, %p58
    %p60 = scmp.ne.s32.totalorder %s49, %s52
    %p61 = scmp.eq.s32.totalorder %s18, 1
    %p62 = por %p60, %p61
    %p63 = scmp.ne.s32.totalorder %s52, %s53
    %p64 = scmp.eq.s32.totalorder %s18, 0
    %p65 = por %p63, %p64
    %p66 = scmp.ne.s32.totalorder %s52, %s53
    %p67 = scmp.eq.s32.totalorder %s19, 1
    %p68 = por %p66, %p67
    %p70 = scmp.ne.s32.totalorder %s53, %s69
    %p71 = scmp.eq.s32.totalorder %s19, 0
    %p72 = por %p70, %p71
    %s74 = sadd.s32 %s73, 1
    %p77 = scmp.eq.s32.totalorder %s13, 1
    %p78 = scmp.ne.s32.totalorder %s73, %s75
    %p79 = scmp.eq.s32.totalorder %s13, 0
    %p80 = por %p78, %p79
    %p81 = scmp.ne.s32.totalorder %s73, %s75
    %p82 = scmp.eq.s32.totalorder %s18, 1
    %p83 = por %p81, %p82
    %p84 = scmp.ne.s32.totalorder %s75, %s76
    %p85 = scmp.eq.s32.totalorder %s18, 0
    %p86 = por %p84, %p85
    %p87 = scmp.ne.s32.totalorder %s75, %s76
    %p88 = scmp.eq.s32.totalorder %s19, 1
    %p89 = por %p87, %p88
    %p91 = scmp.ne.s32.totalorder %s76, %s90
    %p92 = scmp.eq.s32.totalorder %s19, 0
    %p93 = por %p91, %p92
    %s95 = sadd.s32 %s94, 1
    %p98 = scmp.eq.s32.totalorder %s13, 1
    %p99 = scmp.ne.s32.totalorder %s94, %s96
    %p100 = scmp.eq.s32.totalorder %s13, 0
    %p101 = por %p99, %p100
    %p102 = scmp.ne.s32.totalorder %s94, %s96
    %p103 = scmp.eq.s32.totalorder %s18, 1
    %p104 = por %p102, %p103
    %p105 = scmp.ne.s32.totalorder %s96, %s97
    %p106 = scmp.eq.s32.totalorder %s18, 0
    %p107 = por %p105, %p106
    %p108 = scmp.ne.s32.totalorder %s96, %s97
    %p109 = scmp.eq.s32.totalorder %s19, 1
    %p110 = por %p108, %p109
    %p112 = scmp.ne.s32.totalorder %s97, %s111
    %p113 = scmp.eq.s32.totalorder %s19, 0
    %p114 = por %p112, %p113
    %s116 = sadd.s32 %s115, 1
    %p119 = scmp.eq.s32.totalorder %s13, 1
    %p120 = scmp.ne.s32.totalorder %s115, %s117
    %p121 = scmp.eq.s32.totalorder %s13, 0
    %p122 = por %p120, %p121
    %p123 = scmp.ne.s32.totalorder %s115, %s117
    %p124 = scmp.eq.s32.totalorder %s18, 1
    %p125 = por %p123, %p124
    %p126 = scmp.ne.s32.totalorder %s117, %s118
    %p127 = scmp.eq.s32.totalorder %s18, 0
    %p128 = por %p126, %p127
    %p129 = scmp.ne.s32.totalorder %s117, %s118
    %p130 = scmp.eq.s32.totalorder %s19, 1
    %p131 = por %p129, %p130
    %p133 = scmp.ne.s32.totalorder %s118, %s132
    %p134 = scmp.eq.s32.totalorder %s19, 0
    %p135 = por %p133, %p134
    %s137 = sadd.s32 %s136, 1
    %p140 = scmp.eq.s32.totalorder %s13, 1
    %p141 = scmp.ne.s32.totalorder %s136, %s138
    %p142 = scmp.eq.s32.totalorder %s13, 0
    %p143 = por %p141, %p142
    %p144 = scmp.ne.s32.totalorder %s136, %s138
    %p145 = scmp.eq.s32.totalorder %s18, 1
    %p146 = por %p144, %p145
    %p147 = scmp.ne.s32.totalorder %s138, %s139
    %p148 = scmp.eq.s32.totalorder %s18, 0
    %p149 = por %p147, %p148
    %p150 = scmp.ne.s32.totalorder %s138, %s139
    %p151 = scmp.eq.s32.totalorder %s19, 1
    %p152 = por %p150, %p151
    %p154 = scmp.ne.s32.totalorder %s139, %s153
    %p155 = scmp.eq.s32.totalorder %s19, 0
    %p156 = por %p154, %p155
    %s158 = sadd.s32 %s157, 1
    %p161 = scmp.eq.s32.totalorder %s13, 1
    %p162 = scmp.ne.s32.totalorder %s157, %s159
    %p163 = scmp.eq.s32.totalorder %s13, 0
    %p164 = por %p162, %p163
    %p165 = scmp.ne.s32.totalorder %s157, %s159
    %p166 = scmp.eq.s32.totalorder %s18, 1
    %p167 = por %p165, %p166
    %p168 = scmp.ne.s32.totalorder %s159, %s160
    %p169 = scmp.eq.s32.totalorder %s18, 0
    %p170 = por %p168, %p169
    %p171 = scmp.ne.s32.totalorder %s159, %s160
    %p172 = scmp.eq.s32.totalorder %s19, 1
    %p173 = por %p171, %p172
    %p175 = scmp.ne.s32.totalorder %s160, %s174
    %p176 = scmp.eq.s32.totalorder %s19, 0
    %p177 = por %p175, %p176
    %s178 = ssub.s32 %s13, %s20
    %p179 = scmp.eq.s32.totalorder %s178, 0
    %s181 = sadd.s32 %s180, 1
    %s182 = scalar_select %p179, %s180, %s181
    %p185 = pneg %p179
    %p186 = scmp.eq.s32.totalorder %s13, 1
    %p187 = por %p185, %p186
    %p188 = scmp.ne.s32.totalorder %s180, %s183
    %p189 = scmp.eq.s32.totalorder %s13, 0
    %p190 = por %p188, %p189
    %p191 = scmp.ne.s32.totalorder %s180, %s183
    %p192 = scmp.eq.s32.totalorder %s18, 1
    %p193 = por %p191, %p192
    %p194 = scmp.ne.s32.totalorder %s183, %s184
    %p195 = scmp.eq.s32.totalorder %s18, 0
    %p196 = por %p194, %p195
    %p197 = scmp.ne.s32.totalorder %s183, %s184
    %p198 = scmp.eq.s32.totalorder %s19, 1
    %p199 = por %p197, %p198
    %p201 = scmp.ne.s32.totalorder %s184, %s200
    %p202 = scmp.eq.s32.totalorder %s19, 0
    %p203 = por %p201, %p202
    %p204 = scmp.le.s32.totalorder 1, %s13
    %p205 = scmp.lt.s32.totalorder %s13, 3
    %p206 = pnand %p204, %p205
    %p207 = pneg %p206
    // Predicated region
    $region9: #{bottleneck_forward.1} parent=5 // pred_check
      _
    $region10: #{bottleneck_forward.1} parent=5 // pred_check_branch
      %209 = sbr.rel (%p206) target = $region12
    $region11: #{bottleneck_forward.1} parent=5 // pred_region
      %s210 = ssub.s32 %s13, 1
      // Predicated region
      $region13: #{bottleneck_forward.1} parent=11 // pred_check
        %p211 = pneg %p86
      $region14: #{bottleneck_forward.1} parent=11 // pred_check_branch
        %213 = sbr.rel (%p211) target = $region16
      $region15: #{bottleneck_forward.1} parent=11 // pred_region
        _
      $region16: #{bottleneck_forward.1} parent=11 // pred_fallthru
        _
      // Predicated region
      $region17: #{bottleneck_forward.1} parent=11 // pred_check
        %p214 = pneg %p107
      $region18: #{bottleneck_forward.1} parent=11 // pred_check_branch
        %216 = sbr.rel (%p214) target = $region20
      $region19: #{bottleneck_forward.1} parent=11 // pred_region
        _
      $region20: #{bottleneck_forward.1} parent=11 // pred_fallthru
        _
      // Predicated region
      $region21: #{bottleneck_forward.1} parent=11 // pred_check
        %p217 = pneg %p128
      $region22: #{bottleneck_forward.1} parent=11 // pred_check_branch
        %219 = sbr.rel (%p217) target = $region24
      $region23: #{bottleneck_forward.1} parent=11 // pred_region
        _
      $region24: #{bottleneck_forward.1} parent=11 // pred_fallthru
        _
      // Predicated region
      $region25: #{bottleneck_forward.1} parent=11 // pred_check
        %p220 = pneg %p149
      $region26: #{bottleneck_forward.1} parent=11 // pred_check_branch
        %222 = sbr.rel (%p220) target = $region28
      $region27: #{bottleneck_forward.1} parent=11 // pred_region
        _
      $region28: #{bottleneck_forward.1} parent=11 // pred_fallthru
        _
      // Predicated region
      $region29: #{bottleneck_forward.1} parent=11 // pred_check
        %p223 = pneg %p170
      $region30: #{bottleneck_forward.1} parent=11 // pred_check_branch
        %225 = sbr.rel (%p223) target = $region32
      $region31: #{bottleneck_forward.1} parent=11 // pred_region
        _
      $region32: #{bottleneck_forward.1} parent=11 // pred_fallthru
        _
    $region12: #{bottleneck_forward.1} parent=5 // pred_fallthru
      _
    %p226 = scmp.lt.s32.totalorder %s13, 2
    // Predicated region
    $region33: #{bottleneck_forward.1} parent=5 // pred_check
      %p227 = pneg %p226
    $region34: #{bottleneck_forward.1} parent=5 // pred_check_branch
      %229 = sbr.rel (%p227) target = $region36
    $region35: #{bottleneck_forward.1} parent=5 // pred_region
      // Predicated region
      $region37: #{bottleneck_forward.1} parent=35 // pred_check
        %p230 = pneg %p33
      $region38: #{bottleneck_forward.1} parent=35 // pred_check_branch
        %232 = sbr.rel (%p230) target = $region40
      $region39: #{bottleneck_forward.1} parent=35 // pred_region
        %s233 = smul.u32 8, %s13
        %p234 = scmp.lt.s32.totalorder %s233, 15
        %s235 = scalar_select %p234, %s233, 15
        %s236 = smul.addr %s235, 8
        %s237 = scalar_lea.vmem %s0, %s236
        %s238 = smul.u32 8, %s13
      $region40: #{bottleneck_forward.1} parent=35 // pred_fallthru
        _
      // Predicated region
      $region41: #{bottleneck_forward.1} parent=35 // pred_check
        %p239 = pneg %p59
      $region42: #{bottleneck_forward.1} parent=35 // pred_check_branch
        %241 = sbr.rel (%p239) target = $region44
      $region43: #{bottleneck_forward.1} parent=35 // pred_region
        %p242 = scmp.lt.s32.totalorder %s13, 1
        %s243 = scalar_select %p242, %s13, 1
        %s244 = smul.addr %s243, 2
        %s245 = smul.addr %s244, 8
        %s246 = scalar_lea.vmem %s1, %s245
      $region44: #{bottleneck_forward.1} parent=35 // pred_fallthru
        _
    $region36: #{bottleneck_forward.1} parent=5 // pred_fallthru
      _
    %p247 = scmp.le.s32.totalorder 1, %s13
    %p248 = scmp.lt.s32.totalorder %s13, 3
    %p249 = pnand %p247, %p248
    %p250 = pneg %p249
    // Predicated region
    $region45: #{bottleneck_forward.1} parent=5 // pred_check
      _
    $region46: #{bottleneck_forward.1} parent=5 // pred_check_branch
      %252 = sbr.rel (%p249) target = $region48
    $region47: #{bottleneck_forward.1} parent=5 // pred_region
      %s253 = ssub.s32 %s13, 1
      %s254 = smul.u32 8, %s18
      %p255 = scmp.lt.s32.totalorder %s254, 15
      %s256 = scalar_select %p255, %s254, 15
      %s257 = smul.addr %s256, 8
      %s258 = scalar_lea.vmem %s0, %s257
      %p259 = pneg %p39
      %p260 = pneg %p36
      %p261 = scmp.lt.s32.totalorder %s18, 1
      %s262 = scalar_select %p261, %s18, 1
      %s263 = smul.addr %s262, 2
      %s264 = smul.addr %s263, 8
      %s265 = scalar_lea.vmem %s1, %s264
      %p266 = pneg %p65
      %p267 = pneg %p62
      %p268 = pneg %p86
      %p269 = pneg %p83
      %p270 = pneg %p107
      %p271 = pneg %p104
      %p272 = pneg %p128
      %p273 = pneg %p125
      %p274 = pneg %p149
      %p275 = pneg %p146
      %p276 = pneg %p170
      %p277 = pneg %p167
      %p278 = pneg %p196
      %p279 = pneg %p193
      %s280 = smul.u32 8, %s18
      %p281 = scmp.lt.s32.totalorder %s280, 15
      %s282 = scalar_select %p281, %s280, 15
      %s283 = smul.addr %s282, 4
      %s284 = scalar_lea.vmem %s7, %s283
      %s285 = smul.u32 8, %s18
      %p286 = scmp.lt.s32.totalorder %s285, 15
      %s287 = scalar_select %p286, %s285, 15
      %s288 = smul.addr %s287, 8
      %s289 = scalar_lea.vmem %s0, %s288
      %s290 = smul.u32 8, %s18
      %p291 = scmp.lt.s32.totalorder %s18, 1
      %s292 = scalar_select %p291, %s18, 1
      %s293 = smul.addr %s292, 2
      %s294 = smul.addr %s293, 8
      %s295 = scalar_lea.vmem %s1, %s294
      %s296 = smul.u32 8, %s18
      %p297 = scmp.lt.s32.totalorder %s296, 15
      %s298 = scalar_select %p297, %s296, 15
      %s299 = smul.addr %s298, 4
      %s300 = scalar_lea.vmem %s7, %s299
      %s301 = smul.u32 8, %s18
      %v302 = vld [vmem:[%s2] sm:$0xf]
      %v303 = vld [vmem:[%s295] sm:$0x1f]
      %v304 = vld [vmem:[%s295 + $0x8] sm:$0x1f]
      %vm305 = vcmask 39936
      %v307 = vsel %vm305, %v302, 0
      %vm309 = vcmask 1044480
      %v311 = vsel %vm309, %v303, 0
      %313 = vmatpush.msra.mxu0 0.0
      %314 = vmatpush.msra.mxu0 0.0
      %315 = vmatpush.msra.mxu0 0.0
      %316 = vmatpush.msra.mxu0 0.0
      %317 = vmatpush.msra.mxu0 0.0
      %318 = vmatpush.msra.mxu0 0.0
      %319 = vmatpush.msra.mxu0 0.0
      %320 = vmatpush.msra.mxu0 0.0
      %321 = vmatpush.msra.mxu0 0.0
      %322 = vmatpush.msra.mxu0 0.0
      %323 = vmatpush.msra.mxu0 0.0
      %324 = vmatpush.msra.mxu0 0.0
      %325 = vmatpush.msra.mxu0 0.0
      %326 = vmatpush.msra.mxu0 0.0
      %327 = vmatpush.msra.mxu0 0.0
      %328 = vmatpush.msra.mxu0 %v311
      %329 = vmatmul.f32.gmra.mxu0 %v307
      %v330 = vpop.f32.mrf.mxu0
      %v331 = vadd.f32 0.0, %v330
      %332 = vdwg.mxu0
      %v333 = vmax.f32 %v331, 0.0
      %334 = vst [vmem:[#allocation2] sm:$0xf] %v333
      %v336 = vsel %vm309, %v304, 0
      %338 = vmatpush.msra.mxu0 0.0
      %339 = vmatpush.msra.mxu0 0.0
      %340 = vmatpush.msra.mxu0 0.0
      %341 = vmatpush.msra.mxu0 0.0
      %342 = vmatpush.msra.mxu0 0.0
      %343 = vmatpush.msra.mxu0 0.0
      %344 = vmatpush.msra.mxu0 0.0
      %345 = vmatpush.msra.mxu0 0.0
      %346 = vmatpush.msra.mxu0 0.0
      %347 = vmatpush.msra.mxu0 0.0
      %348 = vmatpush.msra.mxu0 0.0
      %349 = vmatpush.msra.mxu0 0.0
      %350 = vmatpush.msra.mxu0 0.0
      %351 = vmatpush.msra.mxu0 0.0
      %352 = vmatpush.msra.mxu0 0.0
      %353 = vmatpush.msra.mxu0 %v336
      %354 = vmatmul.f32.gmra.mxu0 %v307
      %v355 = vpop.f32.mrf.mxu0
      %v356 = vadd.f32 0.0, %v355
      %357 = vdwg.mxu0
      %v358 = vmax.f32 %v356, 0.0
      %359 = vst [vmem:[#allocation2 + $0x24] sm:$0xf] %v358
      %v360 = vld [vmem:[%s289] sm:$0x1f]
      %v361 = vld [vmem:[%s289 + $0x8] sm:$0x1f]
      %v362 = vld [vmem:[%s289 + $0x10] sm:$0x1f]
      %v363 = vld [vmem:[%s289 + $0x18] sm:$0x1f]
      %v364 = vld [vmem:[%s289 + $0x20] sm:$0x1f]
      %v365 = vld [vmem:[%s289 + $0x28] sm:$0x1f]
      %v366 = vld [vmem:[%s289 + $0x30] sm:$0x1f]
      %v367 = vld [vmem:[%s289 + $0x38] sm:$0x1f]
      %v369 = vsel %vm309, %v360, 0
      %v372 = vsel %vm309, %v361, 0
      %v375 = vsel %vm309, %v362, 0
      %v378 = vsel %vm309, %v363, 0
      %v381 = vsel %vm309, %v364, 0
      %v384 = vsel %vm309, %v365, 0
      %v387 = vsel %vm309, %v366, 0
      %v390 = vsel %vm309, %v367, 0
      %392 = vmatpush.msra.mxu0 0.0
      %393 = vmatpush.msra.mxu0 0.0
      %394 = vmatpush.msra.mxu0 0.0
      %395 = vmatpush.msra.mxu0 0.0
      %396 = vmatpush.msra.mxu0 0.0
      %397 = vmatpush.msra.mxu0 0.0
      %398 = vmatpush.msra.mxu0 0.0
      %399 = vmatpush.msra.mxu0 0.0
      %400 = vmatpush.msra.mxu0 0.0
      %401 = vmatpush.msra.mxu0 0.0
      %402 = vmatpush.msra.mxu0 0.0
      %403 = vmatpush.msra.mxu0 0.0
      %404 = vmatpush.msra.mxu0 0.0
      %405 = vmatpush.msra.mxu0 0.0
      %406 = vmatpush.msra.mxu0 0.0
      %407 = vmatpush.msra.mxu0 %v369
      %408 = vmatmul.f32.gmra.mxu0 %v307
      %v409 = vpop.f32.mrf.mxu0
      %v410 = vadd.f32 0.0, %v409
      %411 = vdwg.mxu0
      %412 = vmatpush.msra.mxu0 0.0
      %413 = vmatpush.msra.mxu0 0.0
      %414 = vmatpush.msra.mxu0 0.0
      %415 = vmatpush.msra.mxu0 0.0
      %416 = vmatpush.msra.mxu0 0.0
      %417 = vmatpush.msra.mxu0 0.0
      %418 = vmatpush.msra.mxu0 0.0
      %419 = vmatpush.msra.mxu0 0.0
      %420 = vmatpush.msra.mxu0 0.0
      %421 = vmatpush.msra.mxu0 0.0
      %422 = vmatpush.msra.mxu0 0.0
      %423 = vmatpush.msra.mxu0 0.0
      %424 = vmatpush.msra.mxu0 0.0
      %425 = vmatpush.msra.mxu0 0.0
      %426 = vmatpush.msra.mxu0 0.0
      %427 = vmatpush.msra.mxu0 %v372
      %428 = vmatmul.f32.gmra.mxu0 %v307
      %v429 = vpop.f32.mrf.mxu0
      %v430 = vadd.f32 0.0, %v429
      %431 = vdwg.mxu0
      %432 = vmatpush.msra.mxu0 0.0
      %433 = vmatpush.msra.mxu0 0.0
      %434 = vmatpush.msra.mxu0 0.0
      %435 = vmatpush.msra.mxu0 0.0
      %436 = vmatpush.msra.mxu0 0.0
      %437 = vmatpush.msra.mxu0 0.0
      %438 = vmatpush.msra.mxu0 0.0
      %439 = vmatpush.msra.mxu0 0.0
      %440 = vmatpush.msra.mxu0 0.0
      %441 = vmatpush.msra.mxu0 0.0
      %442 = vmatpush.msra.mxu0 0.0
      %443 = vmatpush.msra.mxu0 0.0
      %444 = vmatpush.msra.mxu0 0.0
      %445 = vmatpush.msra.mxu0 0.0
      %446 = vmatpush.msra.mxu0 0.0
      %447 = vmatpush.msra.mxu0 %v375
      %448 = vmatmul.f32.gmra.mxu0 %v307
      %v449 = vpop.f32.mrf.mxu0
      %v450 = vadd.f32 0.0, %v449
      %451 = vdwg.mxu0
      %452 = vmatpush.msra.mxu0 0.0
      %453 = vmatpush.msra.mxu0 0.0
      %454 = vmatpush.msra.mxu0 0.0
      %455 = vmatpush.msra.mxu0 0.0
      %456 = vmatpush.msra.mxu0 0.0
      %457 = vmatpush.msra.mxu0 0.0
      %458 = vmatpush.msra.mxu0 0.0
      %459 = vmatpush.msra.mxu0 0.0
      %460 = vmatpush.msra.mxu0 0.0
      %461 = vmatpush.msra.mxu0 0.0
      %462 = vmatpush.msra.mxu0 0.0
      %463 = vmatpush.msra.mxu0 0.0
      %464 = vmatpush.msra.mxu0 0.0
      %465 = vmatpush.msra.mxu0 0.0
      %466 = vmatpush.msra.mxu0 0.0
      %467 = vmatpush.msra.mxu0 %v378
      %468 = vmatmul.f32.gmra.mxu0 %v307
      %v469 = vpop.f32.mrf.mxu0
      %v470 = vadd.f32 0.0, %v469
      %471 = vdwg.mxu0
      %472 = vmatpush.msra.mxu0 0.0
      %473 = vmatpush.msra.mxu0 0.0
      %474 = vmatpush.msra.mxu0 0.0
      %475 = vmatpush.msra.mxu0 0.0
      %476 = vmatpush.msra.mxu0 0.0
      %477 = vmatpush.msra.mxu0 0.0
      %478 = vmatpush.msra.mxu0 0.0
      %479 = vmatpush.msra.mxu0 0.0
      %480 = vmatpush.msra.mxu0 0.0
      %481 = vmatpush.msra.mxu0 0.0
      %482 = vmatpush.msra.mxu0 0.0
      %483 = vmatpush.msra.mxu0 0.0
      %484 = vmatpush.msra.mxu0 0.0
      %485 = vmatpush.msra.mxu0 0.0
      %486 = vmatpush.msra.mxu0 0.0
      %487 = vmatpush.msra.mxu0 %v381
      %488 = vmatmul.f32.gmra.mxu0 %v307
      %v489 = vpop.f32.mrf.mxu0
      %v490 = vadd.f32 0.0, %v489
      %491 = vdwg.mxu0
      %492 = vmatpush.msra.mxu0 0.0
      %493 = vmatpush.msra.mxu0 0.0
      %494 = vmatpush.msra.mxu0 0.0
      %495 = vmatpush.msra.mxu0 0.0
      %496 = vmatpush.msra.mxu0 0.0
      %497 = vmatpush.msra.mxu0 0.0
      %498 = vmatpush.msra.mxu0 0.0
      %499 = vmatpush.msra.mxu0 0.0
      %500 = vmatpush.msra.mxu0 0.0
      %501 = vmatpush.msra.mxu0 0.0
      %502 = vmatpush.msra.mxu0 0.0
      %503 = vmatpush.msra.mxu0 0.0
      %504 = vmatpush.msra.mxu0 0.0
      %505 = vmatpush.msra.mxu0 0.0
      %506 = vmatpush.msra.mxu0 0.0
      %507 = vmatpush.msra.mxu0 %v384
      %508 = vmatmul.f32.gmra.mxu0 %v307
      %v509 = vpop.f32.mrf.mxu0
      %v510 = vadd.f32 0.0, %v509
      %511 = vdwg.mxu0
      %512 = vmatpush.msra.mxu0 0.0
      %513 = vmatpush.msra.mxu0 0.0
      %514 = vmatpush.msra.mxu0 0.0
      %515 = vmatpush.msra.mxu0 0.0
      %516 = vmatpush.msra.mxu0 0.0
      %517 = vmatpush.msra.mxu0 0.0
      %518 = vmatpush.msra.mxu0 0.0
      %519 = vmatpush.msra.mxu0 0.0
      %520 = vmatpush.msra.mxu0 0.0
      %521 = vmatpush.msra.mxu0 0.0
      %522 = vmatpush.msra.mxu0 0.0
      %523 = vmatpush.msra.mxu0 0.0
      %524 = vmatpush.msra.mxu0 0.0
      %525 = vmatpush.msra.mxu0 0.0
      %526 = vmatpush.msra.mxu0 0.0
      %527 = vmatpush.msra.mxu0 %v387
      %528 = vmatmul.f32.gmra.mxu0 %v307
      %v529 = vpop.f32.mrf.mxu0
      %v530 = vadd.f32 0.0, %v529
      %531 = vdwg.mxu0
      %532 = vmatpush.msra.mxu0 0.0
      %533 = vmatpush.msra.mxu0 0.0
      %534 = vmatpush.msra.mxu0 0.0
      %535 = vmatpush.msra.mxu0 0.0
      %536 = vmatpush.msra.mxu0 0.0
      %537 = vmatpush.msra.mxu0 0.0
      %538 = vmatpush.msra.mxu0 0.0
      %539 = vmatpush.msra.mxu0 0.0
      %540 = vmatpush.msra.mxu0 0.0
      %541 = vmatpush.msra.mxu0 0.0
      %542 = vmatpush.msra.mxu0 0.0
      %543 = vmatpush.msra.mxu0 0.0
      %544 = vmatpush.msra.mxu0 0.0
      %545 = vmatpush.msra.mxu0 0.0
      %546 = vmatpush.msra.mxu0 0.0
      %547 = vmatpush.msra.mxu0 %v390
      %548 = vmatmul.f32.gmra.mxu0 %v307
      %v549 = vpop.f32.mrf.mxu0
      %v550 = vadd.f32 0.0, %v549
      %551 = vdwg.mxu0
      %v552 = vmax.f32 %v410, 0.0
      %v553 = vmax.f32 %v430, 0.0
      %v554 = vmax.f32 %v450, 0.0
      %v555 = vmax.f32 %v470, 0.0
      %v556 = vmax.f32 %v490, 0.0
      %v557 = vmax.f32 %v510, 0.0
      %v558 = vmax.f32 %v530, 0.0
      %v559 = vmax.f32 %v550, 0.0
      %v568 = vrot.slane %v553, 4
      %v569 = vrot.slane %v555, 4
      %v570 = vrot.slane %v557, 4
      %v571 = vrot.slane %v559, 4
      %vm572 = vcmask 1043456
      %v573 = vsel %vm572, %v552, %v568
      %v574 = vsel %vm572, %v554, %v569
      %v575 = vsel %vm572, %v556, %v570
      %v576 = vsel %vm572, %v558, %v571
      %581 = vst [vmem:[#allocation2 + $0x4] sm:$0xff] %v573
      %582 = vst [vmem:[#allocation2 + $0xc] sm:$0xff] %v574
      %583 = vst [vmem:[#allocation2 + $0x14] sm:$0xff] %v575
      %584 = vst [vmem:[#allocation2 + $0x1c] sm:$0xff] %v576
      %v585 = vld [vmem:[#allocation2] sm:$0xff]
      %v586 = vld [vmem:[#allocation2 + $0x8] sm:$0xff]
      %v587 = vld [vmem:[#allocation2 + $0x10] sm:$0xff]
      %v588 = vld [vmem:[#allocation2 + $0x18] sm:$0xff]
      %v589 = vld [vmem:[#allocation2 + $0x20] sm:$0xf]
      %595 = vst [vmem:[#allocation1] ss:$2 sm:$0xff] %v585
      %s596 = scalar_lea.vmem [#allocation1], 16
      %597 = vst [vmem:[%s596] ss:$2 sm:$0xff] %v586
      %s598 = scalar_lea.vmem [#allocation1], 32
      %599 = vst [vmem:[%s598] ss:$2 sm:$0xff] %v587
      %s600 = scalar_lea.vmem [#allocation1], 48
      %601 = vst [vmem:[%s600] ss:$2 sm:$0xff] %v588
      %v602 = vld.sshfl [vmem:[#allocation1] sm:$0xff pattern:$0x75316420]
      %v603 = vld.sshfl [vmem:[#allocation1 + $0x8] sm:$0xff pattern:$0x75316420]
      %v604 = vld.sshfl [vmem:[#allocation1 + $0x10] sm:$0xff pattern:$0x75316420]
      %v605 = vld.sshfl [vmem:[#allocation1 + $0x18] sm:$0xff pattern:$0x75316420]
      %v606 = vld.sshfl [vmem:[#allocation1 + $0x20] sm:$0xff pattern:$0x75316420]
      %v607 = vld.sshfl [vmem:[#allocation1 + $0x28] sm:$0xff pattern:$0x75316420]
      %v608 = vld.sshfl [vmem:[#allocation1 + $0x30] sm:$0xff pattern:$0x75316420]
      %v609 = vld.sshfl [vmem:[#allocation1 + $0x38] sm:$0xff pattern:$0x75316420]
      %610 = vst [vmem:[#allocation1] ss:$2 sm:$0xff] %v589
      %v611 = vld.sshfl [vmem:[#allocation1] sm:$0xff pattern:$0x75316420]
      %612 = vrot.lane.b32.xlu0 %v602, 111
      %v613 = vpop.permute.xlu0 %612
      %614 = vrot.lane.b32.xlu0 %v603, 111
      %v615 = vpop.permute.xlu0 %614
      %616 = vrot.lane.b32.xlu0 %v604, 111
      %v617 = vpop.permute.xlu0 %616
      %618 = vrot.lane.b32.xlu0 %v605, 111
      %v619 = vpop.permute.xlu0 %618
      %620 = vrot.lane.b32.xlu0 %v606, 111
      %v621 = vpop.permute.xlu0 %620
      %622 = vrot.lane.b32.xlu0 %v607, 111
      %v623 = vpop.permute.xlu0 %622
      %624 = vrot.lane.b32.xlu0 %v608, 111
      %v625 = vpop.permute.xlu0 %624
      %626 = vrot.lane.b32.xlu0 %v609, 111
      %v627 = vpop.permute.xlu0 %626
      %628 = vrot.lane.b32.xlu0 %v611, 111
      %v629 = vpop.permute.xlu0 %628
      %vm630 = vcmask 908288
      %v631 = vsel %vm630, %v613, %v615
      %v632 = vsel %vm630, %v615, %v617
      %v633 = vsel %vm630, %v617, %v619
      %v634 = vsel %vm630, %v619, %v621
      %v635 = vsel %vm630, %v621, %v623
      %v636 = vsel %vm630, %v623, %v625
      %v637 = vsel %vm630, %v625, %v627
      %v638 = vsel %vm630, %v627, %v629
      %647 = vst [vmem:[#allocation3] sm:$0xf] %v631
      %648 = vst [vmem:[#allocation3 + $0x8] sm:$0xf] %v632
      %649 = vst [vmem:[#allocation3 + $0x10] sm:$0xf] %v633
      %650 = vst [vmem:[#allocation3 + $0x18] sm:$0xf] %v634
      %651 = vst [vmem:[#allocation3 + $0x20] sm:$0xf] %v635
      %652 = vst [vmem:[#allocation3 + $0x28] sm:$0xf] %v636
      %653 = vst [vmem:[#allocation3 + $0x30] sm:$0xf] %v637
      %654 = vst [vmem:[#allocation3 + $0x38] sm:$0xf] %v638
      %v655 = vld [vmem:[#allocation2] sm:$0xff]
      %v656 = vld [vmem:[#allocation2 + $0x8] sm:$0xff]
      %v657 = vld [vmem:[#allocation2 + $0x10] sm:$0xff]
      %v658 = vld [vmem:[#allocation2 + $0x18] sm:$0xff]
      %v659 = vld [vmem:[#allocation2 + $0x20] sm:$0xf]
      %s665 = scalar_lea.vmem [#allocation1], 1
      %666 = vst [vmem:[%s665] ss:$2 sm:$0xff] %v655
      %s667 = scalar_lea.vmem [#allocation1], 17
      %668 = vst [vmem:[%s667] ss:$2 sm:$0xff] %v656
      %s669 = scalar_lea.vmem [#allocation1], 33
      %670 = vst [vmem:[%s669] ss:$2 sm:$0xff] %v657
      %s671 = scalar_lea.vmem [#allocation1], 49
      %672 = vst [vmem:[%s671] ss:$2 sm:$0xff] %v658
      %v673 = vld.sshfl [vmem:[#allocation1] sm:$0xff pattern:$0x75316420]
      %v674 = vld.sshfl [vmem:[#allocation1 + $0x8] sm:$0xff pattern:$0x75316420]
      %v675 = vld.sshfl [vmem:[#allocation1 + $0x10] sm:$0xff pattern:$0x75316420]
      %v676 = vld.sshfl [vmem:[#allocation1 + $0x18] sm:$0xff pattern:$0x75316420]
      %v677 = vld.sshfl [vmem:[#allocation1 + $0x20] sm:$0xff pattern:$0x75316420]
      %v678 = vld.sshfl [vmem:[#allocation1 + $0x28] sm:$0xff pattern:$0x75316420]
      %v679 = vld.sshfl [vmem:[#allocation1 + $0x30] sm:$0xff pattern:$0x75316420]
      %v680 = vld.sshfl [vmem:[#allocation1 + $0x38] sm:$0xff pattern:$0x75316420]
      %681 = vst [vmem:[%s665] ss:$2 sm:$0xff] %v659
      %v682 = vld.sshfl [vmem:[#allocation1] sm:$0xff pattern:$0x75316420]
      %683 = vrot.lane.b32.xlu0 %v673, 110
      %v684 = vpop.permute.xlu0 %683
      %685 = vrot.lane.b32.xlu0 %v674, 110
      %v686 = vpop.permute.xlu0 %685
      %687 = vrot.lane.b32.xlu0 %v675, 110
      %v688 = vpop.permute.xlu0 %687
      %689 = vrot.lane.b32.xlu0 %v676, 110
      %v690 = vpop.permute.xlu0 %689
      %691 = vrot.lane.b32.xlu0 %v677, 110
      %v692 = vpop.permute.xlu0 %691
      %693 = vrot.lane.b32.xlu0 %v678, 110
      %v694 = vpop.permute.xlu0 %693
      %695 = vrot.lane.b32.xlu0 %v679, 110
      %v696 = vpop.permute.xlu0 %695
      %697 = vrot.lane.b32.xlu0 %v680, 110
      %v698 = vpop.permute.xlu0 %697
      %699 = vrot.lane.b32.xlu0 %v682, 110
      %v700 = vpop.permute.xlu0 %699
      %vm701 = vcmask 900096
      %v702 = vsel %vm701, %v684, %v686
      %v703 = vsel %vm701, %v686, %v688
      %v704 = vsel %vm701, %v688, %v690
      %v705 = vsel %vm701, %v690, %v692
      %v706 = vsel %vm701, %v692, %v694
      %v707 = vsel %vm701, %v694, %v696
      %v708 = vsel %vm701, %v696, %v698
      %v709 = vsel %vm701, %v698, %v700
      %718 = vst [vmem:[#allocation3] sm:$0xf0] %v702
      %719 = vst [vmem:[#allocation3 + $0x8] sm:$0xf0] %v703
      %720 = vst [vmem:[#allocation3 + $0x10] sm:$0xf0] %v704
      %721 = vst [vmem:[#allocation3 + $0x18] sm:$0xf0] %v705
      %722 = vst [vmem:[#allocation3 + $0x20] sm:$0xf0] %v706
      %723 = vst [vmem:[#allocation3 + $0x28] sm:$0xf0] %v707
      %724 = vst [vmem:[#allocation3 + $0x30] sm:$0xf0] %v708
      %725 = vst [vmem:[#allocation3 + $0x38] sm:$0xf0] %v709
      %v726 = vld [vmem:[#allocation2] sm:$0xff]
      %v727 = vld [vmem:[#allocation2 + $0x8] sm:$0xff]
      %v728 = vld [vmem:[#allocation2 + $0x10] sm:$0xff]
      %v729 = vld [vmem:[#allocation2 + $0x18] sm:$0xff]
      %v730 = vld [vmem:[#allocation2 + $0x20] sm:$0xf]
      %736 = vst [vmem:[#allocation1] ss:$2 sm:$0xff] %v726
      %s737 = scalar_lea.vmem [#allocation1], 16
      %738 = vst [vmem:[%s737] ss:$2 sm:$0xff] %v727
      %s739 = scalar_lea.vmem [#allocation1], 32
      %740 = vst [vmem:[%s739] ss:$2 sm:$0xff] %v728
      %s741 = scalar_lea.vmem [#allocation1], 48
      %742 = vst [vmem:[%s741] ss:$2 sm:$0xff] %v729
      %v743 = vld.sshfl [vmem:[#allocation1] sm:$0xff pattern:$0x75316420]
      %v744 = vld.sshfl [vmem:[#allocation1 + $0x8] sm:$0xff pattern:$0x75316420]
      %v745 = vld.sshfl [vmem:[#allocation1 + $0x10] sm:$0xff pattern:$0x75316420]
      %v746 = vld.sshfl [vmem:[#allocation1 + $0x18] sm:$0xff pattern:$0x75316420]
      %v747 = vld.sshfl [vmem:[#allocation1 + $0x20] sm:$0xff pattern:$0x75316420]
      %v748 = vld.sshfl [vmem:[#allocation1 + $0x28] sm:$0xff pattern:$0x75316420]
      %v749 = vld.sshfl [vmem:[#allocation1 + $0x30] sm:$0xff pattern:$0x75316420]
      %v750 = vld.sshfl [vmem:[#allocation1 + $0x38] sm:$0xff pattern:$0x75316420]
      %751 = vst [vmem:[#allocation1] ss:$2 sm:$0xff] %v730
      %v752 = vld.sshfl [vmem:[#allocation1] sm:$0xff pattern:$0x75316420]
      %753 = vrot.lane.b32.xlu0 %v743, 109
      %v754 = vpop.permute.xlu0 %753
      %755 = vrot.lane.b32.xlu0 %v744, 109
      %v756 = vpop.permute.xlu0 %755
      %757 = vrot.lane.b32.xlu0 %v745, 109
      %v758 = vpop.permute.xlu0 %757
      %759 = vrot.lane.b32.xlu0 %v746, 109
      %v760 = vpop.permute.xlu0 %759
      %761 = vrot.lane.b32.xlu0 %v747, 109
      %v762 = vpop.permute.xlu0 %761
      %763 = vrot.lane.b32.xlu0 %v748, 109
      %v764 = vpop.permute.xlu0 %763
      %765 = vrot.lane.b32.xlu0 %v749, 109
      %v766 = vpop.permute.xlu0 %765
      %767 = vrot.lane.b32.xlu0 %v750, 109
      %v768 = vpop.permute.xlu0 %767
      %769 = vrot.lane.b32.xlu0 %v752, 109
      %v770 = vpop.permute.xlu0 %769
      %vm771 = vcmask 891904
      %v772 = vsel %vm771, %v754, %v756
      %v773 = vsel %vm771, %v756, %v758
      %v774 = vsel %vm771, %v758, %v760
      %v775 = vsel %vm771, %v760, %v762
      %v776 = vsel %vm771, %v762, %v764
      %v777 = vsel %vm771, %v764, %v766
      %v778 = vsel %vm771, %v766, %v768
      %v779 = vsel %vm771, %v768, %v770
      %788 = vst [vmem:[#allocation3 + $0x40] sm:$0xf] %v772
      %789 = vst [vmem:[#allocation3 + $0x48] sm:$0xf] %v773
      %790 = vst [vmem:[#allocation3 + $0x50] sm:$0xf] %v774
      %791 = vst [vmem:[#allocation3 + $0x58] sm:$0xf] %v775
      %792 = vst [vmem:[#allocation3 + $0x60] sm:$0xf] %v776
      %793 = vst [vmem:[#allocation3 + $0x68] sm:$0xf] %v777
      %794 = vst [vmem:[#allocation3 + $0x70] sm:$0xf] %v778
      %795 = vst [vmem:[#allocation3 + $0x78] sm:$0xf] %v779
      %v796 = vld [vmem:[#allocation2] sm:$0xff]
      %v797 = vld [vmem:[#allocation2 + $0x8] sm:$0xff]
      %v798 = vld [vmem:[#allocation2 + $0x10] sm:$0xff]
      %v799 = vld [vmem:[#allocation2 + $0x18] sm:$0xff]
      %v800 = vld [vmem:[#allocation2 + $0x20] sm:$0xf]
      %s806 = scalar_lea.vmem [#allocation1], 1
      %807 = vst [vmem:[%s806] ss:$2 sm:$0xff] %v796
      %s808 = scalar_lea.vmem [#allocation1], 17
      %809 = vst [vmem:[%s808] ss:$2 sm:$0xff] %v797
      %s810 = scalar_lea.vmem [#allocation1], 33
      %811 = vst [vmem:[%s810] ss:$2 sm:$0xff] %v798
      %s812 = scalar_lea.vmem [#allocation1], 49
      %813 = vst [vmem:[%s812] ss:$2 sm:$0xff] %v799
      %v814 = vld.sshfl [vmem:[#allocation1] sm:$0xff pattern:$0x75316420]
      %v815 = vld.sshfl [vmem:[#allocation1 + $0x8] sm:$0xff pattern:$0x75316420]
      %v816 = vld.sshfl [vmem:[#allocation1 + $0x10] sm:$0xff pattern:$0x75316420]
      %v817 = vld.sshfl [vmem:[#allocation1 + $0x18] sm:$0xff pattern:$0x75316420]
      %v818 = vld.sshfl [vmem:[#allocation1 + $0x20] sm:$0xff pattern:$0x75316420]
      %v819 = vld.sshfl [vmem:[#allocation1 + $0x28] sm:$0xff pattern:$0x75316420]
      %v820 = vld.sshfl [vmem:[#allocation1 + $0x30] sm:$0xff pattern:$0x75316420]
      %v821 = vld.sshfl [vmem:[#allocation1 + $0x38] sm:$0xff pattern:$0x75316420]
      %822 = vst [vmem:[%s806] ss:$2 sm:$0xff] %v800
      %v823 = vld.sshfl [vmem:[#allocation1] sm:$0xff pattern:$0x75316420]
      %824 = vrot.lane.b32.xlu0 %v814, 101
      %v825 = vpop.permute.xlu0 %824
      %826 = vrot.lane.b32.xlu0 %v815, 101
      %v827 = vpop.permute.xlu0 %826
      %828 = vrot.lane.b32.xlu0 %v816, 101
      %v829 = vpop.permute.xlu0 %828
      %830 = vrot.lane.b32.xlu0 %v817, 101
      %v831 = vpop.permute.xlu0 %830
      %832 = vrot.lane.b32.xlu0 %v818, 101
      %v833 = vpop.permute.xlu0 %832
      %834 = vrot.lane.b32.xlu0 %v819, 101
      %v835 = vpop.permute.xlu0 %834
      %836 = vrot.lane.b32.xlu0 %v820, 101
      %v837 = vpop.permute.xlu0 %836
      %838 = vrot.lane.b32.xlu0 %v821, 101
      %v839 = vpop.permute.xlu0 %838
      %840 = vrot.lane.b32.xlu0 %v823, 101
      %v841 = vpop.permute.xlu0 %840
      %vm842 = vcmask 826368
      %v843 = vsel %vm842, %v825, %v827
      %v844 = vsel %vm842, %v827, %v829
      %v845 = vsel %vm842, %v829, %v831
      %v846 = vsel %vm842, %v831, %v833
      %v847 = vsel %vm842, %v833, %v835
      %v848 = vsel %vm842, %v835, %v837
      %v849 = vsel %vm842, %v837, %v839
      %v850 = vsel %vm842, %v839, %v841
      %859 = vst [vmem:[#allocation3 + $0x40] sm:$0xf0] %v843
      %860 = vst [vmem:[#allocation3 + $0x48] sm:$0xf0] %v844
      %861 = vst [vmem:[#allocation3 + $0x50] sm:$0xf0] %v845
      %862 = vst [vmem:[#allocation3 + $0x58] sm:$0xf0] %v846
      %863 = vst [vmem:[#allocation3 + $0x60] sm:$0xf0] %v847
      %864 = vst [vmem:[#allocation3 + $0x68] sm:$0xf0] %v848
      %865 = vst [vmem:[#allocation3 + $0x70] sm:$0xf0] %v849
      %866 = vst [vmem:[#allocation3 + $0x78] sm:$0xf0] %v850
      %v867 = vld [vmem:[#allocation2] sm:$0xff]
      %v868 = vld [vmem:[#allocation2 + $0x8] sm:$0xff]
      %v869 = vld [vmem:[#allocation2 + $0x10] sm:$0xff]
      %v870 = vld [vmem:[#allocation2 + $0x18] sm:$0xff]
      %v871 = vld [vmem:[#allocation2 + $0x20] sm:$0xf]
      %877 = vst [vmem:[#allocation1] ss:$2 sm:$0xff] %v867
      %s878 = scalar_lea.vmem [#allocation1], 16
      %879 = vst [vmem:[%s878] ss:$2 sm:$0xff] %v868
      %s880 = scalar_lea.vmem [#allocation1], 32
      %881 = vst [vmem:[%s880] ss:$2 sm:$0xff] %v869
      %s882 = scalar_lea.vmem [#allocation1], 48
      %883 = vst [vmem:[%s882] ss:$2 sm:$0xff] %v870
      %v884 = vld.sshfl [vmem:[#allocation1] sm:$0xff pattern:$0x75316420]
      %v885 = vld.sshfl [vmem:[#allocation1 + $0x8] sm:$0xff pattern:$0x75316420]
      %v886 = vld.sshfl [vmem:[#allocation1 + $0x10] sm:$0xff pattern:$0x75316420]
      %v887 = vld.sshfl [vmem:[#allocation1 + $0x18] sm:$0xff pattern:$0x75316420]
      %v888 = vld.sshfl [vmem:[#allocation1 + $0x20] sm:$0xff pattern:$0x75316420]
      %v889 = vld.sshfl [vmem:[#allocation1 + $0x28] sm:$0xff pattern:$0x75316420]
      %v890 = vld.sshfl [vmem:[#allocation1 + $0x30] sm:$0xff pattern:$0x75316420]
      %v891 = vld.sshfl [vmem:[#allocation1 + $0x38] sm:$0xff pattern:$0x75316420]
      %892 = vst [vmem:[#allocation1] ss:$2 sm:$0xff] %v871
      %v893 = vld.sshfl [vmem:[#allocation1] sm:$0xff pattern:$0x75316420]
      %894 = vrot.lane.b32.xlu0 %v884, 100
      %v895 = vpop.permute.xlu0 %894
      %896 = vrot.lane.b32.xlu0 %v885, 100
      %v897 = vpop.permute.xlu0 %896
      %898 = vrot.lane.b32.xlu0 %v886, 100
      %v899 = vpop.permute.xlu0 %898
      %900 = vrot.lane.b32.xlu0 %v887, 100
      %v901 = vpop.permute.xlu0 %900
      %902 = vrot.lane.b32.xlu0 %v888, 100
      %v903 = vpop.permute.xlu0 %902
      %904 = vrot.lane.b32.xlu0 %v889, 100
      %v905 = vpop.permute.xlu0 %904
      %906 = vrot.lane.b32.xlu0 %v890, 100
      %v907 = vpop.permute.xlu0 %906
      %908 = vrot.lane.b32.xlu0 %v891, 100
      %v909 = vpop.permute.xlu0 %908
      %910 = vrot.lane.b32.xlu0 %v893, 100
      %v911 = vpop.permute.xlu0 %910
      %vm912 = vcmask 818176
      %v913 = vsel %vm912, %v895, %v897
      %v914 = vsel %vm912, %v897, %v899
      %v915 = vsel %vm912, %v899, %v901
      %v916 = vsel %vm912, %v901, %v903
      %v917 = vsel %vm912, %v903, %v905
      %v918 = vsel %vm912, %v905, %v907
      %v919 = vsel %vm912, %v907, %v909
      %v920 = vsel %vm912, %v909, %v911
      %929 = vst [vmem:[#allocation3 + $0x80] sm:$0xf] %v913
      %930 = vst [vmem:[#allocation3 + $0x88] sm:$0xf] %v914
      %931 = vst [vmem:[#allocation3 + $0x90] sm:$0xf] %v915
      %932 = vst [vmem:[#allocation3 + $0x98] sm:$0xf] %v916
      %933 = vst [vmem:[#allocation3 + $0xa0] sm:$0xf] %v917
      %934 = vst [vmem:[#allocation3 + $0xa8] sm:$0xf] %v918
      %935 = vst [vmem:[#allocation3 + $0xb0] sm:$0xf] %v919
      %936 = vst [vmem:[#allocation3 + $0xb8] sm:$0xf] %v920
      %v937 = vld [vmem:[#allocation2] sm:$0xff]
      %v938 = vld [vmem:[#allocation2 + $0x8] sm:$0xff]
      %v939 = vld [vmem:[#allocation2 + $0x10] sm:$0xff]
      %v940 = vld [vmem:[#allocation2 + $0x18] sm:$0xff]
      %v941 = vld [vmem:[#allocation2 + $0x20] sm:$0xf]
      %s947 = scalar_lea.vmem [#allocation1], 1
      %948 = vst [vmem:[%s947] ss:$2 sm:$0xff] %v937
      %s949 = scalar_lea.vmem [#allocation1], 17
      %950 = vst [vmem:[%s949] ss:$2 sm:$0xff] %v938
      %s951 = scalar_lea.vmem [#allocation1], 33
      %952 = vst [vmem:[%s951] ss:$2 sm:$0xff] %v939
      %s953 = scalar_lea.vmem [#allocation1], 49
      %954 = vst [vmem:[%s953] ss:$2 sm:$0xff] %v940
      %v955 = vld.sshfl [vmem:[#allocation1] sm:$0xff pattern:$0x75316420]
      %v956 = vld.sshfl [vmem:[#allocation1 + $0x8] sm:$0xff pattern:$0x75316420]
      %v957 = vld.sshfl [vmem:[#allocation1 + $0x10] sm:$0xff pattern:$0x75316420]
      %v958 = vld.sshfl [vmem:[#allocation1 + $0x18] sm:$0xff pattern:$0x75316420]
      %v959 = vld.sshfl [vmem:[#allocation1 + $0x20] sm:$0xff pattern:$0x75316420]
      %v960 = vld.sshfl [vmem:[#allocation1 + $0x28] sm:$0xff pattern:$0x75316420]
      %v961 = vld.sshfl [vmem:[#allocation1 + $0x30] sm:$0xff pattern:$0x75316420]
      %v962 = vld.sshfl [vmem:[#allocation1 + $0x38] sm:$0xff pattern:$0x75316420]
      %963 = vst [vmem:[%s947] ss:$2 sm:$0xff] %v941
      %v964 = vld.sshfl [vmem:[#allocation1] sm:$0xff pattern:$0x75316420]
      %965 = vrot.lane.b32.xlu0 %v955, 99
      %v966 = vpop.permute.xlu0 %965
      %967 = vrot.lane.b32.xlu0 %v956, 99
      %v968 = vpop.permute.xlu0 %967
      %969 = vrot.lane.b32.xlu0 %v957, 99
      %v970 = vpop.permute.xlu0 %969
      %971 = vrot.lane.b32.xlu0 %v958, 99
      %v972 = vpop.permute.xlu0 %971
      %973 = vrot.lane.b32.xlu0 %v959, 99
      %v974 = vpop.permute.xlu0 %973
      %975 = vrot.lane.b32.xlu0 %v960, 99
      %v976 = vpop.permute.xlu0 %975
      %977 = vrot.lane.b32.xlu0 %v961, 99
      %v978 = vpop.permute.xlu0 %977
      %979 = vrot.lane.b32.xlu0 %v962, 99
      %v980 = vpop.permute.xlu0 %979
      %981 = vrot.lane.b32.xlu0 %v964, 99
      %v982 = vpop.permute.xlu0 %981
      %vm983 = vcmask 809984
      %v984 = vsel %vm983, %v966, %v968
      %v985 = vsel %vm983, %v968, %v970
      %v986 = vsel %vm983, %v970, %v972
      %v987 = vsel %vm983, %v972, %v974
      %v988 = vsel %vm983, %v974, %v976
      %v989 = vsel %vm983, %v976, %v978
      %v990 = vsel %vm983, %v978, %v980
      %v991 = vsel %vm983, %v980, %v982
      %1000 = vst [vmem:[#allocation3 + $0x80] sm:$0xf0] %v984
      %1001 = vst [vmem:[#allocation3 + $0x88] sm:$0xf0] %v985
      %1002 = vst [vmem:[#allocation3 + $0x90] sm:$0xf0] %v986
      %1003 = vst [vmem:[#allocation3 + $0x98] sm:$0xf0] %v987
      %1004 = vst [vmem:[#allocation3 + $0xa0] sm:$0xf0] %v988
      %1005 = vst [vmem:[#allocation3 + $0xa8] sm:$0xf0] %v989
      %1006 = vst [vmem:[#allocation3 + $0xb0] sm:$0xf0] %v990
      %1007 = vst [vmem:[#allocation3 + $0xb8] sm:$0xf0] %v991
      %v1008 = vld [vmem:[#allocation2] sm:$0xff]
      %v1009 = vld [vmem:[#allocation2 + $0x8] sm:$0xff]
      %v1010 = vld [vmem:[#allocation2 + $0x10] sm:$0xff]
      %v1011 = vld [vmem:[#allocation2 + $0x18] sm:$0xff]
      %v1012 = vld [vmem:[#allocation2 + $0x20] sm:$0xf]
      %1018 = vst [vmem:[#allocation1] ss:$2 sm:$0xff] %v1008
      %s1019 = scalar_lea.vmem [#allocation1], 16
      %1020 = vst [vmem:[%s1019] ss:$2 sm:$0xff] %v1009
      %s1021 = scalar_lea.vmem [#allocation1], 32
      %1022 = vst [vmem:[%s1021] ss:$2 sm:$0xff] %v1010
      %s1023 = scalar_lea.vmem [#allocation1], 48
      %1024 = vst [vmem:[%s1023] ss:$2 sm:$0xff] %v1011
      %v1025 = vld.sshfl [vmem:[#allocation1] sm:$0xff pattern:$0x75316420]
      %v1026 = vld.sshfl [vmem:[#allocation1 + $0x8] sm:$0xff pattern:$0x75316420]
      %v1027 = vld.sshfl [vmem:[#allocation1 + $0x10] sm:$0xff pattern:$0x75316420]
      %v1028 = vld.sshfl [vmem:[#allocation1 + $0x18] sm:$0xff pattern:$0x75316420]
      %v1029 = vld.sshfl [vmem:[#allocation1 + $0x20] sm:$0xff pattern:$0x75316420]
      %v1030 = vld.sshfl [vmem:[#allocation1 + $0x28] sm:$0xff pattern:$0x75316420]
      %v1031 = vld.sshfl [vmem:[#allocation1 + $0x30] sm:$0xff pattern:$0x75316420]
      %v1032 = vld.sshfl [vmem:[#allocation1 + $0x38] sm:$0xff pattern:$0x75316420]
      %1033 = vst [vmem:[#allocation1] ss:$2 sm:$0xff] %v1012
      %v1034 = vld.sshfl [vmem:[#allocation1] sm:$0xff pattern:$0x75316420]
      %1035 = vrot.lane.b32.xlu0 %v1025, 91
      %v1036 = vpop.permute.xlu0 %1035
      %1037 = vrot.lane.b32.xlu0 %v1026, 91
      %v1038 = vpop.permute.xlu0 %1037
      %1039 = vrot.lane.b32.xlu0 %v1027, 91
      %v1040 = vpop.permute.xlu0 %1039
      %1041 = vrot.lane.b32.xlu0 %v1028, 91
      %v1042 = vpop.permute.xlu0 %1041
      %1043 = vrot.lane.b32.xlu0 %v1029, 91
      %v1044 = vpop.permute.xlu0 %1043
      %1045 = vrot.lane.b32.xlu0 %v1030, 91
      %v1046 = vpop.permute.xlu0 %1045
      %1047 = vrot.lane.b32.xlu0 %v1031, 91
      %v1048 = vpop.permute.xlu0 %1047
      %1049 = vrot.lane.b32.xlu0 %v1032, 91
      %v1050 = vpop.permute.xlu0 %1049
      %1051 = vrot.lane.b32.xlu0 %v1034, 91
      %v1052 = vpop.permute.xlu0 %1051
      %vm1053 = vcmask 744448
      %v1054 = vsel %vm1053, %v1036, %v1038
      %v1055 = vsel %vm1053, %v1038, %v1040
      %v1056 = vsel %vm1053, %v1040, %v1042
      %v1057 = vsel %vm1053, %v1042, %v1044
      %v1058 = vsel %vm1053, %v1044, %v1046
      %v1059 = vsel %vm1053, %v1046, %v1048
      %v1060 = vsel %vm1053, %v1048, %v1050
      %v1061 = vsel %vm1053, %v1050, %v1052
      %1070 = vst [vmem:[#allocation3 + $0xc0] sm:$0xf] %v1054
      %1071 = vst [vmem:[#allocation3 + $0xc8] sm:$0xf] %v1055
      %1072 = vst [vmem:[#allocation3 + $0xd0] sm:$0xf] %v1056
      %1073 = vst [vmem:[#allocation3 + $0xd8] sm:$0xf] %v1057
      %1074 = vst [vmem:[#allocation3 + $0xe0] sm:$0xf] %v1058
      %1075 = vst [vmem:[#allocation3 + $0xe8] sm:$0xf] %v1059
      %1076 = vst [vmem:[#allocation3 + $0xf0] sm:$0xf] %v1060
      %1077 = vst [vmem:[#allocation3 + $0xf8] sm:$0xf] %v1061
      %v1078 = vld [vmem:[#allocation2] sm:$0xff]
      %v1079 = vld [vmem:[#allocation2 + $0x8] sm:$0xff]
      %v1080 = vld [vmem:[#allocation2 + $0x10] sm:$0xff]
      %v1081 = vld [vmem:[#allocation2 + $0x18] sm:$0xff]
      %v1082 = vld [vmem:[#allocation2 + $0x20] sm:$0xf]
      %s1088 = scalar_lea.vmem [#allocation1], 1
      %1089 = vst [vmem:[%s1088] ss:$2 sm:$0xff] %v1078
      %s1090 = scalar_lea.vmem [#allocation1], 17
      %1091 = vst [vmem:[%s1090] ss:$2 sm:$0xff] %v1079
      %s1092 = scalar_lea.vmem [#allocation1], 33
      %1093 = vst [vmem:[%s1092] ss:$2 sm:$0xff] %v1080
      %s1094 = scalar_lea.vmem [#allocation1], 49
      %1095 = vst [vmem:[%s1094] ss:$2 sm:$0xff] %v1081
      %v1096 = vld.sshfl [vmem:[#allocation1] sm:$0xff pattern:$0x75316420]
      %v1097 = vld.sshfl [vmem:[#allocation1 + $0x8] sm:$0xff pattern:$0x75316420]
      %v1098 = vld.sshfl [vmem:[#allocation1 + $0x10] sm:$0xff pattern:$0x75316420]
      %v1099 = vld.sshfl [vmem:[#allocation1 + $0x18] sm:$0xff pattern:$0x75316420]
      %v1100 = vld.sshfl [vmem:[#allocation1 + $0x20] sm:$0xff pattern:$0x75316420]
      %v1101 = vld.sshfl [vmem:[#allocation1 + $0x28] sm:$0xff pattern:$0x75316420]
      %v1102 = vld.sshfl [vmem:[#allocation1 + $0x30] sm:$0xff pattern:$0x75316420]
      %v1103 = vld.sshfl [vmem:[#allocation1 + $0x38] sm:$0xff pattern:$0x75316420]
      %1104 = vst [vmem:[%s1088] ss:$2 sm:$0xff] %v1082
      %v1105 = vld.sshfl [vmem:[#allocation1] sm:$0xff pattern:$0x75316420]
      %1106 = vrot.lane.b32.xlu0 %v1096, 90
      %v1107 = vpop.permute.xlu0 %1106
      %1108 = vrot.lane.b32.xlu0 %v1097, 90
      %v1109 = vpop.permute.xlu0 %1108
      %1110 = vrot.lane.b32.xlu0 %v1098, 90
      %v1111 = vpop.permute.xlu0 %1110
      %1112 = vrot.lane.b32.xlu0 %v1099, 90
      %v1113 = vpop.permute.xlu0 %1112
      %1114 = vrot.lane.b32.xlu0 %v1100, 90
      %v1115 = vpop.permute.xlu0 %1114
      %1116 = vrot.lane.b32.xlu0 %v1101, 90
      %v1117 = vpop.permute.xlu0 %1116
      %1118 = vrot.lane.b32.xlu0 %v1102, 90
      %v1119 = vpop.permute.xlu0 %1118
      %1120 = vrot.lane.b32.xlu0 %v1103, 90
      %v1121 = vpop.permute.xlu0 %1120
      %1122 = vrot.lane.b32.xlu0 %v1105, 90
      %v1123 = vpop.permute.xlu0 %1122
      %vm1124 = vcmask 736256
      %v1125 = vsel %vm1124, %v1107, %v1109
      %v1126 = vsel %vm1124, %v1109, %v1111
      %v1127 = vsel %vm1124, %v1111, %v1113
      %v1128 = vsel %vm1124, %v1113, %v1115
      %v1129 = vsel %vm1124, %v1115, %v1117
      %v1130 = vsel %vm1124, %v1117, %v1119
      %v1131 = vsel %vm1124, %v1119, %v1121
      %v1132 = vsel %vm1124, %v1121, %v1123
      %1141 = vst [vmem:[#allocation3 + $0xc0] sm:$0xf0] %v1125
      %1142 = vst [vmem:[#allocation3 + $0xc8] sm:$0xf0] %v1126
      %1143 = vst [vmem:[#allocation3 + $0xd0] sm:$0xf0] %v1127
      %1144 = vst [vmem:[#allocation3 + $0xd8] sm:$0xf0] %v1128
      %1145 = vst [vmem:[#allocation3 + $0xe0] sm:$0xf0] %v1129
      %1146 = vst [vmem:[#allocation3 + $0xe8] sm:$0xf0] %v1130
      %1147 = vst [vmem:[#allocation3 + $0xf0] sm:$0xf0] %v1131
      %1148 = vst [vmem:[#allocation3 + $0xf8] sm:$0xf0] %v1132
      %v1149 = vld [vmem:[#allocation2] sm:$0xff]
      %v1150 = vld [vmem:[#allocation2 + $0x8] sm:$0xff]
      %v1151 = vld [vmem:[#allocation2 + $0x10] sm:$0xff]
      %v1152 = vld [vmem:[#allocation2 + $0x18] sm:$0xff]
      %v1153 = vld [vmem:[#allocation2 + $0x20] sm:$0xf]
      %1159 = vst [vmem:[#allocation1] ss:$2 sm:$0xff] %v1149
      %s1160 = scalar_lea.vmem [#allocation1], 16
      %1161 = vst [vmem:[%s1160] ss:$2 sm:$0xff] %v1150
      %s1162 = scalar_lea.vmem [#allocation1], 32
      %1163 = vst [vmem:[%s1162] ss:$2 sm:$0xff] %v1151
      %s1164 = scalar_lea.vmem [#allocation1], 48
      %1165 = vst [vmem:[%s1164] ss:$2 sm:$0xff] %v1152
      %v1166 = vld.sshfl [vmem:[#allocation1] sm:$0xff pattern:$0x75316420]
      %v1167 = vld.sshfl [vmem:[#allocation1 + $0x8] sm:$0xff pattern:$0x75316420]
      %v1168 = vld.sshfl [vmem:[#allocation1 + $0x10] sm:$0xff pattern:$0x75316420]
      %v1169 = vld.sshfl [vmem:[#allocation1 + $0x18] sm:$0xff pattern:$0x75316420]
      %v1170 = vld.sshfl [vmem:[#allocation1 + $0x20] sm:$0xff pattern:$0x75316420]
      %v1171 = vld.sshfl [vmem:[#allocation1 + $0x28] sm:$0xff pattern:$0x75316420]
      %v1172 = vld.sshfl [vmem:[#allocation1 + $0x30] sm:$0xff pattern:$0x75316420]
      %v1173 = vld.sshfl [vmem:[#allocation1 + $0x38] sm:$0xff pattern:$0x75316420]
      %1174 = vst [vmem:[#allocation1] ss:$2 sm:$0xff] %v1153
      %v1175 = vld.sshfl [vmem:[#allocation1] sm:$0xff pattern:$0x75316420]
      %1176 = vrot.lane.b32.xlu0 %v1166, 89
      %v1177 = vpop.permute.xlu0 %1176
      %1178 = vrot.lane.b32.xlu0 %v1167, 89
      %v1179 = vpop.permute.xlu0 %1178
      %1180 = vrot.lane.b32.xlu0 %v1168, 89
      %v1181 = vpop.permute.xlu0 %1180
      %1182 = vrot.lane.b32.xlu0 %v1169, 89
      %v1183 = vpop.permute.xlu0 %1182
      %1184 = vrot.lane.b32.xlu0 %v1170, 89
      %v1185 = vpop.permute.xlu0 %1184
      %1186 = vrot.lane.b32.xlu0 %v1171, 89
      %v1187 = vpop.permute.xlu0 %1186
      %1188 = vrot.lane.b32.xlu0 %v1172, 89
      %v1189 = vpop.permute.xlu0 %1188
      %1190 = vrot.lane.b32.xlu0 %v1173, 89
      %v1191 = vpop.permute.xlu0 %1190
      %1192 = vrot.lane.b32.xlu0 %v1175, 89
      %v1193 = vpop.permute.xlu0 %1192
      %vm1194 = vcmask 728064
      %v1195 = vsel %vm1194, %v1177, %v1179
      %v1196 = vsel %vm1194, %v1179, %v1181
      %v1197 = vsel %vm1194, %v1181, %v1183
      %v1198 = vsel %vm1194, %v1183, %v1185
      %v1199 = vsel %vm1194, %v1185, %v1187
      %v1200 = vsel %vm1194, %v1187, %v1189
      %v1201 = vsel %vm1194, %v1189, %v1191
      %v1202 = vsel %vm1194, %v1191, %v1193
      %1211 = vst [vmem:[#allocation3 + $0x100] sm:$0xf] %v1195
      %1212 = vst [vmem:[#allocation3 + $0x108] sm:$0xf] %v1196
      %1213 = vst [vmem:[#allocation3 + $0x110] sm:$0xf] %v1197
      %1214 = vst [vmem:[#allocation3 + $0x118] sm:$0xf] %v1198
      %1215 = vst [vmem:[#allocation3 + $0x120] sm:$0xf] %v1199
      %1216 = vst [vmem:[#allocation3 + $0x128] sm:$0xf] %v1200
      %1217 = vst [vmem:[#allocation3 + $0x130] sm:$0xf] %v1201
      %1218 = vst [vmem:[#allocation3 + $0x138] sm:$0xf] %v1202
      %v1219 = vld [vmem:[#allocation2] sm:$0xff]
      %v1220 = vld [vmem:[#allocation2 + $0x8] sm:$0xff]
      %v1221 = vld [vmem:[#allocation2 + $0x10] sm:$0xff]
      %v1222 = vld [vmem:[#allocation2 + $0x18] sm:$0xff]
      %v1223 = vld [vmem:[#allocation2 + $0x20] sm:$0xf]
      %s1229 = scalar_lea.vmem [#allocation1], 1
      %1230 = vst [vmem:[%s1229] ss:$2 sm:$0xff] %v1219
      %s1231 = scalar_lea.vmem [#allocation1], 17
      %1232 = vst [vmem:[%s1231] ss:$2 sm:$0xff] %v1220
      %s1233 = scalar_lea.vmem [#allocation1], 33
      %1234 = vst [vmem:[%s1233] ss:$2 sm:$0xff] %v1221
      %s1235 = scalar_lea.vmem [#allocation1], 49
      %1236 = vst [vmem:[%s1235] ss:$2 sm:$0xff] %v1222
      %v1237 = vld.sshfl [vmem:[#allocation1] sm:$0xff pattern:$0x75316420]
      %v1238 = vld.sshfl [vmem:[#allocation1 + $0x8] sm:$0xff pattern:$0x75316420]
      %v1239 = vld.sshfl [vmem:[#allocation1 + $0x10] sm:$0xff pattern:$0x75316420]
      %v1240 = vld.sshfl [vmem:[#allocation1 + $0x18] sm:$0xff pattern:$0x75316420]
      %v1241 = vld.sshfl [vmem:[#allocation1 + $0x20] sm:$0xff pattern:$0x75316420]
      %v1242 = vld.sshfl [vmem:[#allocation1 + $0x28] sm:$0xff pattern:$0x75316420]
      %v1243 = vld.sshfl [vmem:[#allocation1 + $0x30] sm:$0xff pattern:$0x75316420]
      %v1244 = vld.sshfl [vmem:[#allocation1 + $0x38] sm:$0xff pattern:$0x75316420]
      %1245 = vst [vmem:[%s1229] ss:$2 sm:$0xff] %v1223
      %v1246 = vld.sshfl [vmem:[#allocation1] sm:$0xff pattern:$0x75316420]
      %1247 = vrot.lane.b32.xlu0 %v1237, 11
      %v1248 = vpop.permute.xlu0 %1247
      %1249 = vrot.lane.b32.xlu0 %v1238, 11
      %v1250 = vpop.permute.xlu0 %1249
      %1251 = vrot.lane.b32.xlu0 %v1239, 11
      %v1252 = vpop.permute.xlu0 %1251
      %1253 = vrot.lane.b32.xlu0 %v1240, 11
      %v1254 = vpop.permute.xlu0 %1253
      %1255 = vrot.lane.b32.xlu0 %v1241, 11
      %v1256 = vpop.permute.xlu0 %1255
      %1257 = vrot.lane.b32.xlu0 %v1242, 11
      %v1258 = vpop.permute.xlu0 %1257
      %1259 = vrot.lane.b32.xlu0 %v1243, 11
      %v1260 = vpop.permute.xlu0 %1259
      %1261 = vrot.lane.b32.xlu0 %v1244, 11
      %v1262 = vpop.permute.xlu0 %1261
      %1263 = vrot.lane.b32.xlu0 %v1246, 11
      %v1264 = vpop.permute.xlu0 %1263
      %vm1265 = vcmask 89088
      %v1266 = vsel %vm1265, %v1248, %v1250
      %v1267 = vsel %vm1265, %v1250, %v1252
      %v1268 = vsel %vm1265, %v1252, %v1254
      %v1269 = vsel %vm1265, %v1254, %v1256
      %v1270 = vsel %vm1265, %v1256, %v1258
      %v1271 = vsel %vm1265, %v1258, %v1260
      %v1272 = vsel %vm1265, %v1260, %v1262
      %v1273 = vsel %vm1265, %v1262, %v1264
      %1282 = vst [vmem:[#allocation3 + $0x100] sm:$0xf0] %v1266
      %1283 = vst [vmem:[#allocation3 + $0x108] sm:$0xf0] %v1267
      %1284 = vst [vmem:[#allocation3 + $0x110] sm:$0xf0] %v1268
      %1285 = vst [vmem:[#allocation3 + $0x118] sm:$0xf0] %v1269
      %1286 = vst [vmem:[#allocation3 + $0x120] sm:$0xf0] %v1270
      %1287 = vst [vmem:[#allocation3 + $0x128] sm:$0xf0] %v1271
      %1288 = vst [vmem:[#allocation3 + $0x130] sm:$0xf0] %v1272
      %1289 = vst [vmem:[#allocation3 + $0x138] sm:$0xf0] %v1273
      %v1290 = vld [vmem:[#allocation2] sm:$0xff]
      %v1291 = vld [vmem:[#allocation2 + $0x8] sm:$0xff]
      %v1292 = vld [vmem:[#allocation2 + $0x10] sm:$0xff]
      %v1293 = vld [vmem:[#allocation2 + $0x18] sm:$0xff]
      %v1294 = vld [vmem:[#allocation2 + $0x20] sm:$0xf]
      %1300 = vst [vmem:[#allocation1] ss:$2 sm:$0xff] %v1290
      %s1301 = scalar_lea.vmem [#allocation1], 16
      %1302 = vst [vmem:[%s1301] ss:$2 sm:$0xff] %v1291
      %s1303 = scalar_lea.vmem [#allocation1], 32
      %1304 = vst [vmem:[%s1303] ss:$2 sm:$0xff] %v1292
      %s1305 = scalar_lea.vmem [#allocation1], 48
      %1306 = vst [vmem:[%s1305] ss:$2 sm:$0xff] %v1293
      %v1307 = vld.sshfl [vmem:[#allocation1] sm:$0xff pattern:$0x75316420]
      %v1308 = vld.sshfl [vmem:[#allocation1 + $0x8] sm:$0xff pattern:$0x75316420]
      %v1309 = vld.sshfl [vmem:[#allocation1 + $0x10] sm:$0xff pattern:$0x75316420]
      %v1310 = vld.sshfl [vmem:[#allocation1 + $0x18] sm:$0xff pattern:$0x75316420]
      %v1311 = vld.sshfl [vmem:[#allocation1 + $0x20] sm:$0xff pattern:$0x75316420]
      %v1312 = vld.sshfl [vmem:[#allocation1 + $0x28] sm:$0xff pattern:$0x75316420]
      %v1313 = vld.sshfl [vmem:[#allocation1 + $0x30] sm:$0xff pattern:$0x75316420]
      %v1314 = vld.sshfl [vmem:[#allocation1 + $0x38] sm:$0xff pattern:$0x75316420]
      %1315 = vst [vmem:[#allocation1] ss:$2 sm:$0xff] %v1294
      %v1316 = vld.sshfl [vmem:[#allocation1] sm:$0xff pattern:$0x75316420]
      %1317 = vrot.lane.b32.xlu0 %v1307, 10
      %v1318 = vpop.permute.xlu0 %1317
      %1319 = vrot.lane.b32.xlu0 %v1308, 10
      %v1320 = vpop.permute.xlu0 %1319
      %1321 = vrot.lane.b32.xlu0 %v1309, 10
      %v1322 = vpop.permute.xlu0 %1321
      %1323 = vrot.lane.b32.xlu0 %v1310, 10
      %v1324 = vpop.permute.xlu0 %1323
      %1325 = vrot.lane.b32.xlu0 %v1311, 10
      %v1326 = vpop.permute.xlu0 %1325
      %1327 = vrot.lane.b32.xlu0 %v1312, 10
      %v1328 = vpop.permute.xlu0 %1327
      %1329 = vrot.lane.b32.xlu0 %v1313, 10
      %v1330 = vpop.permute.xlu0 %1329
      %1331 = vrot.lane.b32.xlu0 %v1314, 10
      %v1332 = vpop.permute.xlu0 %1331
      %1333 = vrot.lane.b32.xlu0 %v1316, 10
      %v1334 = vpop.permute.xlu0 %1333
      %vm1335 = vcmask 80896
      %v1336 = vsel %vm1335, %v1318, %v1320
      %v1337 = vsel %vm1335, %v1320, %v1322
      %v1338 = vsel %vm1335, %v1322, %v1324
      %v1339 = vsel %vm1335, %v1324, %v1326
      %v1340 = vsel %vm1335, %v1326, %v1328
      %v1341 = vsel %vm1335, %v1328, %v1330
      %v1342 = vsel %vm1335, %v1330, %v1332
      %v1343 = vsel %vm1335, %v1332, %v1334
      %1352 = vst [vmem:[#allocation3 + $0x140] sm:$0xf] %v1336
      %1353 = vst [vmem:[#allocation3 + $0x148] sm:$0xf] %v1337
      %1354 = vst [vmem:[#allocation3 + $0x150] sm:$0xf] %v1338
      %1355 = vst [vmem:[#allocation3 + $0x158] sm:$0xf] %v1339
      %1356 = vst [vmem:[#allocation3 + $0x160] sm:$0xf] %v1340
      %1357 = vst [vmem:[#allocation3 + $0x168] sm:$0xf] %v1341
      %1358 = vst [vmem:[#allocation3 + $0x170] sm:$0xf] %v1342
      %1359 = vst [vmem:[#allocation3 + $0x178] sm:$0xf] %v1343
      %v1360 = vld [vmem:[#allocation2] sm:$0xff]
      %v1361 = vld [vmem:[#allocation2 + $0x8] sm:$0xff]
      %v1362 = vld [vmem:[#allocation2 + $0x10] sm:$0xff]
      %v1363 = vld [vmem:[#allocation2 + $0x18] sm:$0xff]
      %v1364 = vld [vmem:[#allocation2 + $0x20] sm:$0xf]
      %s1370 = scalar_lea.vmem [#allocation1], 1
      %1371 = vst [vmem:[%s1370] ss:$2 sm:$0xff] %v1360
      %s1372 = scalar_lea.vmem [#allocation1], 17
      %1373 = vst [vmem:[%s1372] ss:$2 sm:$0xff] %v1361
      %s1374 = scalar_lea.vmem [#allocation1], 33
      %1375 = vst [vmem:[%s1374] ss:$2 sm:$0xff] %v1362
      %s1376 = scalar_lea.vmem [#allocation1], 49
      %1377 = vst [vmem:[%s1376] ss:$2 sm:$0xff] %v1363
      %v1378 = vld.sshfl [vmem:[#allocation1] sm:$0xff pattern:$0x75316420]
      %v1379 = vld.sshfl [vmem:[#allocation1 + $0x8] sm:$0xff pattern:$0x75316420]
      %v1380 = vld.sshfl [vmem:[#allocation1 + $0x10] sm:$0xff pattern:$0x75316420]
      %v1381 = vld.sshfl [vmem:[#allocation1 + $0x18] sm:$0xff pattern:$0x75316420]
      %v1382 = vld.sshfl [vmem:[#allocation1 + $0x20] sm:$0xff pattern:$0x75316420]
      %v1383 = vld.sshfl [vmem:[#allocation1 + $0x28] sm:$0xff pattern:$0x75316420]
      %v1384 = vld.sshfl [vmem:[#allocation1 + $0x30] sm:$0xff pattern:$0x75316420]
      %v1385 = vld.sshfl [vmem:[#allocation1 + $0x38] sm:$0xff pattern:$0x75316420]
      %1386 = vst [vmem:[%s1370] ss:$2 sm:$0xff] %v1364
      %v1387 = vld.sshfl [vmem:[#allocation1] sm:$0xff pattern:$0x75316420]
      %1388 = vrot.lane.b32.xlu0 %v1378, 9
      %v1389 = vpop.permute.xlu0 %1388
      %1390 = vrot.lane.b32.xlu0 %v1379, 9
      %v1391 = vpop.permute.xlu0 %1390
      %1392 = vrot.lane.b32.xlu0 %v1380, 9
      %v1393 = vpop.permute.xlu0 %1392
      %1394 = vrot.lane.b32.xlu0 %v1381, 9
      %v1395 = vpop.permute.xlu0 %1394
      %1396 = vrot.lane.b32.xlu0 %v1382, 9
      %v1397 = vpop.permute.xlu0 %1396
      %1398 = vrot.lane.b32.xlu0 %v1383, 9
      %v1399 = vpop.permute.xlu0 %1398
      %1400 = vrot.lane.b32.xlu0 %v1384, 9
      %v1401 = vpop.permute.xlu0 %1400
      %1402 = vrot.lane.b32.xlu0 %v1385, 9
      %v1403 = vpop.permute.xlu0 %1402
      %1404 = vrot.lane.b32.xlu0 %v1387, 9
      %v1405 = vpop.permute.xlu0 %1404
      %vm1406 = vcmask 72704
      %v1407 = vsel %vm1406, %v1389, %v1391
      %v1408 = vsel %vm1406, %v1391, %v1393
      %v1409 = vsel %vm1406, %v1393, %v1395
      %v1410 = vsel %vm1406, %v1395, %v1397
      %v1411 = vsel %vm1406, %v1397, %v1399
      %v1412 = vsel %vm1406, %v1399, %v1401
      %v1413 = vsel %vm1406, %v1401, %v1403
      %v1414 = vsel %vm1406, %v1403, %v1405
      %1423 = vst [vmem:[#allocation3 + $0x140] sm:$0xf0] %v1407
      %1424 = vst [vmem:[#allocation3 + $0x148] sm:$0xf0] %v1408
      %1425 = vst [vmem:[#allocation3 + $0x150] sm:$0xf0] %v1409
      %1426 = vst [vmem:[#allocation3 + $0x158] sm:$0xf0] %v1410
      %1427 = vst [vmem:[#allocation3 + $0x160] sm:$0xf0] %v1411
      %1428 = vst [vmem:[#allocation3 + $0x168] sm:$0xf0] %v1412
      %1429 = vst [vmem:[#allocation3 + $0x170] sm:$0xf0] %v1413
      %1430 = vst [vmem:[#allocation3 + $0x178] sm:$0xf0] %v1414
      %v1431 = vld [vmem:[#allocation2] sm:$0xff]
      %v1432 = vld [vmem:[#allocation2 + $0x8] sm:$0xff]
      %v1433 = vld [vmem:[#allocation2 + $0x10] sm:$0xff]
      %v1434 = vld [vmem:[#allocation2 + $0x18] sm:$0xff]
      %v1435 = vld [vmem:[#allocation2 + $0x20] sm:$0xf]
      %1441 = vst [vmem:[#allocation1] ss:$2 sm:$0xff] %v1431
      %s1442 = scalar_lea.vmem [#allocation1], 16
      %1443 = vst [vmem:[%s1442] ss:$2 sm:$0xff] %v1432
      %s1444 = scalar_lea.vmem [#allocation1], 32
      %1445 = vst [vmem:[%s1444] ss:$2 sm:$0xff] %v1433
      %s1446 = scalar_lea.vmem [#allocation1], 48
      %1447 = vst [vmem:[%s1446] ss:$2 sm:$0xff] %v1434
      %v1448 = vld.sshfl [vmem:[#allocation1] sm:$0xff pattern:$0x75316420]
      %v1449 = vld.sshfl [vmem:[#allocation1 + $0x8] sm:$0xff pattern:$0x75316420]
      %v1450 = vld.sshfl [vmem:[#allocation1 + $0x10] sm:$0xff pattern:$0x75316420]
      %v1451 = vld.sshfl [vmem:[#allocation1 + $0x18] sm:$0xff pattern:$0x75316420]
      %v1452 = vld.sshfl [vmem:[#allocation1 + $0x20] sm:$0xff pattern:$0x75316420]
      %v1453 = vld.sshfl [vmem:[#allocation1 + $0x28] sm:$0xff pattern:$0x75316420]
      %v1454 = vld.sshfl [vmem:[#allocation1 + $0x30] sm:$0xff pattern:$0x75316420]
      %v1455 = vld.sshfl [vmem:[#allocation1 + $0x38] sm:$0xff pattern:$0x75316420]
      %1456 = vst [vmem:[#allocation1] ss:$2 sm:$0xff] %v1435
      %v1457 = vld.sshfl [vmem:[#allocation1] sm:$0xff pattern:$0x75316420]
      %1458 = vrot.lane.b32.xlu0 %v1448, 1
      %v1459 = vpop.permute.xlu0 %1458
      %1460 = vrot.lane.b32.xlu0 %v1449, 1
      %v1461 = vpop.permute.xlu0 %1460
      %1462 = vrot.lane.b32.xlu0 %v1450, 1
      %v1463 = vpop.permute.xlu0 %1462
      %1464 = vrot.lane.b32.xlu0 %v1451, 1
      %v1465 = vpop.permute.xlu0 %1464
      %1466 = vrot.lane.b32.xlu0 %v1452, 1
      %v1467 = vpop.permute.xlu0 %1466
      %1468 = vrot.lane.b32.xlu0 %v1453, 1
      %v1469 = vpop.permute.xlu0 %1468
      %1470 = vrot.lane.b32.xlu0 %v1454, 1
      %v1471 = vpop.permute.xlu0 %1470
      %1472 = vrot.lane.b32.xlu0 %v1455, 1
      %v1473 = vpop.permute.xlu0 %1472
      %1474 = vrot.lane.b32.xlu0 %v1457, 1
      %v1475 = vpop.permute.xlu0 %1474
      %vm1476 = vcmask 7168
      %v1477 = vsel %vm1476, %v1459, %v1461
      %v1478 = vsel %vm1476, %v1461, %v1463
      %v1479 = vsel %vm1476, %v1463, %v1465
      %v1480 = vsel %vm1476, %v1465, %v1467
      %v1481 = vsel %vm1476, %v1467, %v1469
      %v1482 = vsel %vm1476, %v1469, %v1471
      %v1483 = vsel %vm1476, %v1471, %v1473
      %v1484 = vsel %vm1476, %v1473, %v1475
      %1493 = vst [vmem:[#allocation3 + $0x180] sm:$0xf] %v1477
      %1494 = vst [vmem:[#allocation3 + $0x188] sm:$0xf] %v1478
      %1495 = vst [vmem:[#allocation3 + $0x190] sm:$0xf] %v1479
      %1496 = vst [vmem:[#allocation3 + $0x198] sm:$0xf] %v1480
      %1497 = vst [vmem:[#allocation3 + $0x1a0] sm:$0xf] %v1481
      %1498 = vst [vmem:[#allocation3 + $0x1a8] sm:$0xf] %v1482
      %1499 = vst [vmem:[#allocation3 + $0x1b0] sm:$0xf] %v1483
      %1500 = vst [vmem:[#allocation3 + $0x1b8] sm:$0xf] %v1484
      %v1501 = vld [vmem:[#allocation2 + $0x4] sm:$0xff]
      %v1502 = vld [vmem:[#allocation2 + $0xc] sm:$0xff]
      %v1503 = vld [vmem:[#allocation2 + $0x14] sm:$0xff]
      %v1504 = vld [vmem:[#allocation2 + $0x1c] sm:$0xff]
      %s1509 = scalar_lea.vmem [#allocation1], 1
      %1510 = vst [vmem:[%s1509] ss:$2 sm:$0xff] %v1501
      %s1511 = scalar_lea.vmem [#allocation1], 17
      %1512 = vst [vmem:[%s1511] ss:$2 sm:$0xff] %v1502
      %s1513 = scalar_lea.vmem [#allocation1], 33
      %1514 = vst [vmem:[%s1513] ss:$2 sm:$0xff] %v1503
      %s1515 = scalar_lea.vmem [#allocation1], 49
      %1516 = vst [vmem:[%s1515] ss:$2 sm:$0xff] %v1504
      %v1517 = vld.sshfl [vmem:[#allocation1] sm:$0xff pattern:$0x75316420]
      %v1518 = vld.sshfl [vmem:[#allocation1 + $0x8] sm:$0xff pattern:$0x75316420]
      %v1519 = vld.sshfl [vmem:[#allocation1 + $0x10] sm:$0xff pattern:$0x75316420]
      %v1520 = vld.sshfl [vmem:[#allocation1 + $0x18] sm:$0xff pattern:$0x75316420]
      %v1521 = vld.sshfl [vmem:[#allocation1 + $0x20] sm:$0xff pattern:$0x75316420]
      %v1522 = vld.sshfl [vmem:[#allocation1 + $0x28] sm:$0xff pattern:$0x75316420]
      %v1523 = vld.sshfl [vmem:[#allocation1 + $0x30] sm:$0xff pattern:$0x75316420]
      %v1524 = vld.sshfl [vmem:[#allocation1 + $0x38] sm:$0xff pattern:$0x75316420]
      %1533 = vst [vmem:[#allocation3 + $0x180] sm:$0xf0] %v1517
      %1534 = vst [vmem:[#allocation3 + $0x188] sm:$0xf0] %v1518
      %1535 = vst [vmem:[#allocation3 + $0x190] sm:$0xf0] %v1519
      %1536 = vst [vmem:[#allocation3 + $0x198] sm:$0xf0] %v1520
      %1537 = vst [vmem:[#allocation3 + $0x1a0] sm:$0xf0] %v1521
      %1538 = vst [vmem:[#allocation3 + $0x1a8] sm:$0xf0] %v1522
      %1539 = vst [vmem:[#allocation3 + $0x1b0] sm:$0xf0] %v1523
      %1540 = vst [vmem:[#allocation3 + $0x1b8] sm:$0xf0] %v1524
      %v1541 = vld [vmem:[#allocation2 + $0x4] sm:$0xff]
      %v1542 = vld [vmem:[#allocation2 + $0xc] sm:$0xff]
      %v1543 = vld [vmem:[#allocation2 + $0x14] sm:$0xff]
      %v1544 = vld [vmem:[#allocation2 + $0x1c] sm:$0xff]
      %v1545 = vld [vmem:[#allocation2 + $0x24] sm:$0xf]
      %1551 = vst [vmem:[#allocation1] ss:$2 sm:$0xff] %v1541
      %s1552 = scalar_lea.vmem [#allocation1], 16
      %1553 = vst [vmem:[%s1552] ss:$2 sm:$0xff] %v1542
      %s1554 = scalar_lea.vmem [#allocation1], 32
      %1555 = vst [vmem:[%s1554] ss:$2 sm:$0xff] %v1543
      %s1556 = scalar_lea.vmem [#allocation1], 48
      %1557 = vst [vmem:[%s1556] ss:$2 sm:$0xff] %v1544
      %v1558 = vld.sshfl [vmem:[#allocation1] sm:$0xff pattern:$0x75316420]
      %v1559 = vld.sshfl [vmem:[#allocation1 + $0x8] sm:$0xff pattern:$0x75316420]
      %v1560 = vld.sshfl [vmem:[#allocation1 + $0x10] sm:$0xff pattern:$0x75316420]
      %v1561 = vld.sshfl [vmem:[#allocation1 + $0x18] sm:$0xff pattern:$0x75316420]
      %v1562 = vld.sshfl [vmem:[#allocation1 + $0x20] sm:$0xff pattern:$0x75316420]
      %v1563 = vld.sshfl [vmem:[#allocation1 + $0x28] sm:$0xff pattern:$0x75316420]
      %v1564 = vld.sshfl [vmem:[#allocation1 + $0x30] sm:$0xff pattern:$0x75316420]
      %v1565 = vld.sshfl [vmem:[#allocation1 + $0x38] sm:$0xff pattern:$0x75316420]
      %1566 = vst [vmem:[#allocation1] ss:$2 sm:$0xff] %v1545
      %v1567 = vld.sshfl [vmem:[#allocation1] sm:$0xff pattern:$0x75316420]
      %1568 = vrot.lane.b32.xlu0 %v1558, 127
      %v1569 = vpop.permute.xlu0 %1568
      %1570 = vrot.lane.b32.xlu0 %v1559, 127
      %v1571 = vpop.permute.xlu0 %1570
      %1572 = vrot.lane.b32.xlu0 %v1560, 127
      %v1573 = vpop.permute.xlu0 %1572
      %1574 = vrot.lane.b32.xlu0 %v1561, 127
      %v1575 = vpop.permute.xlu0 %1574
      %1576 = vrot.lane.b32.xlu0 %v1562, 127
      %v1577 = vpop.permute.xlu0 %1576
      %1578 = vrot.lane.b32.xlu0 %v1563, 127
      %v1579 = vpop.permute.xlu0 %1578
      %1580 = vrot.lane.b32.xlu0 %v1564, 127
      %v1581 = vpop.permute.xlu0 %1580
      %1582 = vrot.lane.b32.xlu0 %v1565, 127
      %v1583 = vpop.permute.xlu0 %1582
      %1584 = vrot.lane.b32.xlu0 %v1567, 127
      %v1585 = vpop.permute.xlu0 %1584
      %vm1586 = vcmask 1039360
      %v1587 = vsel %vm1586, %v1569, %v1571
      %v1588 = vsel %vm1586, %v1571, %v1573
      %v1589 = vsel %vm1586, %v1573, %v1575
      %v1590 = vsel %vm1586, %v1575, %v1577
      %v1591 = vsel %vm1586, %v1577, %v1579
      %v1592 = vsel %vm1586, %v1579, %v1581
      %v1593 = vsel %vm1586, %v1581, %v1583
      %v1594 = vsel %vm1586, %v1583, %v1585
      %1603 = vst [vmem:[#allocation3 + $0x1c0] sm:$0xf] %v1587
      %1604 = vst [vmem:[#allocation3 + $0x1c8] sm:$0xf] %v1588
      %1605 = vst [vmem:[#allocation3 + $0x1d0] sm:$0xf] %v1589
      %1606 = vst [vmem:[#allocation3 + $0x1d8] sm:$0xf] %v1590
      %1607 = vst [vmem:[#allocation3 + $0x1e0] sm:$0xf] %v1591
      %1608 = vst [vmem:[#allocation3 + $0x1e8] sm:$0xf] %v1592
      %1609 = vst [vmem:[#allocation3 + $0x1f0] sm:$0xf] %v1593
      %1610 = vst [vmem:[#allocation3 + $0x1f8] sm:$0xf] %v1594
      %v1611 = vld [vmem:[#allocation2 + $0x4] sm:$0xff]
      %v1612 = vld [vmem:[#allocation2 + $0xc] sm:$0xff]
      %v1613 = vld [vmem:[#allocation2 + $0x14] sm:$0xff]
      %v1614 = vld [vmem:[#allocation2 + $0x1c] sm:$0xff]
      %v1615 = vld [vmem:[#allocation2 + $0x24] sm:$0xf]
      %s1621 = scalar_lea.vmem [#allocation1], 1
      %1622 = vst [vmem:[%s1621] ss:$2 sm:$0xff] %v1611
      %s1623 = scalar_lea.vmem [#allocation1], 17
      %1624 = vst [vmem:[%s1623] ss:$2 sm:$0xff] %v1612
      %s1625 = scalar_lea.vmem [#allocation1], 33
      %1626 = vst [vmem:[%s1625] ss:$2 sm:$0xff] %v1613
      %s1627 = scalar_lea.vmem [#allocation1], 49
      %1628 = vst [vmem:[%s1627] ss:$2 sm:$0xff] %v1614
      %v1629 = vld.sshfl [vmem:[#allocation1] sm:$0xff pattern:$0x75316420]
      %v1630 = vld.sshfl [vmem:[#allocation1 + $0x8] sm:$0xff pattern:$0x75316420]
      %v1631 = vld.sshfl [vmem:[#allocation1 + $0x10] sm:$0xff pattern:$0x75316420]
      %v1632 = vld.sshfl [vmem:[#allocation1 + $0x18] sm:$0xff pattern:$0x75316420]
      %v1633 = vld.sshfl [vmem:[#allocation1 + $0x20] sm:$0xff pattern:$0x75316420]
      %v1634 = vld.sshfl [vmem:[#allocation1 + $0x28] sm:$0xff pattern:$0x75316420]
      %v1635 = vld.sshfl [vmem:[#allocation1 + $0x30] sm:$0xff pattern:$0x75316420]
      %v1636 = vld.sshfl [vmem:[#allocation1 + $0x38] sm:$0xff pattern:$0x75316420]
      %1637 = vst [vmem:[%s1621] ss:$2 sm:$0xff] %v1615
      %v1638 = vld.sshfl [vmem:[#allocation1] sm:$0xff pattern:$0x75316420]
      %1639 = vrot.lane.b32.xlu0 %v1629, 119
      %v1640 = vpop.permute.xlu0 %1639
      %1641 = vrot.lane.b32.xlu0 %v1630, 119
      %v1642 = vpop.permute.xlu0 %1641
      %1643 = vrot.lane.b32.xlu0 %v1631, 119
      %v1644 = vpop.permute.xlu0 %1643
      %1645 = vrot.lane.b32.xlu0 %v1632, 119
      %v1646 = vpop.permute.xlu0 %1645
      %1647 = vrot.lane.b32.xlu0 %v1633, 119
      %v1648 = vpop.permute.xlu0 %1647
      %1649 = vrot.lane.b32.xlu0 %v1634, 119
      %v1650 = vpop.permute.xlu0 %1649
      %1651 = vrot.lane.b32.xlu0 %v1635, 119
      %v1652 = vpop.permute.xlu0 %1651
      %1653 = vrot.lane.b32.xlu0 %v1636, 119
      %v1654 = vpop.permute.xlu0 %1653
      %1655 = vrot.lane.b32.xlu0 %v1638, 119
      %v1656 = vpop.permute.xlu0 %1655
      %vm1657 = vcmask 973824
      %v1658 = vsel %vm1657, %v1640, %v1642
      %v1659 = vsel %vm1657, %v1642, %v1644
      %v1660 = vsel %vm1657, %v1644, %v1646
      %v1661 = vsel %vm1657, %v1646, %v1648
      %v1662 = vsel %vm1657, %v1648, %v1650
      %v1663 = vsel %vm1657, %v1650, %v1652
      %v1664 = vsel %vm1657, %v1652, %v1654
      %v1665 = vsel %vm1657, %v1654, %v1656
      %1674 = vst [vmem:[#allocation3 + $0x1c0] sm:$0xf0] %v1658
      %1675 = vst [vmem:[#allocation3 + $0x1c8] sm:$0xf0] %v1659
      %1676 = vst [vmem:[#allocation3 + $0x1d0] sm:$0xf0] %v1660
      %1677 = vst [vmem:[#allocation3 + $0x1d8] sm:$0xf0] %v1661
      %1678 = vst [vmem:[#allocation3 + $0x1e0] sm:$0xf0] %v1662
      %1679 = vst [vmem:[#allocation3 + $0x1e8] sm:$0xf0] %v1663
      %1680 = vst [vmem:[#allocation3 + $0x1f0] sm:$0xf0] %v1664
      %1681 = vst [vmem:[#allocation3 + $0x1f8] sm:$0xf0] %v1665
      %v1682 = vld [vmem:[#allocation2 + $0x4] sm:$0xff]
      %v1683 = vld [vmem:[#allocation2 + $0xc] sm:$0xff]
      %v1684 = vld [vmem:[#allocation2 + $0x14] sm:$0xff]
      %v1685 = vld [vmem:[#allocation2 + $0x1c] sm:$0xff]
      %v1686 = vld [vmem:[#allocation2 + $0x24] sm:$0xf]
      %1692 = vst [vmem:[#allocation1] ss:$2 sm:$0xff] %v1682
      %s1693 = scalar_lea.vmem [#allocation1], 16
      %1694 = vst [vmem:[%s1693] ss:$2 sm:$0xff] %v1683
      %s1695 = scalar_lea.vmem [#allocation1], 32
      %1696 = vst [vmem:[%s1695] ss:$2 sm:$0xff] %v1684
      %s1697 = scalar_lea.vmem [#allocation1], 48
      %1698 = vst [vmem:[%s1697] ss:$2 sm:$0xff] %v1685
      %v1699 = vld.sshfl [vmem:[#allocation1] sm:$0xff pattern:$0x75316420]
      %v1700 = vld.sshfl [vmem:[#allocation1 + $0x8] sm:$0xff pattern:$0x75316420]
      %v1701 = vld.sshfl [vmem:[#allocation1 + $0x10] sm:$0xff pattern:$0x75316420]
      %v1702 = vld.sshfl [vmem:[#allocation1 + $0x18] sm:$0xff pattern:$0x75316420]
      %v1703 = vld.sshfl [vmem:[#allocation1 + $0x20] sm:$0xff pattern:$0x75316420]
      %v1704 = vld.sshfl [vmem:[#allocation1 + $0x28] sm:$0xff pattern:$0x75316420]
      %v1705 = vld.sshfl [vmem:[#allocation1 + $0x30] sm:$0xff pattern:$0x75316420]
      %v1706 = vld.sshfl [vmem:[#allocation1 + $0x38] sm:$0xff pattern:$0x75316420]
      %1707 = vst [vmem:[#allocation1] ss:$2 sm:$0xff] %v1686
      %v1708 = vld.sshfl [vmem:[#allocation1] sm:$0xff pattern:$0x75316420]
      %1709 = vrot.lane.b32.xlu0 %v1699, 118
      %v1710 = vpop.permute.xlu0 %1709
      %1711 = vrot.lane.b32.xlu0 %v1700, 118
      %v1712 = vpop.permute.xlu0 %1711
      %1713 = vrot.lane.b32.xlu0 %v1701, 118
      %v1714 = vpop.permute.xlu0 %1713
      %1715 = vrot.lane.b32.xlu0 %v1702, 118
      %v1716 = vpop.permute.xlu0 %1715
      %1717 = vrot.lane.b32.xlu0 %v1703, 118
      %v1718 = vpop.permute.xlu0 %1717
      %1719 = vrot.lane.b32.xlu0 %v1704, 118
      %v1720 = vpop.permute.xlu0 %1719
      %1721 = vrot.lane.b32.xlu0 %v1705, 118
      %v1722 = vpop.permute.xlu0 %1721
      %1723 = vrot.lane.b32.xlu0 %v1706, 118
      %v1724 = vpop.permute.xlu0 %1723
      %1725 = vrot.lane.b32.xlu0 %v1708, 118
      %v1726 = vpop.permute.xlu0 %1725
      %vm1727 = vcmask 965632
      %v1728 = vsel %vm1727, %v1710, %v1712
      %v1729 = vsel %vm1727, %v1712, %v1714
      %v1730 = vsel %vm1727, %v1714, %v1716
      %v1731 = vsel %vm1727, %v1716, %v1718
      %v1732 = vsel %vm1727, %v1718, %v1720
      %v1733 = vsel %vm1727, %v1720, %v1722
      %v1734 = vsel %vm1727, %v1722, %v1724
      %v1735 = vsel %vm1727, %v1724, %v1726
      %1744 = vst [vmem:[#allocation3 + $0x200] sm:$0xf] %v1728
      %1745 = vst [vmem:[#allocation3 + $0x208] sm:$0xf] %v1729
      %1746 = vst [vmem:[#allocation3 + $0x210] sm:$0xf] %v1730
      %1747 = vst [vmem:[#allocation3 + $0x218] sm:$0xf] %v1731
      %1748 = vst [vmem:[#allocation3 + $0x220] sm:$0xf] %v1732
      %1749 = vst [vmem:[#allocation3 + $0x228] sm:$0xf] %v1733
      %1750 = vst [vmem:[#allocation3 + $0x230] sm:$0xf] %v1734
      %1751 = vst [vmem:[#allocation3 + $0x238] sm:$0xf] %v1735
      %v1752 = vld [vmem:[#allocation2 + $0x4] sm:$0xff]
      %v1753 = vld [vmem:[#allocation2 + $0xc] sm:$0xff]
      %v1754 = vld [vmem:[#allocation2 + $0x14] sm:$0xff]
      %v1755 = vld [vmem:[#allocation2 + $0x1c] sm:$0xff]
      %v1756 = vld [vmem:[#allocation2 + $0x24] sm:$0xf]
      %s1762 = scalar_lea.vmem [#allocation1], 1
      %1763 = vst [vmem:[%s1762] ss:$2 sm:$0xff] %v1752
      %s1764 = scalar_lea.vmem [#allocation1], 17
      %1765 = vst [vmem:[%s1764] ss:$2 sm:$0xff] %v1753
      %s1766 = scalar_lea.vmem [#allocation1], 33
      %1767 = vst [vmem:[%s1766] ss:$2 sm:$0xff] %v1754
      %s1768 = scalar_lea.vmem [#allocation1], 49
      %1769 = vst [vmem:[%s1768] ss:$2 sm:$0xff] %v1755
      %v1770 = vld.sshfl [vmem:[#allocation1] sm:$0xff pattern:$0x75316420]
      %v1771 = vld.sshfl [vmem:[#allocation1 + $0x8] sm:$0xff pattern:$0x75316420]
      %v1772 = vld.sshfl [vmem:[#allocation1 + $0x10] sm:$0xff pattern:$0x75316420]
      %v1773 = vld.sshfl [vmem:[#allocation1 + $0x18] sm:$0xff pattern:$0x75316420]
      %v1774 = vld.sshfl [vmem:[#allocation1 + $0x20] sm:$0xff pattern:$0x75316420]
      %v1775 = vld.sshfl [vmem:[#allocation1 + $0x28] sm:$0xff pattern:$0x75316420]
      %v1776 = vld.sshfl [vmem:[#allocation1 + $0x30] sm:$0xff pattern:$0x75316420]
      %v1777 = vld.sshfl [vmem:[#allocation1 + $0x38] sm:$0xff pattern:$0x75316420]
      %1778 = vst [vmem:[%s1762] ss:$2 sm:$0xff] %v1756
      %v1779 = vld.sshfl [vmem:[#allocation1] sm:$0xff pattern:$0x75316420]
      %1780 = vrot.lane.b32.xlu0 %v1770, 117
      %v1781 = vpop.permute.xlu0 %1780
      %1782 = vrot.lane.b32.xlu0 %v1771, 117
      %v1783 = vpop.permute.xlu0 %1782
      %1784 = vrot.lane.b32.xlu0 %v1772, 117
      %v1785 = vpop.permute.xlu0 %1784
      %1786 = vrot.lane.b32.xlu0 %v1773, 117
      %v1787 = vpop.permute.xlu0 %1786
      %1788 = vrot.lane.b32.xlu0 %v1774, 117
      %v1789 = vpop.permute.xlu0 %1788
      %1790 = vrot.lane.b32.xlu0 %v1775, 117
      %v1791 = vpop.permute.xlu0 %1790
      %1792 = vrot.lane.b32.xlu0 %v1776, 117
      %v1793 = vpop.permute.xlu0 %1792
      %1794 = vrot.lane.b32.xlu0 %v1777, 117
      %v1795 = vpop.permute.xlu0 %1794
      %1796 = vrot.lane.b32.xlu0 %v1779, 117
      %v1797 = vpop.permute.xlu0 %1796
      %vm1798 = vcmask 957440
      %v1799 = vsel %vm1798, %v1781, %v1783
      %v1800 = vsel %vm1798, %v1783, %v1785
      %v1801 = vsel %vm1798, %v1785, %v1787
      %v1802 = vsel %vm1798, %v1787, %v1789
      %v1803 = vsel %vm1798, %v1789, %v1791
      %v1804 = vsel %vm1798, %v1791, %v1793
      %v1805 = vsel %vm1798, %v1793, %v1795
      %v1806 = vsel %vm1798, %v1795, %v1797
      %1815 = vst [vmem:[#allocation3 + $0x200] sm:$0xf0] %v1799
      %1816 = vst [vmem:[#allocation3 + $0x208] sm:$0xf0] %v1800
      %1817 = vst [vmem:[#allocation3 + $0x210] sm:$0xf0] %v1801
      %1818 = vst [vmem:[#allocation3 + $0x218] sm:$0xf0] %v1802
      %1819 = vst [vmem:[#allocation3 + $0x220] sm:$0xf0] %v1803
      %1820 = vst [vmem:[#allocation3 + $0x228] sm:$0xf0] %v1804
      %1821 = vst [vmem:[#allocation3 + $0x230] sm:$0xf0] %v1805
      %1822 = vst [vmem:[#allocation3 + $0x238] sm:$0xf0] %v1806
      %v1823 = vld [vmem:[#allocation2 + $0x4] sm:$0xff]
      %v1824 = vld [vmem:[#allocation2 + $0xc] sm:$0xff]
      %v1825 = vld [vmem:[#allocation2 + $0x14] sm:$0xff]
      %v1826 = vld [vmem:[#allocation2 + $0x1c] sm:$0xff]
      %v1827 = vld [vmem:[#allocation2 + $0x24] sm:$0xf]
      %1833 = vst [vmem:[#allocation1] ss:$2 sm:$0xff] %v1823
      %s1834 = scalar_lea.vmem [#allocation1], 16
      %1835 = vst [vmem:[%s1834] ss:$2 sm:$0xff] %v1824
      %s1836 = scalar_lea.vmem [#allocation1], 32
      %1837 = vst [vmem:[%s1836] ss:$2 sm:$0xff] %v1825
      %s1838 = scalar_lea.vmem [#allocation1], 48
      %1839 = vst [vmem:[%s1838] ss:$2 sm:$0xff] %v1826
      %v1840 = vld.sshfl [vmem:[#allocation1] sm:$0xff pattern:$0x75316420]
      %v1841 = vld.sshfl [vmem:[#allocation1 + $0x8] sm:$0xff pattern:$0x75316420]
      %v1842 = vld.sshfl [vmem:[#allocation1 + $0x10] sm:$0xff pattern:$0x75316420]
      %v1843 = vld.sshfl [vmem:[#allocation1 + $0x18] sm:$0xff pattern:$0x75316420]
      %v1844 = vld.sshfl [vmem:[#allocation1 + $0x20] sm:$0xff pattern:$0x75316420]
      %v1845 = vld.sshfl [vmem:[#allocation1 + $0x28] sm:$0xff pattern:$0x75316420]
      %v1846 = vld.sshfl [vmem:[#allocation1 + $0x30] sm:$0xff pattern:$0x75316420]
      %v1847 = vld.sshfl [vmem:[#allocation1 + $0x38] sm:$0xff pattern:$0x75316420]
      %1848 = vst [vmem:[#allocation1] ss:$2 sm:$0xff] %v1827
      %v1849 = vld.sshfl [vmem:[#allocation1] sm:$0xff pattern:$0x75316420]
      %1850 = vrot.lane.b32.xlu0 %v1840, 39
      %v1851 = vpop.permute.xlu0 %1850
      %1852 = vrot.lane.b32.xlu0 %v1841, 39
      %v1853 = vpop.permute.xlu0 %1852
      %1854 = vrot.lane.b32.xlu0 %v1842, 39
      %v1855 = vpop.permute.xlu0 %1854
      %1856 = vrot.lane.b32.xlu0 %v1843, 39
      %v1857 = vpop.permute.xlu0 %1856
      %1858 = vrot.lane.b32.xlu0 %v1844, 39
      %v1859 = vpop.permute.xlu0 %1858
      %1860 = vrot.lane.b32.xlu0 %v1845, 39
      %v1861 = vpop.permute.xlu0 %1860
      %1862 = vrot.lane.b32.xlu0 %v1846, 39
      %v1863 = vpop.permute.xlu0 %1862
      %1864 = vrot.lane.b32.xlu0 %v1847, 39
      %v1865 = vpop.permute.xlu0 %1864
      %1866 = vrot.lane.b32.xlu0 %v1849, 39
      %v1867 = vpop.permute.xlu0 %1866
      %vm1868 = vcmask 318464
      %v1869 = vsel %vm1868, %v1851, %v1853
      %v1870 = vsel %vm1868, %v1853, %v1855
      %v1871 = vsel %vm1868, %v1855, %v1857
      %v1872 = vsel %vm1868, %v1857, %v1859
      %v1873 = vsel %vm1868, %v1859, %v1861
      %v1874 = vsel %vm1868, %v1861, %v1863
      %v1875 = vsel %vm1868, %v1863, %v1865
      %v1876 = vsel %vm1868, %v1865, %v1867
      %1885 = vst [vmem:[#allocation3 + $0x240] sm:$0xf] %v1869
      %1886 = vst [vmem:[#allocation3 + $0x248] sm:$0xf] %v1870
      %1887 = vst [vmem:[#allocation3 + $0x250] sm:$0xf] %v1871
      %1888 = vst [vmem:[#allocation3 + $0x258] sm:$0xf] %v1872
      %1889 = vst [vmem:[#allocation3 + $0x260] sm:$0xf] %v1873
      %1890 = vst [vmem:[#allocation3 + $0x268] sm:$0xf] %v1874
      %1891 = vst [vmem:[#allocation3 + $0x270] sm:$0xf] %v1875
      %1892 = vst [vmem:[#allocation3 + $0x278] sm:$0xf] %v1876
      %v1893 = vld [vmem:[#allocation2 + $0x4] sm:$0xff]
      %v1894 = vld [vmem:[#allocation2 + $0xc] sm:$0xff]
      %v1895 = vld [vmem:[#allocation2 + $0x14] sm:$0xff]
      %v1896 = vld [vmem:[#allocation2 + $0x1c] sm:$0xff]
      %v1897 = vld [vmem:[#allocation2 + $0x24] sm:$0xf]
      %s1903 = scalar_lea.vmem [#allocation1], 1
      %1904 = vst [vmem:[%s1903] ss:$2 sm:$0xff] %v1893
      %s1905 = scalar_lea.vmem [#allocation1], 17
      %1906 = vst [vmem:[%s1905] ss:$2 sm:$0xff] %v1894
      %s1907 = scalar_lea.vmem [#allocation1], 33
      %1908 = vst [vmem:[%s1907] ss:$2 sm:$0xff] %v1895
      %s1909 = scalar_lea.vmem [#allocation1], 49
      %1910 = vst [vmem:[%s1909] ss:$2 sm:$0xff] %v1896
      %v1911 = vld.sshfl [vmem:[#allocation1] sm:$0xff pattern:$0x75316420]
      %v1912 = vld.sshfl [vmem:[#allocation1 + $0x8] sm:$0xff pattern:$0x75316420]
      %v1913 = vld.sshfl [vmem:[#allocation1 + $0x10] sm:$0xff pattern:$0x75316420]
      %v1914 = vld.sshfl [vmem:[#allocation1 + $0x18] sm:$0xff pattern:$0x75316420]
      %v1915 = vld.sshfl [vmem:[#allocation1 + $0x20] sm:$0xff pattern:$0x75316420]
      %v1916 = vld.sshfl [vmem:[#allocation1 + $0x28] sm:$0xff pattern:$0x75316420]
      %v1917 = vld.sshfl [vmem:[#allocation1 + $0x30] sm:$0xff pattern:$0x75316420]
      %v1918 = vld.sshfl [vmem:[#allocation1 + $0x38] sm:$0xff pattern:$0x75316420]
      %1919 = vst [vmem:[%s1903] ss:$2 sm:$0xff] %v1897
      %v1920 = vld.sshfl [vmem:[#allocation1] sm:$0xff pattern:$0x75316420]
      %1921 = vrot.lane.b32.xlu0 %v1911, 38
      %v1922 = vpop.permute.xlu0 %1921
      %1923 = vrot.lane.b32.xlu0 %v1912, 38
      %v1924 = vpop.permute.xlu0 %1923
      %1925 = vrot.lane.b32.xlu0 %v1913, 38
      %v1926 = vpop.permute.xlu0 %1925
      %1927 = vrot.lane.b32.xlu0 %v1914, 38
      %v1928 = vpop.permute.xlu0 %1927
      %1929 = vrot.lane.b32.xlu0 %v1915, 38
      %v1930 = vpop.permute.xlu0 %1929
      %1931 = vrot.lane.b32.xlu0 %v1916, 38
      %v1932 = vpop.permute.xlu0 %1931
      %1933 = vrot.lane.b32.xlu0 %v1917, 38
      %v1934 = vpop.permute.xlu0 %1933
      %1935 = vrot.lane.b32.xlu0 %v1918, 38
      %v1936 = vpop.permute.xlu0 %1935
      %1937 = vrot.lane.b32.xlu0 %v1920, 38
      %v1938 = vpop.permute.xlu0 %1937
      %vm1939 = vcmask 310272
      %v1940 = vsel %vm1939, %v1922, %v1924
      %v1941 = vsel %vm1939, %v1924, %v1926
      %v1942 = vsel %vm1939, %v1926, %v1928
      %v1943 = vsel %vm1939, %v1928, %v1930
      %v1944 = vsel %vm1939, %v1930, %v1932
      %v1945 = vsel %vm1939, %v1932, %v1934
      %v1946 = vsel %vm1939, %v1934, %v1936
      %v1947 = vsel %vm1939, %v1936, %v1938
      %1956 = vst [vmem:[#allocation3 + $0x240] sm:$0xf0] %v1940
      %1957 = vst [vmem:[#allocation3 + $0x248] sm:$0xf0] %v1941
      %1958 = vst [vmem:[#allocation3 + $0x250] sm:$0xf0] %v1942
      %1959 = vst [vmem:[#allocation3 + $0x258] sm:$0xf0] %v1943
      %1960 = vst [vmem:[#allocation3 + $0x260] sm:$0xf0] %v1944
      %1961 = vst [vmem:[#allocation3 + $0x268] sm:$0xf0] %v1945
      %1962 = vst [vmem:[#allocation3 + $0x270] sm:$0xf0] %v1946
      %1963 = vst [vmem:[#allocation3 + $0x278] sm:$0xf0] %v1947
      %v1964 = vld [vmem:[#allocation2 + $0x4] sm:$0xff]
      %v1965 = vld [vmem:[#allocation2 + $0xc] sm:$0xff]
      %v1966 = vld [vmem:[#allocation2 + $0x14] sm:$0xff]
      %v1967 = vld [vmem:[#allocation2 + $0x1c] sm:$0xff]
      %v1968 = vld [vmem:[#allocation2 + $0x24] sm:$0xf]
      %1974 = vst [vmem:[#allocation1] ss:$2 sm:$0xff] %v1964
      %s1975 = scalar_lea.vmem [#allocation1], 16
      %1976 = vst [vmem:[%s1975] ss:$2 sm:$0xff] %v1965
      %s1977 = scalar_lea.vmem [#allocation1], 32
      %1978 = vst [vmem:[%s1977] ss:$2 sm:$0xff] %v1966
      %s1979 = scalar_lea.vmem [#allocation1], 48
      %1980 = vst [vmem:[%s1979] ss:$2 sm:$0xff] %v1967
      %v1981 = vld.sshfl [vmem:[#allocation1] sm:$0xff pattern:$0x75316420]
      %v1982 = vld.sshfl [vmem:[#allocation1 + $0x8] sm:$0xff pattern:$0x75316420]
      %v1983 = vld.sshfl [vmem:[#allocation1 + $0x10] sm:$0xff pattern:$0x75316420]
      %v1984 = vld.sshfl [vmem:[#allocation1 + $0x18] sm:$0xff pattern:$0x75316420]
      %v1985 = vld.sshfl [vmem:[#allocation1 + $0x20] sm:$0xff pattern:$0x75316420]
      %v1986 = vld.sshfl [vmem:[#allocation1 + $0x28] sm:$0xff pattern:$0x75316420]
      %v1987 = vld.sshfl [vmem:[#allocation1 + $0x30] sm:$0xff pattern:$0x75316420]
      %v1988 = vld.sshfl [vmem:[#allocation1 + $0x38] sm:$0xff pattern:$0x75316420]
      %1989 = vst [vmem:[#allocation1] ss:$2 sm:$0xff] %v1968
      %v1990 = vld.sshfl [vmem:[#allocation1] sm:$0xff pattern:$0x75316420]
      %1991 = vrot.lane.b32.xlu0 %v1981, 37
      %v1992 = vpop.permute.xlu0 %1991
      %1993 = vrot.lane.b32.xlu0 %v1982, 37
      %v1994 = vpop.permute.xlu0 %1993
      %1995 = vrot.lane.b32.xlu0 %v1983, 37
      %v1996 = vpop.permute.xlu0 %1995
      %1997 = vrot.lane.b32.xlu0 %v1984, 37
      %v1998 = vpop.permute.xlu0 %1997
      %1999 = vrot.lane.b32.xlu0 %v1985, 37
      %v2000 = vpop.permute.xlu0 %1999
      %2001 = vrot.lane.b32.xlu0 %v1986, 37
      %v2002 = vpop.permute.xlu0 %2001
      %2003 = vrot.lane.b32.xlu0 %v1987, 37
      %v2004 = vpop.permute.xlu0 %2003
      %2005 = vrot.lane.b32.xlu0 %v1988, 37
      %v2006 = vpop.permute.xlu0 %2005
      %2007 = vrot.lane.b32.xlu0 %v1990, 37
      %v2008 = vpop.permute.xlu0 %2007
      %vm2009 = vcmask 302080
      %v2010 = vsel %vm2009, %v1992, %v1994
      %v2011 = vsel %vm2009, %v1994, %v1996
      %v2012 = vsel %vm2009, %v1996, %v1998
      %v2013 = vsel %vm2009, %v1998, %v2000
      %v2014 = vsel %vm2009, %v2000, %v2002
      %v2015 = vsel %vm2009, %v2002, %v2004
      %v2016 = vsel %vm2009, %v2004, %v2006
      %v2017 = vsel %vm2009, %v2006, %v2008
      %2026 = vst [vmem:[#allocation3 + $0x280] sm:$0xf] %v2010
      %2027 = vst [vmem:[#allocation3 + $0x288] sm:$0xf] %v2011
      %2028 = vst [vmem:[#allocation3 + $0x290] sm:$0xf] %v2012
      %2029 = vst [vmem:[#allocation3 + $0x298] sm:$0xf] %v2013
      %2030 = vst [vmem:[#allocation3 + $0x2a0] sm:$0xf] %v2014
      %2031 = vst [vmem:[#allocation3 + $0x2a8] sm:$0xf] %v2015
      %2032 = vst [vmem:[#allocation3 + $0x2b0] sm:$0xf] %v2016
      %2033 = vst [vmem:[#allocation3 + $0x2b8] sm:$0xf] %v2017
      %v2034 = vld [vmem:[#allocation2 + $0x4] sm:$0xff]
      %v2035 = vld [vmem:[#allocation2 + $0xc] sm:$0xff]
      %v2036 = vld [vmem:[#allocation2 + $0x14] sm:$0xff]
      %v2037 = vld [vmem:[#allocation2 + $0x1c] sm:$0xff]
      %v2038 = vld [vmem:[#allocation2 + $0x24] sm:$0xf]
      %s2044 = scalar_lea.vmem [#allocation1], 1
      %2045 = vst [vmem:[%s2044] ss:$2 sm:$0xff] %v2034
      %s2046 = scalar_lea.vmem [#allocation1], 17
      %2047 = vst [vmem:[%s2046] ss:$2 sm:$0xff] %v2035
      %s2048 = scalar_lea.vmem [#allocation1], 33
      %2049 = vst [vmem:[%s2048] ss:$2 sm:$0xff] %v2036
      %s2050 = scalar_lea.vmem [#allocation1], 49
      %2051 = vst [vmem:[%s2050] ss:$2 sm:$0xff] %v2037
      %v2052 = vld.sshfl [vmem:[#allocation1] sm:$0xff pattern:$0x75316420]
      %v2053 = vld.sshfl [vmem:[#allocation1 + $0x8] sm:$0xff pattern:$0x75316420]
      %v2054 = vld.sshfl [vmem:[#allocation1 + $0x10] sm:$0xff pattern:$0x75316420]
      %v2055 = vld.sshfl [vmem:[#allocation1 + $0x18] sm:$0xff pattern:$0x75316420]
      %v2056 = vld.sshfl [vmem:[#allocation1 + $0x20] sm:$0xff pattern:$0x75316420]
      %v2057 = vld.sshfl [vmem:[#allocation1 + $0x28] sm:$0xff pattern:$0x75316420]
      %v2058 = vld.sshfl [vmem:[#allocation1 + $0x30] sm:$0xff pattern:$0x75316420]
      %v2059 = vld.sshfl [vmem:[#allocation1 + $0x38] sm:$0xff pattern:$0x75316420]
      %2060 = vst [vmem:[%s2044] ss:$2 sm:$0xff] %v2038
      %v2061 = vld.sshfl [vmem:[#allocation1] sm:$0xff pattern:$0x75316420]
      %2062 = vrot.lane.b32.xlu0 %v2052, 29
      %v2063 = vpop.permute.xlu0 %2062
      %2064 = vrot.lane.b32.xlu0 %v2053, 29
      %v2065 = vpop.permute.xlu0 %2064
      %2066 = vrot.lane.b32.xlu0 %v2054, 29
      %v2067 = vpop.permute.xlu0 %2066
      %2068 = vrot.lane.b32.xlu0 %v2055, 29
      %v2069 = vpop.permute.xlu0 %2068
      %2070 = vrot.lane.b32.xlu0 %v2056, 29
      %v2071 = vpop.permute.xlu0 %2070
      %2072 = vrot.lane.b32.xlu0 %v2057, 29
      %v2073 = vpop.permute.xlu0 %2072
      %2074 = vrot.lane.b32.xlu0 %v2058, 29
      %v2075 = vpop.permute.xlu0 %2074
      %2076 = vrot.lane.b32.xlu0 %v2059, 29
      %v2077 = vpop.permute.xlu0 %2076
      %2078 = vrot.lane.b32.xlu0 %v2061, 29
      %v2079 = vpop.permute.xlu0 %2078
      %vm2080 = vcmask 236544
      %v2081 = vsel %vm2080, %v2063, %v2065
      %v2082 = vsel %vm2080, %v2065, %v2067
      %v2083 = vsel %vm2080, %v2067, %v2069
      %v2084 = vsel %vm2080, %v2069, %v2071
      %v2085 = vsel %vm2080, %v2071, %v2073
      %v2086 = vsel %vm2080, %v2073, %v2075
      %v2087 = vsel %vm2080, %v2075, %v2077
      %v2088 = vsel %vm2080, %v2077, %v2079
      %2097 = vst [vmem:[#allocation3 + $0x280] sm:$0xf0] %v2081
      %2098 = vst [vmem:[#allocation3 + $0x288] sm:$0xf0] %v2082
      %2099 = vst [vmem:[#allocation3 + $0x290] sm:$0xf0] %v2083
      %2100 = vst [vmem:[#allocation3 + $0x298] sm:$0xf0] %v2084
      %2101 = vst [vmem:[#allocation3 + $0x2a0] sm:$0xf0] %v2085
      %2102 = vst [vmem:[#allocation3 + $0x2a8] sm:$0xf0] %v2086
      %2103 = vst [vmem:[#allocation3 + $0x2b0] sm:$0xf0] %v2087
      %2104 = vst [vmem:[#allocation3 + $0x2b8] sm:$0xf0] %v2088
      %v2105 = vld [vmem:[#allocation2 + $0x4] sm:$0xff]
      %v2106 = vld [vmem:[#allocation2 + $0xc] sm:$0xff]
      %v2107 = vld [vmem:[#allocation2 + $0x14] sm:$0xff]
      %v2108 = vld [vmem:[#allocation2 + $0x1c] sm:$0xff]
      %v2109 = vld [vmem:[#allocation2 + $0x24] sm:$0xf]
      %2115 = vst [vmem:[#allocation1] ss:$2 sm:$0xff] %v2105
      %s2116 = scalar_lea.vmem [#allocation1], 16
      %2117 = vst [vmem:[%s2116] ss:$2 sm:$0xff] %v2106
      %s2118 = scalar_lea.vmem [#allocation1], 32
      %2119 = vst [vmem:[%s2118] ss:$2 sm:$0xff] %v2107
      %s2120 = scalar_lea.vmem [#allocation1], 48
      %2121 = vst [vmem:[%s2120] ss:$2 sm:$0xff] %v2108
      %v2122 = vld.sshfl [vmem:[#allocation1] sm:$0xff pattern:$0x75316420]
      %v2123 = vld.sshfl [vmem:[#allocation1 + $0x8] sm:$0xff pattern:$0x75316420]
      %v2124 = vld.sshfl [vmem:[#allocation1 + $0x10] sm:$0xff pattern:$0x75316420]
      %v2125 = vld.sshfl [vmem:[#allocation1 + $0x18] sm:$0xff pattern:$0x75316420]
      %v2126 = vld.sshfl [vmem:[#allocation1 + $0x20] sm:$0xff pattern:$0x75316420]
      %v2127 = vld.sshfl [vmem:[#allocation1 + $0x28] sm:$0xff pattern:$0x75316420]
      %v2128 = vld.sshfl [vmem:[#allocation1 + $0x30] sm:$0xff pattern:$0x75316420]
      %v2129 = vld.sshfl [vmem:[#allocation1 + $0x38] sm:$0xff pattern:$0x75316420]
      %2130 = vst [vmem:[#allocation1] ss:$2 sm:$0xff] %v2109
      %v2131 = vld.sshfl [vmem:[#allocation1] sm:$0xff pattern:$0x75316420]
      %2132 = vrot.lane.b32.xlu0 %v2122, 28
      %v2133 = vpop.permute.xlu0 %2132
      %2134 = vrot.lane.b32.xlu0 %v2123, 28
      %v2135 = vpop.permute.xlu0 %2134
      %2136 = vrot.lane.b32.xlu0 %v2124, 28
      %v2137 = vpop.permute.xlu0 %2136
      %2138 = vrot.lane.b32.xlu0 %v2125, 28
      %v2139 = vpop.permute.xlu0 %2138
      %2140 = vrot.lane.b32.xlu0 %v2126, 28
      %v2141 = vpop.permute.xlu0 %2140
      %2142 = vrot.lane.b32.xlu0 %v2127, 28
      %v2143 = vpop.permute.xlu0 %2142
      %2144 = vrot.lane.b32.xlu0 %v2128, 28
      %v2145 = vpop.permute.xlu0 %2144
      %2146 = vrot.lane.b32.xlu0 %v2129, 28
      %v2147 = vpop.permute.xlu0 %2146
      %2148 = vrot.lane.b32.xlu0 %v2131, 28
      %v2149 = vpop.permute.xlu0 %2148
      %vm2150 = vcmask 228352
      %v2151 = vsel %vm2150, %v2133, %v2135
      %v2152 = vsel %vm2150, %v2135, %v2137
      %v2153 = vsel %vm2150, %v2137, %v2139
      %v2154 = vsel %vm2150, %v2139, %v2141
      %v2155 = vsel %vm2150, %v2141, %v2143
      %v2156 = vsel %vm2150, %v2143, %v2145
      %v2157 = vsel %vm2150, %v2145, %v2147
      %v2158 = vsel %vm2150, %v2147, %v2149
      %2167 = vst [vmem:[#allocation3 + $0x2c0] sm:$0xf] %v2151
      %2168 = vst [vmem:[#allocation3 + $0x2c8] sm:$0xf] %v2152
      %2169 = vst [vmem:[#allocation3 + $0x2d0] sm:$0xf] %v2153
      %2170 = vst [vmem:[#allocation3 + $0x2d8] sm:$0xf] %v2154
      %2171 = vst [vmem:[#allocation3 + $0x2e0] sm:$0xf] %v2155
      %2172 = vst [vmem:[#allocation3 + $0x2e8] sm:$0xf] %v2156
      %2173 = vst [vmem:[#allocation3 + $0x2f0] sm:$0xf] %v2157
      %2174 = vst [vmem:[#allocation3 + $0x2f8] sm:$0xf] %v2158
      %v2175 = vld [vmem:[#allocation2 + $0x4] sm:$0xff]
      %v2176 = vld [vmem:[#allocation2 + $0xc] sm:$0xff]
      %v2177 = vld [vmem:[#allocation2 + $0x14] sm:$0xff]
      %v2178 = vld [vmem:[#allocation2 + $0x1c] sm:$0xff]
      %v2179 = vld [vmem:[#allocation2 + $0x24] sm:$0xf]
      %s2185 = scalar_lea.vmem [#allocation1], 1
      %2186 = vst [vmem:[%s2185] ss:$2 sm:$0xff] %v2175
      %s2187 = scalar_lea.vmem [#allocation1], 17
      %2188 = vst [vmem:[%s2187] ss:$2 sm:$0xff] %v2176
      %s2189 = scalar_lea.vmem [#allocation1], 33
      %2190 = vst [vmem:[%s2189] ss:$2 sm:$0xff] %v2177
      %s2191 = scalar_lea.vmem [#allocation1], 49
      %2192 = vst [vmem:[%s2191] ss:$2 sm:$0xff] %v2178
      %v2193 = vld.sshfl [vmem:[#allocation1] sm:$0xff pattern:$0x75316420]
      %v2194 = vld.sshfl [vmem:[#allocation1 + $0x8] sm:$0xff pattern:$0x75316420]
      %v2195 = vld.sshfl [vmem:[#allocation1 + $0x10] sm:$0xff pattern:$0x75316420]
      %v2196 = vld.sshfl [vmem:[#allocation1 + $0x18] sm:$0xff pattern:$0x75316420]
      %v2197 = vld.sshfl [vmem:[#allocation1 + $0x20] sm:$0xff pattern:$0x75316420]
      %v2198 = vld.sshfl [vmem:[#allocation1 + $0x28] sm:$0xff pattern:$0x75316420]
      %v2199 = vld.sshfl [vmem:[#allocation1 + $0x30] sm:$0xff pattern:$0x75316420]
      %v2200 = vld.sshfl [vmem:[#allocation1 + $0x38] sm:$0xff pattern:$0x75316420]
      %2201 = vst [vmem:[%s2185] ss:$2 sm:$0xff] %v2179
      %v2202 = vld.sshfl [vmem:[#allocation1] sm:$0xff pattern:$0x75316420]
      %2203 = vrot.lane.b32.xlu0 %v2193, 27
      %v2204 = vpop.permute.xlu0 %2203
      %2205 = vrot.lane.b32.xlu0 %v2194, 27
      %v2206 = vpop.permute.xlu0 %2205
      %2207 = vrot.lane.b32.xlu0 %v2195, 27
      %v2208 = vpop.permute.xlu0 %2207
      %2209 = vrot.lane.b32.xlu0 %v2196, 27
      %v2210 = vpop.permute.xlu0 %2209
      %2211 = vrot.lane.b32.xlu0 %v2197, 27
      %v2212 = vpop.permute.xlu0 %2211
      %2213 = vrot.lane.b32.xlu0 %v2198, 27
      %v2214 = vpop.permute.xlu0 %2213
      %2215 = vrot.lane.b32.xlu0 %v2199, 27
      %v2216 = vpop.permute.xlu0 %2215
      %2217 = vrot.lane.b32.xlu0 %v2200, 27
      %v2218 = vpop.permute.xlu0 %2217
      %2219 = vrot.lane.b32.xlu0 %v2202, 27
      %v2220 = vpop.permute.xlu0 %2219
      %vm2221 = vcmask 220160
      %v2222 = vsel %vm2221, %v2204, %v2206
      %v2223 = vsel %vm2221, %v2206, %v2208
      %v2224 = vsel %vm2221, %v2208, %v2210
      %v2225 = vsel %vm2221, %v2210, %v2212
      %v2226 = vsel %vm2221, %v2212, %v2214
      %v2227 = vsel %vm2221, %v2214, %v2216
      %v2228 = vsel %vm2221, %v2216, %v2218
      %v2229 = vsel %vm2221, %v2218, %v2220
      %2238 = vst [vmem:[#allocation3 + $0x2c0] sm:$0xf0] %v2222
      %2239 = vst [vmem:[#allocation3 + $0x2c8] sm:$0xf0] %v2223
      %2240 = vst [vmem:[#allocation3 + $0x2d0] sm:$0xf0] %v2224
      %2241 = vst [vmem:[#allocation3 + $0x2d8] sm:$0xf0] %v2225
      %2242 = vst [vmem:[#allocation3 + $0x2e0] sm:$0xf0] %v2226
      %2243 = vst [vmem:[#allocation3 + $0x2e8] sm:$0xf0] %v2227
      %2244 = vst [vmem:[#allocation3 + $0x2f0] sm:$0xf0] %v2228
      %2245 = vst [vmem:[#allocation3 + $0x2f8] sm:$0xf0] %v2229
      %v2246 = vld [vmem:[#allocation2 + $0x4] sm:$0xff]
      %v2247 = vld [vmem:[#allocation2 + $0xc] sm:$0xff]
      %v2248 = vld [vmem:[#allocation2 + $0x14] sm:$0xff]
      %v2249 = vld [vmem:[#allocation2 + $0x1c] sm:$0xff]
      %v2250 = vld [vmem:[#allocation2 + $0x24] sm:$0xf]
      %2256 = vst [vmem:[#allocation1] ss:$2 sm:$0xff] %v2246
      %s2257 = scalar_lea.vmem [#allocation1], 16
      %2258 = vst [vmem:[%s2257] ss:$2 sm:$0xff] %v2247
      %s2259 = scalar_lea.vmem [#allocation1], 32
      %2260 = vst [vmem:[%s2259] ss:$2 sm:$0xff] %v2248
      %s2261 = scalar_lea.vmem [#allocation1], 48
      %2262 = vst [vmem:[%s2261] ss:$2 sm:$0xff] %v2249
      %v2263 = vld.sshfl [vmem:[#allocation1] sm:$0xff pattern:$0x75316420]
      %v2264 = vld.sshfl [vmem:[#allocation1 + $0x8] sm:$0xff pattern:$0x75316420]
      %v2265 = vld.sshfl [vmem:[#allocation1 + $0x10] sm:$0xff pattern:$0x75316420]
      %v2266 = vld.sshfl [vmem:[#allocation1 + $0x18] sm:$0xff pattern:$0x75316420]
      %v2267 = vld.sshfl [vmem:[#allocation1 + $0x20] sm:$0xff pattern:$0x75316420]
      %v2268 = vld.sshfl [vmem:[#allocation1 + $0x28] sm:$0xff pattern:$0x75316420]
      %v2269 = vld.sshfl [vmem:[#allocation1 + $0x30] sm:$0xff pattern:$0x75316420]
      %v2270 = vld.sshfl [vmem:[#allocation1 + $0x38] sm:$0xff pattern:$0x75316420]
      %2271 = vst [vmem:[#allocation1] ss:$2 sm:$0xff] %v2250
      %v2272 = vld.sshfl [vmem:[#allocation1] sm:$0xff pattern:$0x75316420]
      %2273 = vrot.lane.b32.xlu0 %v2263, 19
      %v2274 = vpop.permute.xlu0 %2273
      %2275 = vrot.lane.b32.xlu0 %v2264, 19
      %v2276 = vpop.permute.xlu0 %2275
      %2277 = vrot.lane.b32.xlu0 %v2265, 19
      %v2278 = vpop.permute.xlu0 %2277
      %2279 = vrot.lane.b32.xlu0 %v2266, 19
      %v2280 = vpop.permute.xlu0 %2279
      %2281 = vrot.lane.b32.xlu0 %v2267, 19
      %v2282 = vpop.permute.xlu0 %2281
      %2283 = vrot.lane.b32.xlu0 %v2268, 19
      %v2284 = vpop.permute.xlu0 %2283
      %2285 = vrot.lane.b32.xlu0 %v2269, 19
      %v2286 = vpop.permute.xlu0 %2285
      %2287 = vrot.lane.b32.xlu0 %v2270, 19
      %v2288 = vpop.permute.xlu0 %2287
      %2289 = vrot.lane.b32.xlu0 %v2272, 19
      %v2290 = vpop.permute.xlu0 %2289
      %vm2291 = vcmask 154624
      %v2292 = vsel %vm2291, %v2274, %v2276
      %v2293 = vsel %vm2291, %v2276, %v2278
      %v2294 = vsel %vm2291, %v2278, %v2280
      %v2295 = vsel %vm2291, %v2280, %v2282
      %v2296 = vsel %vm2291, %v2282, %v2284
      %v2297 = vsel %vm2291, %v2284, %v2286
      %v2298 = vsel %vm2291, %v2286, %v2288
      %v2299 = vsel %vm2291, %v2288, %v2290
      %2308 = vst [vmem:[#allocation3 + $0x300] sm:$0xf] %v2292
      %2309 = vst [vmem:[#allocation3 + $0x308] sm:$0xf] %v2293
      %2310 = vst [vmem:[#allocation3 + $0x310] sm:$0xf] %v2294
      %2311 = vst [vmem:[#allocation3 + $0x318] sm:$0xf] %v2295
      %2312 = vst [vmem:[#allocation3 + $0x320] sm:$0xf] %v2296
      %2313 = vst [vmem:[#allocation3 + $0x328] sm:$0xf] %v2297
      %2314 = vst [vmem:[#allocation3 + $0x330] sm:$0xf] %v2298
      %2315 = vst [vmem:[#allocation3 + $0x338] sm:$0xf] %v2299
      %v2316 = vld [vmem:[#allocation2 + $0x4] sm:$0xff]
      %v2317 = vld [vmem:[#allocation2 + $0xc] sm:$0xff]
      %v2318 = vld [vmem:[#allocation2 + $0x14] sm:$0xff]
      %v2319 = vld [vmem:[#allocation2 + $0x1c] sm:$0xff]
      %v2320 = vld [vmem:[#allocation2 + $0x24] sm:$0xf]
      %s2326 = scalar_lea.vmem [#allocation1], 1
      %2327 = vst [vmem:[%s2326] ss:$2 sm:$0xff] %v2316
      %s2328 = scalar_lea.vmem [#allocation1], 17
      %2329 = vst [vmem:[%s2328] ss:$2 sm:$0xff] %v2317
      %s2330 = scalar_lea.vmem [#allocation1], 33
      %2331 = vst [vmem:[%s2330] ss:$2 sm:$0xff] %v2318
      %s2332 = scalar_lea.vmem [#allocation1], 49
      %2333 = vst [vmem:[%s2332] ss:$2 sm:$0xff] %v2319
      %v2334 = vld.sshfl [vmem:[#allocation1] sm:$0xff pattern:$0x75316420]
      %v2335 = vld.sshfl [vmem:[#allocation1 + $0x8] sm:$0xff pattern:$0x75316420]
      %v2336 = vld.sshfl [vmem:[#allocation1 + $0x10] sm:$0xff pattern:$0x75316420]
      %v2337 = vld.sshfl [vmem:[#allocation1 + $0x18] sm:$0xff pattern:$0x75316420]
      %v2338 = vld.sshfl [vmem:[#allocation1 + $0x20] sm:$0xff pattern:$0x75316420]
      %v2339 = vld.sshfl [vmem:[#allocation1 + $0x28] sm:$0xff pattern:$0x75316420]
      %v2340 = vld.sshfl [vmem:[#allocation1 + $0x30] sm:$0xff pattern:$0x75316420]
      %v2341 = vld.sshfl [vmem:[#allocation1 + $0x38] sm:$0xff pattern:$0x75316420]
      %2342 = vst [vmem:[%s2326] ss:$2 sm:$0xff] %v2320
      %v2343 = vld.sshfl [vmem:[#allocation1] sm:$0xff pattern:$0x75316420]
      %2344 = vrot.lane.b32.xlu0 %v2334, 18
      %v2345 = vpop.permute.xlu0 %2344
      %2346 = vrot.lane.b32.xlu0 %v2335, 18
      %v2347 = vpop.permute.xlu0 %2346
      %2348 = vrot.lane.b32.xlu0 %v2336, 18
      %v2349 = vpop.permute.xlu0 %2348
      %2350 = vrot.lane.b32.xlu0 %v2337, 18
      %v2351 = vpop.permute.xlu0 %2350
      %2352 = vrot.lane.b32.xlu0 %v2338, 18
      %v2353 = vpop.permute.xlu0 %2352
      %2354 = vrot.lane.b32.xlu0 %v2339, 18
      %v2355 = vpop.permute.xlu0 %2354
      %2356 = vrot.lane.b32.xlu0 %v2340, 18
      %v2357 = vpop.permute.xlu0 %2356
      %2358 = vrot.lane.b32.xlu0 %v2341, 18
      %v2359 = vpop.permute.xlu0 %2358
      %2360 = vrot.lane.b32.xlu0 %v2343, 18
      %v2361 = vpop.permute.xlu0 %2360
      %vm2362 = vcmask 146432
      %v2363 = vsel %vm2362, %v2345, %v2347
      %v2364 = vsel %vm2362, %v2347, %v2349
      %v2365 = vsel %vm2362, %v2349, %v2351
      %v2366 = vsel %vm2362, %v2351, %v2353
      %v2367 = vsel %vm2362, %v2353, %v2355
      %v2368 = vsel %vm2362, %v2355, %v2357
      %v2369 = vsel %vm2362, %v2357, %v2359
      %v2370 = vsel %vm2362, %v2359, %v2361
      %2379 = vst [vmem:[#allocation3 + $0x300] sm:$0xf0] %v2363
      %2380 = vst [vmem:[#allocation3 + $0x308] sm:$0xf0] %v2364
      %2381 = vst [vmem:[#allocation3 + $0x310] sm:$0xf0] %v2365
      %2382 = vst [vmem:[#allocation3 + $0x318] sm:$0xf0] %v2366
      %2383 = vst [vmem:[#allocation3 + $0x320] sm:$0xf0] %v2367
      %2384 = vst [vmem:[#allocation3 + $0x328] sm:$0xf0] %v2368
      %2385 = vst [vmem:[#allocation3 + $0x330] sm:$0xf0] %v2369
      %2386 = vst [vmem:[#allocation3 + $0x338] sm:$0xf0] %v2370
      %v2387 = vld [vmem:[#allocation2 + $0x4] sm:$0xff]
      %v2388 = vld [vmem:[#allocation2 + $0xc] sm:$0xff]
      %v2389 = vld [vmem:[#allocation2 + $0x14] sm:$0xff]
      %v2390 = vld [vmem:[#allocation2 + $0x1c] sm:$0xff]
      %v2391 = vld [vmem:[#allocation2 + $0x24] sm:$0xf]
      %2397 = vst [vmem:[#allocation1] ss:$2 sm:$0xff] %v2387
      %s2398 = scalar_lea.vmem [#allocation1], 16
      %2399 = vst [vmem:[%s2398] ss:$2 sm:$0xff] %v2388
      %s2400 = scalar_lea.vmem [#allocation1], 32
      %2401 = vst [vmem:[%s2400] ss:$2 sm:$0xff] %v2389
      %s2402 = scalar_lea.vmem [#allocation1], 48
      %2403 = vst [vmem:[%s2402] ss:$2 sm:$0xff] %v2390
      %v2404 = vld.sshfl [vmem:[#allocation1] sm:$0xff pattern:$0x75316420]
      %v2405 = vld.sshfl [vmem:[#allocation1 + $0x8] sm:$0xff pattern:$0x75316420]
      %v2406 = vld.sshfl [vmem:[#allocation1 + $0x10] sm:$0xff pattern:$0x75316420]
      %v2407 = vld.sshfl [vmem:[#allocation1 + $0x18] sm:$0xff pattern:$0x75316420]
      %v2408 = vld.sshfl [vmem:[#allocation1 + $0x20] sm:$0xff pattern:$0x75316420]
      %v2409 = vld.sshfl [vmem:[#allocation1 + $0x28] sm:$0xff pattern:$0x75316420]
      %v2410 = vld.sshfl [vmem:[#allocation1 + $0x30] sm:$0xff pattern:$0x75316420]
      %v2411 = vld.sshfl [vmem:[#allocation1 + $0x38] sm:$0xff pattern:$0x75316420]
      %2412 = vst [vmem:[#allocation1] ss:$2 sm:$0xff] %v2391
      %v2413 = vld.sshfl [vmem:[#allocation1] sm:$0xff pattern:$0x75316420]
      %2414 = vrot.lane.b32.xlu0 %v2404, 17
      %v2415 = vpop.permute.xlu0 %2414
      %2416 = vrot.lane.b32.xlu0 %v2405, 17
      %v2417 = vpop.permute.xlu0 %2416
      %2418 = vrot.lane.b32.xlu0 %v2406, 17
      %v2419 = vpop.permute.xlu0 %2418
      %2420 = vrot.lane.b32.xlu0 %v2407, 17
      %v2421 = vpop.permute.xlu0 %2420
      %2422 = vrot.lane.b32.xlu0 %v2408, 17
      %v2423 = vpop.permute.xlu0 %2422
      %2424 = vrot.lane.b32.xlu0 %v2409, 17
      %v2425 = vpop.permute.xlu0 %2424
      %2426 = vrot.lane.b32.xlu0 %v2410, 17
      %v2427 = vpop.permute.xlu0 %2426
      %2428 = vrot.lane.b32.xlu0 %v2411, 17
      %v2429 = vpop.permute.xlu0 %2428
      %2430 = vrot.lane.b32.xlu0 %v2413, 17
      %v2431 = vpop.permute.xlu0 %2430
      %vm2432 = vcmask 138240
      %v2433 = vsel %vm2432, %v2415, %v2417
      %v2434 = vsel %vm2432, %v2417, %v2419
      %v2435 = vsel %vm2432, %v2419, %v2421
      %v2436 = vsel %vm2432, %v2421, %v2423
      %v2437 = vsel %vm2432, %v2423, %v2425
      %v2438 = vsel %vm2432, %v2425, %v2427
      %v2439 = vsel %vm2432, %v2427, %v2429
      %v2440 = vsel %vm2432, %v2429, %v2431
      %2449 = vst [vmem:[#allocation3 + $0x340] sm:$0xf] %v2433
      %2450 = vst [vmem:[#allocation3 + $0x348] sm:$0xf] %v2434
      %2451 = vst [vmem:[#allocation3 + $0x350] sm:$0xf] %v2435
      %2452 = vst [vmem:[#allocation3 + $0x358] sm:$0xf] %v2436
      %2453 = vst [vmem:[#allocation3 + $0x360] sm:$0xf] %v2437
      %2454 = vst [vmem:[#allocation3 + $0x368] sm:$0xf] %v2438
      %2455 = vst [vmem:[#allocation3 + $0x370] sm:$0xf] %v2439
      %2456 = vst [vmem:[#allocation3 + $0x378] sm:$0xf] %v2440
      %v2457 = vld [vmem:[%s3] sm:$0xf]
      %v2458 = vld [vmem:[#allocation3] sm:$0xff]
      %v2459 = vld [vmem:[#allocation3 + $0x8] sm:$0xff]
      %v2460 = vld [vmem:[#allocation3 + $0x10] sm:$0xff]
      %v2461 = vld [vmem:[#allocation3 + $0x18] sm:$0xff]
      %v2462 = vld [vmem:[#allocation3 + $0x20] sm:$0xff]
      %v2463 = vld [vmem:[#allocation3 + $0x28] sm:$0xff]
      %v2464 = vld [vmem:[#allocation3 + $0x30] sm:$0xff]
      %v2465 = vld [vmem:[#allocation3 + $0x38] sm:$0xff]
      %v2466 = vld [vmem:[#allocation3 + $0x40] sm:$0xff]
      %v2467 = vld [vmem:[#allocation3 + $0x48] sm:$0xff]
      %v2468 = vld [vmem:[#allocation3 + $0x50] sm:$0xff]
      %v2469 = vld [vmem:[#allocation3 + $0x58] sm:$0xff]
      %v2470 = vld [vmem:[#allocation3 + $0x60] sm:$0xff]
      %v2471 = vld [vmem:[#allocation3 + $0x68] sm:$0xff]
      %v2472 = vld [vmem:[#allocation3 + $0x70] sm:$0xff]
      %v2473 = vld [vmem:[#allocation3 + $0x78] sm:$0xff]
      %v2474 = vld [vmem:[#allocation3 + $0x80] sm:$0xff]
      %v2475 = vld [vmem:[#allocation3 + $0x88] sm:$0xff]
      %v2476 = vld [vmem:[#allocation3 + $0x90] sm:$0xff]
      %v2477 = vld [vmem:[#allocation3 + $0x98] sm:$0xff]
      %v2478 = vld [vmem:[#allocation3 + $0xa0] sm:$0xff]
      %v2479 = vld [vmem:[#allocation3 + $0xa8] sm:$0xff]
      %v2480 = vld [vmem:[#allocation3 + $0xb0] sm:$0xff]
      %v2481 = vld [vmem:[#allocation3 + $0xb8] sm:$0xff]
      %v2482 = vld [vmem:[#allocation3 + $0xc0] sm:$0xff]
      %v2483 = vld [vmem:[#allocation3 + $0xc8] sm:$0xff]
      %v2484 = vld [vmem:[#allocation3 + $0xd0] sm:$0xff]
      %v2485 = vld [vmem:[#allocation3 + $0xd8] sm:$0xff]
      %v2486 = vld [vmem:[#allocation3 + $0xe0] sm:$0xff]
      %v2487 = vld [vmem:[#allocation3 + $0xe8] sm:$0xff]
      %v2488 = vld [vmem:[#allocation3 + $0xf0] sm:$0xff]
      %v2489 = vld [vmem:[#allocation3 + $0xf8] sm:$0xff]
      %v2490 = vld [vmem:[#allocation3 + $0x100] sm:$0xff]
      %v2491 = vld [vmem:[#allocation3 + $0x108] sm:$0xff]
      %v2492 = vld [vmem:[#allocation3 + $0x110] sm:$0xff]
      %v2493 = vld [vmem:[#allocation3 + $0x118] sm:$0xff]
      %v2494 = vld [vmem:[#allocation3 + $0x120] sm:$0xff]
      %v2495 = vld [vmem:[#allocation3 + $0x128] sm:$0xff]
      %v2496 = vld [vmem:[#allocation3 + $0x130] sm:$0xff]
      %v2497 = vld [vmem:[#allocation3 + $0x138] sm:$0xff]
      %v2498 = vld [vmem:[#allocation3 + $0x140] sm:$0xff]
      %v2499 = vld [vmem:[#allocation3 + $0x148] sm:$0xff]
      %v2500 = vld [vmem:[#allocation3 + $0x150] sm:$0xff]
      %v2501 = vld [vmem:[#allocation3 + $0x158] sm:$0xff]
      %v2502 = vld [vmem:[#allocation3 + $0x160] sm:$0xff]
      %v2503 = vld [vmem:[#allocation3 + $0x168] sm:$0xff]
      %v2504 = vld [vmem:[#allocation3 + $0x170] sm:$0xff]
      %v2505 = vld [vmem:[#allocation3 + $0x178] sm:$0xff]
      %v2506 = vld [vmem:[#allocation3 + $0x180] sm:$0xff]
      %v2507 = vld [vmem:[#allocation3 + $0x188] sm:$0xff]
      %v2508 = vld [vmem:[#allocation3 + $0x190] sm:$0xff]
      %v2509 = vld [vmem:[#allocation3 + $0x198] sm:$0xff]
      %v2510 = vld [vmem:[#allocation3 + $0x1a0] sm:$0xff]
      %v2511 = vld [vmem:[#allocation3 + $0x1a8] sm:$0xff]
      %v2512 = vld [vmem:[#allocation3 + $0x1b0] sm:$0xff]
      %v2513 = vld [vmem:[#allocation3 + $0x1b8] sm:$0xff]
      %v2514 = vld [vmem:[#allocation3 + $0x1c0] sm:$0xff]
      %v2515 = vld [vmem:[#allocation3 + $0x1c8] sm:$0xff]
      %v2516 = vld [vmem:[#allocation3 + $0x1d0] sm:$0xff]
      %v2517 = vld [vmem:[#allocation3 + $0x1d8] sm:$0xff]
      %v2518 = vld [vmem:[#allocation3 + $0x1e0] sm:$0xff]
      %v2519 = vld [vmem:[#allocation3 + $0x1e8] sm:$0xff]
      %v2520 = vld [vmem:[#allocation3 + $0x1f0] sm:$0xff]
      %v2521 = vld [vmem:[#allocation3 + $0x1f8] sm:$0xff]
      %v2522 = vld [vmem:[#allocation3 + $0x200] sm:$0xff]
      %v2523 = vld [vmem:[#allocation3 + $0x208] sm:$0xff]
      %v2524 = vld [vmem:[#allocation3 + $0x210] sm:$0xff]
      %v2525 = vld [vmem:[#allocation3 + $0x218] sm:$0xff]
      %v2526 = vld [vmem:[#allocation3 + $0x220] sm:$0xff]
      %v2527 = vld [vmem:[#allocation3 + $0x228] sm:$0xff]
      %v2528 = vld [vmem:[#allocation3 + $0x230] sm:$0xff]
      %v2529 = vld [vmem:[#allocation3 + $0x238] sm:$0xff]
      %v2530 = vld [vmem:[#allocation3 + $0x240] sm:$0xff]
      %v2531 = vld [vmem:[#allocation3 + $0x248] sm:$0xff]
      %v2532 = vld [vmem:[#allocation3 + $0x250] sm:$0xff]
      %v2533 = vld [vmem:[#allocation3 + $0x258] sm:$0xff]
      %v2534 = vld [vmem:[#allocation3 + $0x260] sm:$0xff]
      %v2535 = vld [vmem:[#allocation3 + $0x268] sm:$0xff]
      %v2536 = vld [vmem:[#allocation3 + $0x270] sm:$0xff]
      %v2537 = vld [vmem:[#allocation3 + $0x278] sm:$0xff]
      %v2538 = vld [vmem:[#allocation3 + $0x280] sm:$0xff]
      %v2539 = vld [vmem:[#allocation3 + $0x288] sm:$0xff]
      %v2540 = vld [vmem:[#allocation3 + $0x290] sm:$0xff]
      %v2541 = vld [vmem:[#allocation3 + $0x298] sm:$0xff]
      %v2542 = vld [vmem:[#allocation3 + $0x2a0] sm:$0xff]
      %v2543 = vld [vmem:[#allocation3 + $0x2a8] sm:$0xff]
      %v2544 = vld [vmem:[#allocation3 + $0x2b0] sm:$0xff]
      %v2545 = vld [vmem:[#allocation3 + $0x2b8] sm:$0xff]
      %v2546 = vld [vmem:[#allocation3 + $0x2c0] sm:$0xff]
      %v2547 = vld [vmem:[#allocation3 + $0x2c8] sm:$0xff]
      %v2548 = vld [vmem:[#allocation3 + $0x2d0] sm:$0xff]
      %v2549 = vld [vmem:[#allocation3 + $0x2d8] sm:$0xff]
      %v2550 = vld [vmem:[#allocation3 + $0x2e0] sm:$0xff]
      %v2551 = vld [vmem:[#allocation3 + $0x2e8] sm:$0xff]
      %v2552 = vld [vmem:[#allocation3 + $0x2f0] sm:$0xff]
      %v2553 = vld [vmem:[#allocation3 + $0x2f8] sm:$0xff]
      %v2554 = vld [vmem:[#allocation3 + $0x300] sm:$0xff]
      %v2555 = vld [vmem:[#allocation3 + $0x308] sm:$0xff]
      %v2556 = vld [vmem:[#allocation3 + $0x310] sm:$0xff]
      %v2557 = vld [vmem:[#allocation3 + $0x318] sm:$0xff]
      %v2558 = vld [vmem:[#allocation3 + $0x320] sm:$0xff]
      %v2559 = vld [vmem:[#allocation3 + $0x328] sm:$0xff]
      %v2560 = vld [vmem:[#allocation3 + $0x330] sm:$0xff]
      %v2561 = vld [vmem:[#allocation3 + $0x338] sm:$0xff]
      %v2562 = vld [vmem:[#allocation3 + $0x340] sm:$0xf]
      %v2563 = vld [vmem:[#allocation3 + $0x348] sm:$0xf]
      %v2564 = vld [vmem:[#allocation3 + $0x350] sm:$0xf]
      %v2565 = vld [vmem:[#allocation3 + $0x358] sm:$0xf]
      %v2566 = vld [vmem:[#allocation3 + $0x360] sm:$0xf]
      %v2567 = vld [vmem:[#allocation3 + $0x368] sm:$0xf]
      %v2568 = vld [vmem:[#allocation3 + $0x370] sm:$0xf]
      %v2569 = vld [vmem:[#allocation3 + $0x378] sm:$0xf]
      %v2570 = vld [vmem:[%s4] sm:$0xf]
      %2572 = vset.pattern.permute.xlu0 0
      %2573 = vperm.xlu0 %2572, %v2570
      %v2574 = vpop.permute.xlu0 %2573
      %vm2576 = vcmask 883712
      %v2578 = vsel %vm2576, %v2457, 0
      %v2581 = vsel %vm572, %v2562, 0
      %v2584 = vsel %vm572, %v2563, 0
      %v2587 = vsel %vm572, %v2564, 0
      %v2590 = vsel %vm572, %v2565, 0
      %v2593 = vsel %vm572, %v2566, 0
      %v2596 = vsel %vm572, %v2567, 0
      %v2599 = vsel %vm572, %v2568, 0
      %v2602 = vsel %vm572, %v2569, 0
      %2604 = vmatpush.msra.mxu0 0.0
      %2605 = vmatpush.msra.mxu0 0.0
      %2606 = vmatpush.msra.mxu0 %v2581
      %2607 = vmatpush.msra.mxu0 %v2554
      %2608 = vmatpush.msra.mxu0 %v2546
      %2609 = vmatpush.msra.mxu0 %v2538
      %2610 = vmatpush.msra.mxu0 %v2530
      %2611 = vmatpush.msra.mxu0 %v2522
      %2612 = vmatpush.msra.mxu0 %v2514
      %2613 = vmatpush.msra.mxu0 %v2506
      %2614 = vmatpush.msra.mxu0 %v2498
      %2615 = vmatpush.msra.mxu0 %v2490
      %2616 = vmatpush.msra.mxu0 %v2482
      %2617 = vmatpush.msra.mxu0 %v2474
      %2618 = vmatpush.msra.mxu0 %v2466
      %2619 = vmatpush.msra.mxu0 %v2458
      %2620 = vmatmul.f32.gmra.mxu0 %v2578
      %v2621 = vpop.f32.mrf.mxu0
      %v2622 = vadd.f32 %v2574, %v2621
      %2623 = vdwg.mxu0
      %2624 = vmatpush.msra.mxu0 0.0
      %2625 = vmatpush.msra.mxu0 0.0
      %2626 = vmatpush.msra.mxu0 %v2584
      %2627 = vmatpush.msra.mxu0 %v2555
      %2628 = vmatpush.msra.mxu0 %v2547
      %2629 = vmatpush.msra.mxu0 %v2539
      %2630 = vmatpush.msra.mxu0 %v2531
      %2631 = vmatpush.msra.mxu0 %v2523
      %2632 = vmatpush.msra.mxu0 %v2515
      %2633 = vmatpush.msra.mxu0 %v2507
      %2634 = vmatpush.msra.mxu0 %v2499
      %2635 = vmatpush.msra.mxu0 %v2491
      %2636 = vmatpush.msra.mxu0 %v2483
      %2637 = vmatpush.msra.mxu0 %v2475
      %2638 = vmatpush.msra.mxu0 %v2467
      %2639 = vmatpush.msra.mxu0 %v2459
      %2640 = vmatmul.f32.gmra.mxu0 %v2578
      %v2641 = vpop.f32.mrf.mxu0
      %v2642 = vadd.f32 %v2574, %v2641
      %2643 = vdwg.mxu0
      %2644 = vmatpush.msra.mxu0 0.0
      %2645 = vmatpush.msra.mxu0 0.0
      %2646 = vmatpush.msra.mxu0 %v2587
      %2647 = vmatpush.msra.mxu0 %v2556
      %2648 = vmatpush.msra.mxu0 %v2548
      %2649 = vmatpush.msra.mxu0 %v2540
      %2650 = vmatpush.msra.mxu0 %v2532
      %2651 = vmatpush.msra.mxu0 %v2524
      %2652 = vmatpush.msra.mxu0 %v2516
      %2653 = vmatpush.msra.mxu0 %v2508
      %2654 = vmatpush.msra.mxu0 %v2500
      %2655 = vmatpush.msra.mxu0 %v2492
      %2656 = vmatpush.msra.mxu0 %v2484
      %2657 = vmatpush.msra.mxu0 %v2476
      %2658 = vmatpush.msra.mxu0 %v2468
      %2659 = vmatpush.msra.mxu0 %v2460
      %2660 = vmatmul.f32.gmra.mxu0 %v2578
      %v2661 = vpop.f32.mrf.mxu0
      %v2662 = vadd.f32 %v2574, %v2661
      %2663 = vdwg.mxu0
      %2664 = vmatpush.msra.mxu0 0.0
      %2665 = vmatpush.msra.mxu0 0.0
      %2666 = vmatpush.msra.mxu0 %v2590
      %2667 = vmatpush.msra.mxu0 %v2557
      %2668 = vmatpush.msra.mxu0 %v2549
      %2669 = vmatpush.msra.mxu0 %v2541
      %2670 = vmatpush.msra.mxu0 %v2533
      %2671 = vmatpush.msra.mxu0 %v2525
      %2672 = vmatpush.msra.mxu0 %v2517
      %2673 = vmatpush.msra.mxu0 %v2509
      %2674 = vmatpush.msra.mxu0 %v2501
      %2675 = vmatpush.msra.mxu0 %v2493
      %2676 = vmatpush.msra.mxu0 %v2485
      %2677 = vmatpush.msra.mxu0 %v2477
      %2678 = vmatpush.msra.mxu0 %v2469
      %2679 = vmatpush.msra.mxu0 %v2461
      %2680 = vmatmul.f32.gmra.mxu0 %v2578
      %v2681 = vpop.f32.mrf.mxu0
      %v2682 = vadd.f32 %v2574, %v2681
      %2683 = vdwg.mxu0
      %2684 = vmatpush.msra.mxu0 0.0
      %2685 = vmatpush.msra.mxu0 0.0
      %2686 = vmatpush.msra.mxu0 %v2593
      %2687 = vmatpush.msra.mxu0 %v2558
      %2688 = vmatpush.msra.mxu0 %v2550
      %2689 = vmatpush.msra.mxu0 %v2542
      %2690 = vmatpush.msra.mxu0 %v2534
      %2691 = vmatpush.msra.mxu0 %v2526
      %2692 = vmatpush.msra.mxu0 %v2518
      %2693 = vmatpush.msra.mxu0 %v2510
      %2694 = vmatpush.msra.mxu0 %v2502
      %2695 = vmatpush.msra.mxu0 %v2494
      %2696 = vmatpush.msra.mxu0 %v2486
      %2697 = vmatpush.msra.mxu0 %v2478
      %2698 = vmatpush.msra.mxu0 %v2470
      %2699 = vmatpush.msra.mxu0 %v2462
      %2700 = vmatmul.f32.gmra.mxu0 %v2578
      %v2701 = vpop.f32.mrf.mxu0
      %v2702 = vadd.f32 %v2574, %v2701
      %2703 = vdwg.mxu0
      %2704 = vmatpush.msra.mxu0 0.0
      %2705 = vmatpush.msra.mxu0 0.0
      %2706 = vmatpush.msra.mxu0 %v2596
      %2707 = vmatpush.msra.mxu0 %v2559
      %2708 = vmatpush.msra.mxu0 %v2551
      %2709 = vmatpush.msra.mxu0 %v2543
      %2710 = vmatpush.msra.mxu0 %v2535
      %2711 = vmatpush.msra.mxu0 %v2527
      %2712 = vmatpush.msra.mxu0 %v2519
      %2713 = vmatpush.msra.mxu0 %v2511
      %2714 = vmatpush.msra.mxu0 %v2503
      %2715 = vmatpush.msra.mxu0 %v2495
      %2716 = vmatpush.msra.mxu0 %v2487
      %2717 = vmatpush.msra.mxu0 %v2479
      %2718 = vmatpush.msra.mxu0 %v2471
      %2719 = vmatpush.msra.mxu0 %v2463
      %2720 = vmatmul.f32.gmra.mxu0 %v2578
      %v2721 = vpop.f32.mrf.mxu0
      %v2722 = vadd.f32 %v2574, %v2721
      %2723 = vdwg.mxu0
      %2724 = vmatpush.msra.mxu0 0.0
      %2725 = vmatpush.msra.mxu0 0.0
      %2726 = vmatpush.msra.mxu0 %v2599
      %2727 = vmatpush.msra.mxu0 %v2560
      %2728 = vmatpush.msra.mxu0 %v2552
      %2729 = vmatpush.msra.mxu0 %v2544
      %2730 = vmatpush.msra.mxu0 %v2536
      %2731 = vmatpush.msra.mxu0 %v2528
      %2732 = vmatpush.msra.mxu0 %v2520
      %2733 = vmatpush.msra.mxu0 %v2512
      %2734 = vmatpush.msra.mxu0 %v2504
      %2735 = vmatpush.msra.mxu0 %v2496
      %2736 = vmatpush.msra.mxu0 %v2488
      %2737 = vmatpush.msra.mxu0 %v2480
      %2738 = vmatpush.msra.mxu0 %v2472
      %2739 = vmatpush.msra.mxu0 %v2464
      %2740 = vmatmul.f32.gmra.mxu0 %v2578
      %v2741 = vpop.f32.mrf.mxu0
      %v2742 = vadd.f32 %v2574, %v2741
      %2743 = vdwg.mxu0
      %2744 = vmatpush.msra.mxu0 0.0
      %2745 = vmatpush.msra.mxu0 0.0
      %2746 = vmatpush.msra.mxu0 %v2602
      %2747 = vmatpush.msra.mxu0 %v2561
      %2748 = vmatpush.msra.mxu0 %v2553
      %2749 = vmatpush.msra.mxu0 %v2545
      %2750 = vmatpush.msra.mxu0 %v2537
      %2751 = vmatpush.msra.mxu0 %v2529
      %2752 = vmatpush.msra.mxu0 %v2521
      %2753 = vmatpush.msra.mxu0 %v2513
      %2754 = vmatpush.msra.mxu0 %v2505
      %2755 = vmatpush.msra.mxu0 %v2497
      %2756 = vmatpush.msra.mxu0 %v2489
      %2757 = vmatpush.msra.mxu0 %v2481
      %2758 = vmatpush.msra.mxu0 %v2473
      %2759 = vmatpush.msra.mxu0 %v2465
      %2760 = vmatmul.f32.gmra.mxu0 %v2578
      %v2761 = vpop.f32.mrf.mxu0
      %v2762 = vadd.f32 %v2574, %v2761
      %2763 = vdwg.mxu0
      %v2764 = vmax.f32 %v2622, 0.0
      %v2765 = vmax.f32 %v2642, 0.0
      %v2766 = vmax.f32 %v2662, 0.0
      %v2767 = vmax.f32 %v2682, 0.0
      %v2768 = vmax.f32 %v2702, 0.0
      %v2769 = vmax.f32 %v2722, 0.0
      %v2770 = vmax.f32 %v2742, 0.0
      %v2771 = vmax.f32 %v2762, 0.0
      %v2772 = vld [vmem:[%s5] sm:$0xf]
      %v2773 = vld [vmem:[%s6] sm:$0xf]
      %2775 = vset.pattern.permute.xlu0 0
      %2776 = vperm.xlu0 %2775, %v2773
      %v2777 = vpop.permute.xlu0 %2776
      %vm2779 = vcmask 31744
      %v2781 = vsel %vm2779, %v2772, 0
      %v2784 = vsel %vm572, %v2764, 0
      %v2787 = vsel %vm572, %v2765, 0
      %v2790 = vsel %vm572, %v2766, 0
      %v2793 = vsel %vm572, %v2767, 0
      %v2796 = vsel %vm572, %v2768, 0
      %v2799 = vsel %vm572, %v2769, 0
      %v2802 = vsel %vm572, %v2770, 0
      %v2805 = vsel %vm572, %v2771, 0
      %2807 = vmatpush.msra.mxu0 0.0
      %2808 = vmatpush.msra.mxu0 0.0
      %2809 = vmatpush.msra.mxu0 0.0
      %2810 = vmatpush.msra.mxu0 0.0
      %2811 = vmatpush.msra.mxu0 0.0
      %2812 = vmatpush.msra.mxu0 0.0
      %2813 = vmatpush.msra.mxu0 0.0
      %2814 = vmatpush.msra.mxu0 0.0
      %2815 = vmatpush.msra.mxu0 0.0
      %2816 = vmatpush.msra.mxu0 0.0
      %2817 = vmatpush.msra.mxu0 0.0
      %2818 = vmatpush.msra.mxu0 0.0
      %2819 = vmatpush.msra.mxu0 0.0
      %2820 = vmatpush.msra.mxu0 0.0
      %2821 = vmatpush.msra.mxu0 0.0
      %2822 = vmatpush.msra.mxu0 %v2784
      %2823 = vmatmul.f32.gmra.mxu0 %v2781
      %v2824 = vpop.f32.mrf.mxu0
      %v2825 = vadd.f32 %v2777, %v2824
      %2826 = vdwg.mxu0
      %2827 = vmatpush.msra.mxu0 0.0
      %2828 = vmatpush.msra.mxu0 0.0
      %2829 = vmatpush.msra.mxu0 0.0
      %2830 = vmatpush.msra.mxu0 0.0
      %2831 = vmatpush.msra.mxu0 0.0
      %2832 = vmatpush.msra.mxu0 0.0
      %2833 = vmatpush.msra.mxu0 0.0
      %2834 = vmatpush.msra.mxu0 0.0
      %2835 = vmatpush.msra.mxu0 0.0
      %2836 = vmatpush.msra.mxu0 0.0
      %2837 = vmatpush.msra.mxu0 0.0
      %2838 = vmatpush.msra.mxu0 0.0
      %2839 = vmatpush.msra.mxu0 0.0
      %2840 = vmatpush.msra.mxu0 0.0
      %2841 = vmatpush.msra.mxu0 0.0
      %2842 = vmatpush.msra.mxu0 %v2787
      %2843 = vmatmul.f32.gmra.mxu0 %v2781
      %v2844 = vpop.f32.mrf.mxu0
      %v2845 = vadd.f32 %v2777, %v2844
      %2846 = vdwg.mxu0
      %2847 = vmatpush.msra.mxu0 0.0
      %2848 = vmatpush.msra.mxu0 0.0
      %2849 = vmatpush.msra.mxu0 0.0
      %2850 = vmatpush.msra.mxu0 0.0
      %2851 = vmatpush.msra.mxu0 0.0
      %2852 = vmatpush.msra.mxu0 0.0
      %2853 = vmatpush.msra.mxu0 0.0
      %2854 = vmatpush.msra.mxu0 0.0
      %2855 = vmatpush.msra.mxu0 0.0
      %2856 = vmatpush.msra.mxu0 0.0
      %2857 = vmatpush.msra.mxu0 0.0
      %2858 = vmatpush.msra.mxu0 0.0
      %2859 = vmatpush.msra.mxu0 0.0
      %2860 = vmatpush.msra.mxu0 0.0
      %2861 = vmatpush.msra.mxu0 0.0
      %2862 = vmatpush.msra.mxu0 %v2790
      %2863 = vmatmul.f32.gmra.mxu0 %v2781
      %v2864 = vpop.f32.mrf.mxu0
      %v2865 = vadd.f32 %v2777, %v2864
      %2866 = vdwg.mxu0
      %2867 = vmatpush.msra.mxu0 0.0
      %2868 = vmatpush.msra.mxu0 0.0
      %2869 = vmatpush.msra.mxu0 0.0
      %2870 = vmatpush.msra.mxu0 0.0
      %2871 = vmatpush.msra.mxu0 0.0
      %2872 = vmatpush.msra.mxu0 0.0
      %2873 = vmatpush.msra.mxu0 0.0
      %2874 = vmatpush.msra.mxu0 0.0
      %2875 = vmatpush.msra.mxu0 0.0
      %2876 = vmatpush.msra.mxu0 0.0
      %2877 = vmatpush.msra.mxu0 0.0
      %2878 = vmatpush.msra.mxu0 0.0
      %2879 = vmatpush.msra.mxu0 0.0
      %2880 = vmatpush.msra.mxu0 0.0
      %2881 = vmatpush.msra.mxu0 0.0
      %2882 = vmatpush.msra.mxu0 %v2793
      %2883 = vmatmul.f32.gmra.mxu0 %v2781
      %v2884 = vpop.f32.mrf.mxu0
      %v2885 = vadd.f32 %v2777, %v2884
      %2886 = vdwg.mxu0
      %2887 = vmatpush.msra.mxu0 0.0
      %2888 = vmatpush.msra.mxu0 0.0
      %2889 = vmatpush.msra.mxu0 0.0
      %2890 = vmatpush.msra.mxu0 0.0
      %2891 = vmatpush.msra.mxu0 0.0
      %2892 = vmatpush.msra.mxu0 0.0
      %2893 = vmatpush.msra.mxu0 0.0
      %2894 = vmatpush.msra.mxu0 0.0
      %2895 = vmatpush.msra.mxu0 0.0
      %2896 = vmatpush.msra.mxu0 0.0
      %2897 = vmatpush.msra.mxu0 0.0
      %2898 = vmatpush.msra.mxu0 0.0
      %2899 = vmatpush.msra.mxu0 0.0
      %2900 = vmatpush.msra.mxu0 0.0
      %2901 = vmatpush.msra.mxu0 0.0
      %2902 = vmatpush.msra.mxu0 %v2796
      %2903 = vmatmul.f32.gmra.mxu0 %v2781
      %v2904 = vpop.f32.mrf.mxu0
      %v2905 = vadd.f32 %v2777, %v2904
      %2906 = vdwg.mxu0
      %2907 = vmatpush.msra.mxu0 0.0
      %2908 = vmatpush.msra.mxu0 0.0
      %2909 = vmatpush.msra.mxu0 0.0
      %2910 = vmatpush.msra.mxu0 0.0
      %2911 = vmatpush.msra.mxu0 0.0
      %2912 = vmatpush.msra.mxu0 0.0
      %2913 = vmatpush.msra.mxu0 0.0
      %2914 = vmatpush.msra.mxu0 0.0
      %2915 = vmatpush.msra.mxu0 0.0
      %2916 = vmatpush.msra.mxu0 0.0
      %2917 = vmatpush.msra.mxu0 0.0
      %2918 = vmatpush.msra.mxu0 0.0
      %2919 = vmatpush.msra.mxu0 0.0
      %2920 = vmatpush.msra.mxu0 0.0
      %2921 = vmatpush.msra.mxu0 0.0
      %2922 = vmatpush.msra.mxu0 %v2799
      %2923 = vmatmul.f32.gmra.mxu0 %v2781
      %v2924 = vpop.f32.mrf.mxu0
      %v2925 = vadd.f32 %v2777, %v2924
      %2926 = vdwg.mxu0
      %2927 = vmatpush.msra.mxu0 0.0
      %2928 = vmatpush.msra.mxu0 0.0
      %2929 = vmatpush.msra.mxu0 0.0
      %2930 = vmatpush.msra.mxu0 0.0
      %2931 = vmatpush.msra.mxu0 0.0
      %2932 = vmatpush.msra.mxu0 0.0
      %2933 = vmatpush.msra.mxu0 0.0
      %2934 = vmatpush.msra.mxu0 0.0
      %2935 = vmatpush.msra.mxu0 0.0
      %2936 = vmatpush.msra.mxu0 0.0
      %2937 = vmatpush.msra.mxu0 0.0
      %2938 = vmatpush.msra.mxu0 0.0
      %2939 = vmatpush.msra.mxu0 0.0
      %2940 = vmatpush.msra.mxu0 0.0
      %2941 = vmatpush.msra.mxu0 0.0
      %2942 = vmatpush.msra.mxu0 %v2802
      %2943 = vmatmul.f32.gmra.mxu0 %v2781
      %v2944 = vpop.f32.mrf.mxu0
      %v2945 = vadd.f32 %v2777, %v2944
      %2946 = vdwg.mxu0
      %2947 = vmatpush.msra.mxu0 0.0
      %2948 = vmatpush.msra.mxu0 0.0
      %2949 = vmatpush.msra.mxu0 0.0
      %2950 = vmatpush.msra.mxu0 0.0
      %2951 = vmatpush.msra.mxu0 0.0
      %2952 = vmatpush.msra.mxu0 0.0
      %2953 = vmatpush.msra.mxu0 0.0
      %2954 = vmatpush.msra.mxu0 0.0
      %2955 = vmatpush.msra.mxu0 0.0
      %2956 = vmatpush.msra.mxu0 0.0
      %2957 = vmatpush.msra.mxu0 0.0
      %2958 = vmatpush.msra.mxu0 0.0
      %2959 = vmatpush.msra.mxu0 0.0
      %2960 = vmatpush.msra.mxu0 0.0
      %2961 = vmatpush.msra.mxu0 0.0
      %2962 = vmatpush.msra.mxu0 %v2805
      %2963 = vmatmul.f32.gmra.mxu0 %v2781
      %v2964 = vpop.f32.mrf.mxu0
      %v2965 = vadd.f32 %v2777, %v2964
      %2966 = vdwg.mxu0
      %v2967 = vld [vmem:[%s289] sm:$0xf]
      %v2968 = vld [vmem:[%s289 + $0x8] sm:$0xf]
      %v2969 = vld [vmem:[%s289 + $0x10] sm:$0xf]
      %v2970 = vld [vmem:[%s289 + $0x18] sm:$0xf]
      %v2971 = vld [vmem:[%s289 + $0x20] sm:$0xf]
      %v2972 = vld [vmem:[%s289 + $0x28] sm:$0xf]
      %v2973 = vld [vmem:[%s289 + $0x30] sm:$0xf]
      %v2974 = vld [vmem:[%s289 + $0x38] sm:$0xf]
      %v2975 = vadd.f32 %v2825, %v2967
      %v2976 = vadd.f32 %v2845, %v2968
      %v2977 = vadd.f32 %v2865, %v2969
      %v2978 = vadd.f32 %v2885, %v2970
      %v2979 = vadd.f32 %v2905, %v2971
      %v2980 = vadd.f32 %v2925, %v2972
      %v2981 = vadd.f32 %v2945, %v2973
      %v2982 = vadd.f32 %v2965, %v2974
      %v2983 = vmax.f32 %v2975, 0.0
      %v2984 = vmax.f32 %v2976, 0.0
      %v2985 = vmax.f32 %v2977, 0.0
      %v2986 = vmax.f32 %v2978, 0.0
      %v2987 = vmax.f32 %v2979, 0.0
      %v2988 = vmax.f32 %v2980, 0.0
      %v2989 = vmax.f32 %v2981, 0.0
      %v2990 = vmax.f32 %v2982, 0.0
      %v2999 = vrot.slane %v2984, 4
      %v3000 = vrot.slane %v2986, 4
      %v3001 = vrot.slane %v2988, 4
      %v3002 = vrot.slane %v2990, 4
      %v3003 = vsel %vm572, %v2983, %v2999
      %v3004 = vsel %vm572, %v2985, %v3000
      %v3005 = vsel %vm572, %v2987, %v3001
      %v3006 = vsel %vm572, %v2989, %v3002
      %3011 = vst [vmem:[%s300] sm:$0xff] %v3003
      %3012 = vst [vmem:[%s300 + $0x8] sm:$0xff] %v3004
      %3013 = vst [vmem:[%s300 + $0x10] sm:$0xff] %v3005
      %3014 = vst [vmem:[%s300 + $0x18] sm:$0xff] %v3006
      %s3015 = smul.u32 8, %s18
      %p3016 = scmp.lt.s32.totalorder %s3015, 15
      %s3017 = scalar_select %p3016, %s3015, 15
      %s3018 = smul.addr %s3017, 4
      %s3019 = scalar_lea.vmem %s7, %s3018
      // Predicated region
      $region49: #{bottleneck_forward.1} parent=47 // pred_check
        %p3020 = pneg %p193
      $region50: #{bottleneck_forward.1} parent=47 // pred_check_branch
        %3022 = sbr.rel (%p3020) target = $region52
      $region51: #{bottleneck_forward.1} parent=47 // pred_region
        %s3023 = smul.u32 8, %s18
      $region52: #{bottleneck_forward.1} parent=47 // pred_fallthru
        _
    $region48: #{bottleneck_forward.1} parent=5 // pred_fallthru
      _
    %p3024 = scmp.le.s32.totalorder 2, %s13
    // Predicated region
    $region53: #{bottleneck_forward.1} parent=5 // pred_check
      %p3025 = pneg %p3024
    $region54: #{bottleneck_forward.1} parent=5 // pred_check_branch
      %3027 = sbr.rel (%p3025) target = $region56
    $region55: #{bottleneck_forward.1} parent=5 // pred_region
      %s3028 = ssub.s32 %s13, 2
      // Predicated region
      $region57: #{bottleneck_forward.1} parent=55 // pred_check
        %p3029 = pneg %p199
      $region58: #{bottleneck_forward.1} parent=55 // pred_check_branch
        %3031 = sbr.rel (%p3029) target = $region60
      $region59: #{bottleneck_forward.1} parent=55 // pred_region
        %s3032 = smul.u32 8, %s19
        %p3033 = scmp.lt.s32.totalorder %s3032, 15
        %s3034 = scalar_select %p3033, %s3032, 15
        %s3035 = smul.addr %s3034, 4
        %s3036 = scalar_lea.vmem %s7, %s3035
      $region60: #{bottleneck_forward.1} parent=55 // pred_fallthru
        _
    $region56: #{bottleneck_forward.1} parent=5 // pred_fallthru
      _
  $region6: #{bottleneck_forward.1} parent=0 // loop_footer
    %s17 = sadd.s32 1, %s13
  $region7: #{bottleneck_forward.1} parent=0 // loop_footer_branch
    %12 = sbr.rel target = $region3
  $region8: #{bottleneck_forward.1} parent=0 // loop_exit
    _

</llo_original>
